<compile_context>
chip_gen: v6e
topology: v6e:2x2x1
jax: 0.10.0
libtpu: 0.0.40
codegen_flags: <defaults>
</compile_context>

<pallas_src>
import math

import jax
import jax.numpy as jnp
from jax.experimental import pallas as pl
from jax.experimental.pallas import tpu as pltpu

# ----------------------------- config -----------------------------
B = 2
C1, H1, W1 = 6, 16, 16          # x1: key/value + proj input (in_chans1)
C2, H2, W2 = 4, 8, 8            # x2: query input (in_chans2)
D_MODEL = 32
NHEAD = 4
HEAD_DIM = D_MODEL // NHEAD
SCALE = HEAD_DIM ** (-0.5)
WIN_K = (8, 8)                  # win_size_k -> 2x2 kv windows
WIN_Q = (4, 4)                  # win_size_q -> 2x2 q windows
MLP_RATIO = 2
MLP_HIDDEN = D_MODEL * MLP_RATIO
LN_EPS = 1e-5

# derived sizes (window-divisible config: no padding / cropping needed)
assert H1 % WIN_K[0] == 0 and W1 % WIN_K[1] == 0
assert H2 % WIN_Q[0] == 0 and W2 % WIN_Q[1] == 0
NWIN_H, NWIN_W = H2 // WIN_Q[0], W2 // WIN_Q[1]
assert (NWIN_H, NWIN_W) == (H1 // WIN_K[0], W1 // WIN_K[1])
NWIN = NWIN_H * NWIN_W          # windows per image (same for q and kv side)
N_Q = WIN_Q[0] * WIN_Q[1]       # q tokens per window
N_K = WIN_K[0] * WIN_K[1]       # kv tokens per window
TQ = NWIN * N_Q                 # q tokens per image (window order)
TK = NWIN * N_K                 # kv tokens per image (window order)
NWG = NWIN                      # pooled tokens per image (global branch)


# ----------------------------- in-kernel helpers -----------------------------
def _gelu(x):
    # exact GELU (matches nn.GELU default)
    return 0.5 * x * (1.0 + jax.lax.erf(x * (1.0 / math.sqrt(2.0))))


def _layernorm(x, g, b):
    mu = jnp.mean(x, axis=-1, keepdims=True)
    var = jnp.mean((x - mu) ** 2, axis=-1, keepdims=True)
    return (x - mu) * jax.lax.rsqrt(var + LN_EPS) * g + b


def _mxu(a, w):
    # a: f32 activation, w: pre-cast bf16 weight -> bf16 x bf16 MXU matmul, f32 accumulate.
    return jnp.dot(a.astype(jnp.bfloat16), w, preferred_element_type=jnp.float32)


# ----------------------------- fused kernel -----------------------------
def _make_kernel(n_img):
    """Kernel processing `n_img` images per grid step (batch folded into rows)."""
    tq_b = n_img * TQ
    nw_b = n_img * NWIN
    ng_b = n_img * NWG

    def kernel(x1t_ref, x2w_ref, x1w_ref, qg_ref, kg_ref,
               r_sc_ref, r_g_ref, hmask_ref, gmask_ref, hsel_ref,
               pw_ref, pb_ref, pg_ref, pbeta_ref,
               qw_ref, qb_ref, kvw_ref, kvb_ref,
               q2w_ref, q2b_ref, kv2w_ref, kv2b_ref,
               n1g_ref, n1b_ref, f1w_ref, f1b_ref, f2w_ref, f2b_ref,
               n2g_ref, n2b_ref, o_ref):
        f32, bf16 = jnp.float32, jnp.bfloat16

        # ---- shortcut: proj(x1) = Linear + LN + GELU on all kv tokens, then bilinear
        #      resize to query positions via the window-ordered block-diagonal matrix.
        sc = _mxu(x1t_ref[0], pw_ref[...]) + pb_ref[...]                 # (n_img*H1W1, D)
        sc = _gelu(_layernorm(sc, pg_ref[...], pbeta_ref[...]))
        sc_win = jnp.dot(r_sc_ref[...], sc.astype(bf16),
                         preferred_element_type=f32)                     # (tq_b, D)

        # ---- local window cross-attention (NO softmax, as in the reference).
        #      Projections row-batched over all tokens; SCALE folded into qw; K|V fused.
        q = _mxu(x2w_ref[0], qw_ref[...]) + qb_ref[...]                  # (tq_b, D)
        kv = _mxu(x1w_ref[0], kvw_ref[...]) + kvb_ref[...]               # (n_img*TK, 2D)
        k3 = kv[:, :D_MODEL].reshape(nw_b, N_K, D_MODEL).astype(bf16)    # (W, N_K, D)
        v3 = kv[:, D_MODEL:].reshape(nw_b, N_K, D_MODEL).astype(bf16)
        q3 = q.reshape(nw_b, N_Q, D_MODEL).astype(bf16)                  # (W, N_Q, D)
        # kvh[w, d1, d2] = sum_n k[w, n, d1] * v[w, n, d2]  (token-axis contraction via
        # dimension numbers -> no materialized transpose, batched over all windows).
        kvh = jax.lax.dot_general(k3, v3, (((1,), (1,)), ((0,), (0,))),
                                  preferred_element_type=f32)            # (W, D, D)
        # block-diagonal head mask: q @ (masked k^T v) == concat_h(q_h @ k_h^T @ v_h)
        # exactly (no softmax in this branch), so heads never need to be split out.
        kvh = (kvh * hmask_ref[...]).astype(bf16)
        qloc = jax.lax.dot_general(q3, kvh, (((2,), (1,)), ((0,), (0,))),
                                   preferred_element_type=f32)           # (W, N_Q, D)
        qloc = qloc.reshape(tq_b, D_MODEL)

        # ---- global pooled cross-attention (softmax), all heads batched at once.
        qgf = _mxu(qg_ref[0], q2w_ref[...]) + q2b_ref[...]               # (ng_b, D)
        kvg = _mxu(kg_ref[0], kv2w_ref[...]) + kv2b_ref[...]             # (ng_b, 2D)
        kgp = kvg[:, :D_MODEL]
        vgp = kvg[:, D_MODEL:]
        hsel = hsel_ref[...]                                             # (NHEAD, 1, D)
        qh = (qgf * hsel).astype(bf16)                                   # (H, ng_b, D): head-masked q
        kh = jnp.broadcast_to(kgp, (NHEAD, ng_b, D_MODEL)).astype(bf16)
        vh = jnp.broadcast_to(vgp, (NHEAD, ng_b, D_MODEL)).astype(bf16)
        s = jax.lax.dot_general(qh, kh, (((2,), (2,)), ((0,), (0,))),
                                preferred_element_type=f32)              # (H, ng_b, ng_b)
        s = s + gmask_ref[...]                                           # -1e9 across images
        s = s - jnp.max(s, axis=-1, keepdims=True)
        e = jnp.exp(s)
        p = e * pl.reciprocal(jnp.sum(e, axis=-1, keepdims=True), approx=True)
        gh = jax.lax.dot_general(p.astype(bf16), vh, (((2,), (1,)), ((0,), (0,))),
                                 preferred_element_type=f32)             # (H, ng_b, D)
        gh = jnp.sum(gh * hsel, axis=0)                                  # (ng_b, D) head "concat"
        qg_win = jnp.dot(r_g_ref[...], gh.astype(bf16),
                         preferred_element_type=f32)                     # (tq_b, D) upsample

        # ---- tail: norm1 -> MLP -> + shortcut -> norm2
        xn = _layernorm(qloc + qg_win, n1g_ref[...], n1b_ref[...])
        hid = _gelu(_mxu(xn, f1w_ref[...]) + f1b_ref[...])               # (tq_b, MLP_HIDDEN)
        mlp = _mxu(hid, f2w_ref[...]) + f2b_ref[...]                     # (tq_b, D)
        o_ref[0] = _layernorm(sc_win + mlp, n2g_ref[...], n2b_ref[...])

    return kernel


def _batched_spec(a):
    return pl.BlockSpec((1,) + a.shape[1:], lambda s: (s, 0, 0))


def _shared_spec(a):
    if a.ndim == 3:
        return pl.BlockSpec(a.shape, lambda s: (0, 0, 0))
    return pl.BlockSpec(a.shape, lambda s: (0, 0))


def _fused_forward(p, x1_tok, x2w, x1w, qg_tok, kg_tok,
                   r_sc_big, r_g_big, hmask, gmask, hsel, n_img):
    nsteps = x1_tok.shape[0]
    bf16 = jnp.bfloat16

    def vec(a):                       # (N,) -> (1, N) for 2-D VMEM layout
        return a.reshape(1, -1)

    batched = [x1_tok, x2w, x1w, qg_tok, kg_tok]
    # All MXU weights / resize matrices pre-cast to bf16 here (halved DMA, no per-step
    # cast filler).  Biases / LayerNorm params stay f32.
    shared = [
        r_sc_big.astype(bf16), r_g_big.astype(bf16), hmask, gmask, hsel,
        p['proj_w'].astype(bf16), vec(p['proj_b']), vec(p['proj_g']), vec(p['proj_beta']),
        p['q_w'].astype(bf16), vec(p['q_b']),
        p['kv_w'].astype(bf16), vec(p['kv_b']),
        p['q2_w'].astype(bf16), vec(p['q2_b']),
        p['kv2_w'].astype(bf16), vec(p['kv2_b']),
        vec(p['n1_g']), vec(p['n1_b']),
        p['fc1_w'].astype(bf16), vec(p['fc1_b']),
        p['fc2_w'].astype(bf16), vec(p['fc2_b']),
        vec(p['n2_g']), vec(p['n2_b']),
    ]
    in_specs = [_batched_spec(a) for a in batched] + [_shared_spec(a) for a in shared]

    return pl.pallas_call(
        _make_kernel(n_img),
        out_shape=jax.ShapeDtypeStruct((nsteps, n_img * TQ, D_MODEL), jnp.float32),
        grid=(nsteps,),
        in_specs=in_specs,
        out_specs=pl.BlockSpec((1, n_img * TQ, D_MODEL), lambda s: (s, 0, 0)),
        compiler_params=pltpu.CompilerParams(dimension_semantics=("parallel",)),
    )(*batched, *shared)


# ----------------------------- JAX glue -----------------------------
def _imgs_per_step(batch):
    # v7x has 2 TensorCores per chip: keep one image per grid step so the "parallel"
    # grid axis splits the batch across cores.  Single-TC chips (v5e/v6e): fold the
    # whole batch into the row dimension -> one grid step, no per-step overhead.
    try:
        kind = jax.devices()[0].device_kind.lower()
    except Exception:
        kind = ""
    if batch > 1 and "v7" in kind:
        return 1
    return batch


def window_partition(x, ws):
    """(B, H, W, C) -> (B, num_windows * ws0*ws1, C) in (wh, ww, i, j) order."""
    Bn, H, W, C = x.shape
    x = x.reshape(Bn, H // ws[0], ws[0], W // ws[1], ws[1], C)
    return x.transpose(0, 1, 3, 2, 4, 5).reshape(Bn, -1, C)


def avg_pool_nchw(x, k):
    Bn, C, H, W = x.shape
    Ho, Wo = H // k[0], W // k[1]
    x = x[:, :, :Ho * k[0], :Wo * k[1]]
    x = x.reshape(Bn, C, Ho, k[0], Wo, k[1])
    return x.mean(axis=(3, 5))


def _interp_matrix(s_in, s_out):
    # bilinear, align_corners=True  -> (s_out, s_in)
    if s_out == 1:
        src = jnp.zeros((1,), jnp.float32)
    else:
        src = jnp.arange(s_out, dtype=jnp.float32) * (s_in - 1) / (s_out - 1)
    lo = jnp.clip(jnp.floor(src).astype(jnp.int32), 0, s_in - 1)
    hi = jnp.clip(lo + 1, 0, s_in - 1)
    frac = src - lo.astype(jnp.float32)
    m = jnp.zeros((s_out, s_in), jnp.float32)
    idx = jnp.arange(s_out)
    m = m.at[idx, lo].add(1.0 - frac)
    m = m.at[idx, hi].add(frac)
    return m


def _window_order_perm():
    """Window-token order t=(wh, ww, i, j) -> flat spatial index in the (H2, W2) grid."""
    wh = jnp.arange(NWIN_H).reshape(NWIN_H, 1, 1, 1)
    ww = jnp.arange(NWIN_W).reshape(1, NWIN_W, 1, 1)
    i = jnp.arange(WIN_Q[0]).reshape(1, 1, WIN_Q[0], 1)
    j = jnp.arange(WIN_Q[1]).reshape(1, 1, 1, WIN_Q[1])
    return ((wh * WIN_Q[0] + i) * W2 + (ww * WIN_Q[1] + j)).reshape(-1)


# ----------------------------- parameters -----------------------------
def init_params(key):
    def xav(k, fi, fo):
        # xavier_normal_ (stored transposed: (in, out) so kernels do x @ W)
        return jax.random.normal(k, (fi, fo), jnp.float32) * math.sqrt(2.0 / (fi + fo))

    ks = jax.random.split(key, 9)
    p = {}
    p['proj_w'] = xav(ks[0], C1, D_MODEL)
    p['proj_b'] = jnp.zeros((D_MODEL,), jnp.float32)
    p['proj_g'] = jnp.ones((D_MODEL,), jnp.float32)
    p['proj_beta'] = jnp.zeros((D_MODEL,), jnp.float32)
    # local attention: SCALE folded into q weight (bias is zero so its fold is a no-op);
    # K and V projections fused along the output dim -> one matmul in-kernel.
    p['q_w'] = xav(ks[1], C2, D_MODEL) * SCALE
    p['q_b'] = jnp.zeros((D_MODEL,), jnp.float32)
    p['kv_w'] = jnp.concatenate([xav(ks[2], C1, D_MODEL), xav(ks[3], C1, D_MODEL)], axis=1)
    p['kv_b'] = jnp.zeros((2 * D_MODEL,), jnp.float32)
    # global attention (same folding / fusion)
    p['q2_w'] = xav(ks[4], C2, D_MODEL) * SCALE
    p['q2_b'] = jnp.zeros((D_MODEL,), jnp.float32)
    p['kv2_w'] = jnp.concatenate([xav(ks[5], C1, D_MODEL), xav(ks[6], C1, D_MODEL)], axis=1)
    p['kv2_b'] = jnp.zeros((2 * D_MODEL,), jnp.float32)
    # tail
    p['n1_g'] = jnp.ones((D_MODEL,), jnp.float32)
    p['n1_b'] = jnp.zeros((D_MODEL,), jnp.float32)
    p['fc1_w'] = xav(ks[7], D_MODEL, MLP_HIDDEN)
    p['fc1_b'] = jnp.zeros((MLP_HIDDEN,), jnp.float32)
    p['fc2_w'] = xav(ks[8], MLP_HIDDEN, D_MODEL)
    p['fc2_b'] = jnp.zeros((D_MODEL,), jnp.float32)
    p['n2_g'] = jnp.ones((D_MODEL,), jnp.float32)
    p['n2_b'] = jnp.zeros((D_MODEL,), jnp.float32)
    return p


# ----------------------------- full forward -----------------------------
def transfusion_forward(params, x1, x2):
    """x1: (B, C1, H1, W1), x2: (B, C2, H2, W2) -> (B, D_MODEL, H2, W2)."""
    Bn = x1.shape[0]
    n_img = _imgs_per_step(Bn)          # images folded into one grid step
    nsteps = Bn // n_img

    x1n = jnp.transpose(x1, (0, 2, 3, 1))                      # (B, H1, W1, C1)
    x2n = jnp.transpose(x2, (0, 2, 3, 1))                      # (B, H2, W2, C2)

    # fold `n_img` images into the row dimension (image-major order)
    x1_tok = x1n.reshape(nsteps, n_img * H1 * W1, C1)          # spatial order (for proj)
    x2w = window_partition(x2n, WIN_Q).reshape(nsteps, n_img * TQ, C2)
    x1w = window_partition(x1n, WIN_K).reshape(nsteps, n_img * TK, C1)

    qg_tok = jnp.transpose(avg_pool_nchw(x2, WIN_Q), (0, 2, 3, 1)).reshape(nsteps, n_img * NWG, C2)
    kg_tok = jnp.transpose(avg_pool_nchw(x1, WIN_K), (0, 2, 3, 1)).reshape(nsteps, n_img * NWG, C1)

    # bilinear (align_corners=True) resize matrices, rows permuted into window-token
    # order; block-diagonal over the folded images so the kernel stays 2-D throughout.
    perm = _window_order_perm()
    r_sc = jnp.kron(_interp_matrix(H1, H2), _interp_matrix(W1, W2))[perm]          # (TQ, H1*W1)
    r_g = jnp.kron(_interp_matrix(NWIN_H, H2), _interp_matrix(NWIN_W, W2))[perm]   # (TQ, NWG)
    eye = jnp.eye(n_img, dtype=jnp.float32)
    r_sc_big = jnp.kron(eye, r_sc)                             # (n_img*TQ, n_img*H1*W1)
    r_g_big = jnp.kron(eye, r_g)                               # (n_img*TQ, n_img*NWG)

    # host-precomputed masks (no in-kernel iota): block-diagonal head mask for the local
    # branch, per-head column selector and cross-image -inf mask for the global branch.
    hh = jnp.arange(D_MODEL) // HEAD_DIM
    hmask = (hh[:, None] == hh[None, :]).astype(jnp.float32)                       # (D, D)
    hsel = (jnp.arange(NHEAD)[:, None] == hh[None, :]).astype(jnp.float32)
    hsel = hsel.reshape(NHEAD, 1, D_MODEL)                                          # (H, 1, D)
    gi = jnp.arange(n_img * NWG) // NWG
    gmask = jnp.where(gi[:, None] == gi[None, :], 0.0, -1e9).astype(jnp.float32)    # (ng, ng)

    out_win = _fused_forward(params, x1_tok, x2w, x1w, qg_tok, kg_tok,
                             r_sc_big, r_g_big, hmask, gmask, hsel, n_img)

    # window unpartition (pure reshape/transpose) + NCHW
    out = out_win.reshape(Bn, NWIN_H, NWIN_W, WIN_Q[0], WIN_Q[1], D_MODEL)
    out = out.transpose(0, 1, 3, 2, 4, 5).reshape(Bn, H2, W2, D_MODEL)
    return jnp.transpose(out, (0, 3, 1, 2))


# ----------------------------- main -----------------------------
if __name__ == "__main__":
    key = jax.random.PRNGKey(0)
    kx1, kx2, kp = jax.random.split(key, 3)
    x1 = jax.random.normal(kx1, (B, C1, H1, W1), jnp.float32)
    x2 = jax.random.normal(kx2, (B, C2, H2, W2), jnp.float32)
    params = init_params(kp)

    fwd = jax.jit(transfusion_forward)
    out = jax.block_until_ready(fwd(params, x1, x2))
    assert out.shape == (B, D_MODEL, H2, W2), out.shape
    assert bool(jnp.all(jnp.isfinite(out)))
    print("KERNEL_OK")
</pallas_src>

<mosaic_0001>
module attributes {stable_mosaic.version = 11 : i64} {
  func.func private @main(%arg0: i32) attributes {dimension_semantics = [#tpu.dimension_semantics<core_parallel>], iteration_bounds = array<i64: 2>, tpu.core_type = #tpu.core_type<sc_scalar_subcore>, window_params = []} {
    return
  }
}

module attributes {stable_mosaic.version = 11 : i64} {
  func.func private @main(%arg0: i32) attributes {dimension_semantics = [#tpu.dimension_semantics<core_parallel>], iteration_bounds = array<i64: 2>, tpu.core_type = #tpu.core_type<sc_scalar_subcore>, window_params = []} {
    return
  }
}

module attributes {stable_mosaic.version = 11 : i64} {
  func.func @kernel(%arg0: i32, %arg1: memref<1x512x6xf32, #tpu.memory_space<vmem>>, %arg2: memref<1x128x4xf32, #tpu.memory_space<vmem>>, %arg3: memref<1x512x6xf32, #tpu.memory_space<vmem>>, %arg4: memref<1x8x4xf32, #tpu.memory_space<vmem>>, %arg5: memref<1x8x6xf32, #tpu.memory_space<vmem>>, %arg6: memref<128x512xbf16, #tpu.memory_space<vmem>>, %arg7: memref<128x8xbf16, #tpu.memory_space<vmem>>, %arg8: memref<32x32xf32, #tpu.memory_space<vmem>>, %arg9: memref<8x8xf32, #tpu.memory_space<vmem>>, %arg10: memref<4x1x32xf32, #tpu.memory_space<vmem>>, %arg11: memref<6x32xbf16, #tpu.memory_space<vmem>>, %arg12: memref<1x32xf32, #tpu.memory_space<vmem>>, %arg13: memref<1x32xf32, #tpu.memory_space<vmem>>, %arg14: memref<1x32xf32, #tpu.memory_space<vmem>>, %arg15: memref<4x32xbf16, #tpu.memory_space<vmem>>, %arg16: memref<1x32xf32, #tpu.memory_space<vmem>>, %arg17: memref<6x64xbf16, #tpu.memory_space<vmem>>, %arg18: memref<1x64xf32, #tpu.memory_space<vmem>>, %arg19: memref<4x32xbf16, #tpu.memory_space<vmem>>, %arg20: memref<1x32xf32, #tpu.memory_space<vmem>>, %arg21: memref<6x64xbf16, #tpu.memory_space<vmem>>, %arg22: memref<1x64xf32, #tpu.memory_space<vmem>>, %arg23: memref<1x32xf32, #tpu.memory_space<vmem>>, %arg24: memref<1x32xf32, #tpu.memory_space<vmem>>, %arg25: memref<32x64xbf16, #tpu.memory_space<vmem>>, %arg26: memref<1x64xf32, #tpu.memory_space<vmem>>, %arg27: memref<64x32xbf16, #tpu.memory_space<vmem>>, %arg28: memref<1x32xf32, #tpu.memory_space<vmem>>, %arg29: memref<1x32xf32, #tpu.memory_space<vmem>>, %arg30: memref<1x32xf32, #tpu.memory_space<vmem>>, %arg31: memref<1x128x32xf32, #tpu.memory_space<vmem>>) attributes {dimension_semantics = [#tpu.dimension_semantics<parallel>], iteration_bounds = array<i64: 1>, scalar_prefetch = 0 : i64, scratch_operands = 0 : i64, tpu.core_type = #tpu.core_type<tc>, window_params = [{transform_indices = @transform_0, window_bounds = array<i64: 1, 512, 6>}, {transform_indices = @transform_1, window_bounds = array<i64: 1, 128, 4>}, {transform_indices = @transform_2, window_bounds = array<i64: 1, 512, 6>}, {transform_indices = @transform_3, window_bounds = array<i64: 1, 8, 4>}, {transform_indices = @transform_4, window_bounds = array<i64: 1, 8, 6>}, {pipeline_mode = #tpu.pipeline_mode<synchronous>, transform_indices = @transform_5, window_bounds = array<i64: 128, 512>}, {pipeline_mode = #tpu.pipeline_mode<synchronous>, transform_indices = @transform_6, window_bounds = array<i64: 128, 8>}, {pipeline_mode = #tpu.pipeline_mode<synchronous>, transform_indices = @transform_7, window_bounds = array<i64: 32, 32>}, {pipeline_mode = #tpu.pipeline_mode<synchronous>, transform_indices = @transform_8, window_bounds = array<i64: 8, 8>}, {pipeline_mode = #tpu.pipeline_mode<synchronous>, transform_indices = @transform_9, window_bounds = array<i64: 4, 1, 32>}, {pipeline_mode = #tpu.pipeline_mode<synchronous>, transform_indices = @transform_10, window_bounds = array<i64: 6, 32>}, {pipeline_mode = #tpu.pipeline_mode<synchronous>, transform_indices = @transform_11, window_bounds = array<i64: 1, 32>}, {pipeline_mode = #tpu.pipeline_mode<synchronous>, transform_indices = @transform_12, window_bounds = array<i64: 1, 32>}, {pipeline_mode = #tpu.pipeline_mode<synchronous>, transform_indices = @transform_13, window_bounds = array<i64: 1, 32>}, {pipeline_mode = #tpu.pipeline_mode<synchronous>, transform_indices = @transform_14, window_bounds = array<i64: 4, 32>}, {pipeline_mode = #tpu.pipeline_mode<synchronous>, transform_indices = @transform_15, window_bounds = array<i64: 1, 32>}, {pipeline_mode = #tpu.pipeline_mode<synchronous>, transform_indices = @transform_16, window_bounds = array<i64: 6, 64>}, {pipeline_mode = #tpu.pipeline_mode<synchronous>, transform_indices = @transform_17, window_bounds = array<i64: 1, 64>}, {pipeline_mode = #tpu.pipeline_mode<synchronous>, transform_indices = @transform_18, window_bounds = array<i64: 4, 32>}, {pipeline_mode = #tpu.pipeline_mode<synchronous>, transform_indices = @transform_19, window_bounds = array<i64: 1, 32>}, {pipeline_mode = #tpu.pipeline_mode<synchronous>, transform_indices = @transform_20, window_bounds = array<i64: 6, 64>}, {pipeline_mode = #tpu.pipeline_mode<synchronous>, transform_indices = @transform_21, window_bounds = array<i64: 1, 64>}, {pipeline_mode = #tpu.pipeline_mode<synchronous>, transform_indices = @transform_22, window_bounds = array<i64: 1, 32>}, {pipeline_mode = #tpu.pipeline_mode<synchronous>, transform_indices = @transform_23, window_bounds = array<i64: 1, 32>}, {pipeline_mode = #tpu.pipeline_mode<synchronous>, transform_indices = @transform_24, window_bounds = array<i64: 32, 64>}, {pipeline_mode = #tpu.pipeline_mode<synchronous>, transform_indices = @transform_25, window_bounds = array<i64: 1, 64>}, {pipeline_mode = #tpu.pipeline_mode<synchronous>, transform_indices = @transform_26, window_bounds = array<i64: 64, 32>}, {pipeline_mode = #tpu.pipeline_mode<synchronous>, transform_indices = @transform_27, window_bounds = array<i64: 1, 32>}, {pipeline_mode = #tpu.pipeline_mode<synchronous>, transform_indices = @transform_28, window_bounds = array<i64: 1, 32>}, {pipeline_mode = #tpu.pipeline_mode<synchronous>, transform_indices = @transform_29, window_bounds = array<i64: 1, 32>}, {transform_indices = @transform_30, window_bounds = array<i64: 1, 128, 32>}]} {
    %c0 = arith.constant 0 : index
    %c0_0 = arith.constant 0 : index
    %c0_1 = arith.constant 0 : index
    %0 = vector.load %arg1[%c0, %c0_0, %c0_1] : memref<1x512x6xf32, #tpu.memory_space<vmem>>, vector<1x512x6xf32>
    %1 = vector.shape_cast %0 : vector<1x512x6xf32> to vector<512x6xf32>
    %c0_2 = arith.constant 0 : index
    %c0_3 = arith.constant 0 : index
    %2 = vector.load %arg11[%c0_2, %c0_3] : memref<6x32xbf16, #tpu.memory_space<vmem>>, vector<6x32xbf16>
    %3 = arith.truncf %1 : vector<512x6xf32> to vector<512x6xbf16>
    %cst = arith.constant dense<0.000000e+00> : vector<512x32xf32>
    %4 = tpu.matmul %3, %2, %cst {dimension_numbers = #tpu.dot_dimension_numbers<[1], [0], [0], [1], [0, 0, 1, 1], [], []>} : vector<512x6xbf16>, vector<6x32xbf16>, vector<512x32xf32> -> vector<512x32xf32>
    %c0_4 = arith.constant 0 : index
    %c0_5 = arith.constant 0 : index
    %5 = vector.load %arg12[%c0_4, %c0_5] : memref<1x32xf32, #tpu.memory_space<vmem>>, vector<1x32xf32>
    %6 = vector.broadcast %5 : vector<1x32xf32> to vector<512x32xf32>
    %7 = arith.addf %4, %6 : vector<512x32xf32>
    %c0_6 = arith.constant 0 : index
    %c0_7 = arith.constant 0 : index
    %8 = vector.load %arg13[%c0_6, %c0_7] : memref<1x32xf32, #tpu.memory_space<vmem>>, vector<1x32xf32>
    %c0_8 = arith.constant 0 : index
    %c0_9 = arith.constant 0 : index
    %9 = vector.load %arg14[%c0_8, %c0_9] : memref<1x32xf32, #tpu.memory_space<vmem>>, vector<1x32xf32>
    %cst_10 = arith.constant dense<0.000000e+00> : vector<512xf32>
    %10 = vector.multi_reduction <add>, %7, %cst_10 [1] : vector<512x32xf32> to vector<512xf32>
    %11 = vector.shape_cast %10 : vector<512xf32> to vector<512x1xf32>
    %cst_11 = arith.constant 3.200000e+01 : f32
    %12 = vector.broadcast %cst_11 : f32 to vector<512x1xf32>
    %13 = arith.divf %11, %12 : vector<512x1xf32>
    %14 = vector.broadcast %13 : vector<512x1xf32> to vector<512x32xf32>
    %15 = arith.subf %7, %14 : vector<512x32xf32>
    %16 = arith.mulf %15, %15 : vector<512x32xf32>
    %cst_12 = arith.constant dense<0.000000e+00> : vector<512xf32>
    %17 = vector.multi_reduction <add>, %16, %cst_12 [1] : vector<512x32xf32> to vector<512xf32>
    %18 = vector.shape_cast %17 : vector<512xf32> to vector<512x1xf32>
    %cst_13 = arith.constant 3.200000e+01 : f32
    %19 = vector.broadcast %cst_13 : f32 to vector<512x1xf32>
    %20 = arith.divf %18, %19 : vector<512x1xf32>
    %21 = vector.broadcast %13 : vector<512x1xf32> to vector<512x32xf32>
    %22 = arith.subf %7, %21 : vector<512x32xf32>
    %cst_14 = arith.constant 9.99999974E-6 : f32
    %23 = vector.broadcast %cst_14 : f32 to vector<512x1xf32>
    %24 = arith.addf %20, %23 : vector<512x1xf32>
    %25 = math.rsqrt %24 : vector<512x1xf32>
    %26 = vector.broadcast %25 : vector<512x1xf32> to vector<512x32xf32>
    %27 = arith.mulf %22, %26 : vector<512x32xf32>
    %28 = vector.broadcast %8 : vector<1x32xf32> to vector<512x32xf32>
    %29 = arith.mulf %27, %28 : vector<512x32xf32>
    %30 = vector.broadcast %9 : vector<1x32xf32> to vector<512x32xf32>
    %31 = arith.addf %29, %30 : vector<512x32xf32>
    %cst_15 = arith.constant 5.000000e-01 : f32
    %32 = vector.broadcast %cst_15 : f32 to vector<512x32xf32>
    %33 = arith.mulf %32, %31 : vector<512x32xf32>
    %cst_16 = arith.constant 0.707106769 : f32
    %34 = vector.broadcast %cst_16 : f32 to vector<512x32xf32>
    %35 = arith.mulf %31, %34 : vector<512x32xf32>
    %36 = math.erf %35 : vector<512x32xf32>
    %cst_17 = arith.constant 1.000000e+00 : f32
    %37 = vector.broadcast %cst_17 : f32 to vector<512x32xf32>
    %38 = arith.addf %37, %36 : vector<512x32xf32>
    %39 = arith.mulf %33, %38 : vector<512x32xf32>
    %c0_18 = arith.constant 0 : index
    %c0_19 = arith.constant 0 : index
    %40 = vector.load %arg6[%c0_18, %c0_19] : memref<128x512xbf16, #tpu.memory_space<vmem>>, vector<128x512xbf16>
    %41 = arith.truncf %39 : vector<512x32xf32> to vector<512x32xbf16>
    %cst_20 = arith.constant dense<0.000000e+00> : vector<128x32xf32>
    %42 = tpu.matmul %40, %41, %cst_20 {dimension_numbers = #tpu.dot_dimension_numbers<[1], [0], [0], [1], [0, 0, 1, 1], [], []>} : vector<128x512xbf16>, vector<512x32xbf16>, vector<128x32xf32> -> vector<128x32xf32>
    %c0_21 = arith.constant 0 : index
    %c0_22 = arith.constant 0 : index
    %c0_23 = arith.constant 0 : index
    %43 = vector.load %arg2[%c0_21, %c0_22, %c0_23] : memref<1x128x4xf32, #tpu.memory_space<vmem>>, vector<1x128x4xf32>
    %44 = vector.shape_cast %43 : vector<1x128x4xf32> to vector<128x4xf32>
    %c0_24 = arith.constant 0 : index
    %c0_25 = arith.constant 0 : index
    %45 = vector.load %arg15[%c0_24, %c0_25] : memref<4x32xbf16, #tpu.memory_space<vmem>>, vector<4x32xbf16>
    %46 = arith.truncf %44 : vector<128x4xf32> to vector<128x4xbf16>
    %cst_26 = arith.constant dense<0.000000e+00> : vector<128x32xf32>
    %47 = tpu.matmul %46, %45, %cst_26 {dimension_numbers = #tpu.dot_dimension_numbers<[1], [0], [0], [1], [0, 0, 1, 1], [], []>} : vector<128x4xbf16>, vector<4x32xbf16>, vector<128x32xf32> -> vector<128x32xf32>
    %c0_27 = arith.constant 0 : index
    %c0_28 = arith.constant 0 : index
    %48 = vector.load %arg16[%c0_27, %c0_28] : memref<1x32xf32, #tpu.memory_space<vmem>>, vector<1x32xf32>
    %49 = vector.broadcast %48 : vector<1x32xf32> to vector<128x32xf32>
    %50 = arith.addf %47, %49 : vector<128x32xf32>
    %c0_29 = arith.constant 0 : index
    %c0_30 = arith.constant 0 : index
    %c0_31 = arith.constant 0 : index
    %51 = vector.load %arg3[%c0_29, %c0_30, %c0_31] : memref<1x512x6xf32, #tpu.memory_space<vmem>>, vector<1x512x6xf32>
    %52 = vector.shape_cast %51 : vector<1x512x6xf32> to vector<512x6xf32>
    %c0_32 = arith.constant 0 : index
    %c0_33 = arith.constant 0 : index
    %53 = vector.load %arg17[%c0_32, %c0_33] : memref<6x64xbf16, #tpu.memory_space<vmem>>, vector<6x64xbf16>
    %54 = arith.truncf %52 : vector<512x6xf32> to vector<512x6xbf16>
    %cst_34 = arith.constant dense<0.000000e+00> : vector<512x64xf32>
    %55 = tpu.matmul %54, %53, %cst_34 {dimension_numbers = #tpu.dot_dimension_numbers<[1], [0], [0], [1], [0, 0, 1, 1], [], []>} : vector<512x6xbf16>, vector<6x64xbf16>, vector<512x64xf32> -> vector<512x64xf32>
    %c0_35 = arith.constant 0 : index
    %c0_36 = arith.constant 0 : index
    %56 = vector.load %arg18[%c0_35, %c0_36] : memref<1x64xf32, #tpu.memory_space<vmem>>, vector<1x64xf32>
    %57 = vector.broadcast %56 : vector<1x64xf32> to vector<512x64xf32>
    %58 = arith.addf %55, %57 : vector<512x64xf32>
    %59 = vector.extract_strided_slice %58 {offsets = [0, 0], sizes = [512, 32], strides = [1, 1]} : vector<512x64xf32> to vector<512x32xf32>
    %60 = vector.shape_cast %59 : vector<512x32xf32> to vector<8x64x32xf32>
    %61 = arith.truncf %60 : vector<8x64x32xf32> to vector<8x64x32xbf16>
    %62 = vector.extract_strided_slice %58 {offsets = [0, 32], sizes = [512, 32], strides = [1, 1]} : vector<512x64xf32> to vector<512x32xf32>
    %63 = vector.shape_cast %62 : vector<512x32xf32> to vector<8x64x32xf32>
    %64 = arith.truncf %63 : vector<8x64x32xf32> to vector<8x64x32xbf16>
    %65 = vector.shape_cast %50 : vector<128x32xf32> to vector<8x16x32xf32>
    %66 = arith.truncf %65 : vector<8x16x32xf32> to vector<8x16x32xbf16>
    %cst_37 = arith.constant dense<0.000000e+00> : vector<8x32x32xf32>
    %67 = tpu.matmul %61, %64, %cst_37 {dimension_numbers = #tpu.dot_dimension_numbers<[1], [1], [2], [2], [0, 0, 0, 2, 1, 2], [0], [0]>} : vector<8x64x32xbf16>, vector<8x64x32xbf16>, vector<8x32x32xf32> -> vector<8x32x32xf32>
    %c0_38 = arith.constant 0 : index
    %c0_39 = arith.constant 0 : index
    %68 = vector.load %arg8[%c0_38, %c0_39] : memref<32x32xf32, #tpu.memory_space<vmem>>, vector<32x32xf32>
    %69 = vector.shape_cast %68 : vector<32x32xf32> to vector<1x32x32xf32>
    %70 = vector.broadcast %69 : vector<1x32x32xf32> to vector<8x32x32xf32>
    %71 = arith.mulf %67, %70 : vector<8x32x32xf32>
    %72 = arith.truncf %71 : vector<8x32x32xf32> to vector<8x32x32xbf16>
    %cst_40 = arith.constant dense<0.000000e+00> : vector<8x16x32xf32>
    %73 = tpu.matmul %66, %72, %cst_40 {dimension_numbers = #tpu.dot_dimension_numbers<[2], [1], [1], [2], [0, 0, 0, 1, 1, 2], [0], [0]>} : vector<8x16x32xbf16>, vector<8x32x32xbf16>, vector<8x16x32xf32> -> vector<8x16x32xf32>
    %74 = vector.shape_cast %73 : vector<8x16x32xf32> to vector<128x32xf32>
    %c0_41 = arith.constant 0 : index
    %c0_42 = arith.constant 0 : index
    %c0_43 = arith.constant 0 : index
    %75 = vector.load %arg4[%c0_41, %c0_42, %c0_43] : memref<1x8x4xf32, #tpu.memory_space<vmem>>, vector<1x8x4xf32>
    %76 = vector.shape_cast %75 : vector<1x8x4xf32> to vector<8x4xf32>
    %c0_44 = arith.constant 0 : index
    %c0_45 = arith.constant 0 : index
    %77 = vector.load %arg19[%c0_44, %c0_45] : memref<4x32xbf16, #tpu.memory_space<vmem>>, vector<4x32xbf16>
    %78 = arith.truncf %76 : vector<8x4xf32> to vector<8x4xbf16>
    %cst_46 = arith.constant dense<0.000000e+00> : vector<8x32xf32>
    %79 = tpu.matmul %78, %77, %cst_46 {dimension_numbers = #tpu.dot_dimension_numbers<[1], [0], [0], [1], [0, 0, 1, 1], [], []>} : vector<8x4xbf16>, vector<4x32xbf16>, vector<8x32xf32> -> vector<8x32xf32>
    %c0_47 = arith.constant 0 : index
    %c0_48 = arith.constant 0 : index
    %80 = vector.load %arg20[%c0_47, %c0_48] : memref<1x32xf32, #tpu.memory_space<vmem>>, vector<1x32xf32>
    %81 = vector.broadcast %80 : vector<1x32xf32> to vector<8x32xf32>
    %82 = arith.addf %79, %81 : vector<8x32xf32>
    %c0_49 = arith.constant 0 : index
    %c0_50 = arith.constant 0 : index
    %c0_51 = arith.constant 0 : index
    %83 = vector.load %arg5[%c0_49, %c0_50, %c0_51] : memref<1x8x6xf32, #tpu.memory_space<vmem>>, vector<1x8x6xf32>
    %84 = vector.shape_cast %83 : vector<1x8x6xf32> to vector<8x6xf32>
    %c0_52 = arith.constant 0 : index
    %c0_53 = arith.constant 0 : index
    %85 = vector.load %arg21[%c0_52, %c0_53] : memref<6x64xbf16, #tpu.memory_space<vmem>>, vector<6x64xbf16>
    %86 = arith.truncf %84 : vector<8x6xf32> to vector<8x6xbf16>
    %cst_54 = arith.constant dense<0.000000e+00> : vector<8x64xf32>
    %87 = tpu.matmul %86, %85, %cst_54 {dimension_numbers = #tpu.dot_dimension_numbers<[1], [0], [0], [1], [0, 0, 1, 1], [], []>} : vector<8x6xbf16>, vector<6x64xbf16>, vector<8x64xf32> -> vector<8x64xf32>
    %c0_55 = arith.constant 0 : index
    %c0_56 = arith.constant 0 : index
    %88 = vector.load %arg22[%c0_55, %c0_56] : memref<1x64xf32, #tpu.memory_space<vmem>>, vector<1x64xf32>
    %89 = vector.broadcast %88 : vector<1x64xf32> to vector<8x64xf32>
    %90 = arith.addf %87, %89 : vector<8x64xf32>
    %91 = vector.extract_strided_slice %90 {offsets = [0, 0], sizes = [8, 32], strides = [1, 1]} : vector<8x64xf32> to vector<8x32xf32>
    %92 = vector.extract_strided_slice %90 {offsets = [0, 32], sizes = [8, 32], strides = [1, 1]} : vector<8x64xf32> to vector<8x32xf32>
    %c0_57 = arith.constant 0 : index
    %c0_58 = arith.constant 0 : index
    %c0_59 = arith.constant 0 : index
    %93 = vector.load %arg10[%c0_57, %c0_58, %c0_59] : memref<4x1x32xf32, #tpu.memory_space<vmem>>, vector<4x1x32xf32>
    %94 = vector.shape_cast %82 : vector<8x32xf32> to vector<1x8x32xf32>
    %95 = vector.broadcast %94 : vector<1x8x32xf32> to vector<4x8x32xf32>
    %96 = vector.broadcast %93 : vector<4x1x32xf32> to vector<4x8x32xf32>
    %97 = arith.mulf %95, %96 : vector<4x8x32xf32>
    %98 = arith.truncf %97 : vector<4x8x32xf32> to vector<4x8x32xbf16>
    %99 = vector.shape_cast %91 : vector<8x32xf32> to vector<1x8x32xf32>
    %100 = vector.broadcast %99 : vector<1x8x32xf32> to vector<4x8x32xf32>
    %101 = arith.truncf %100 : vector<4x8x32xf32> to vector<4x8x32xbf16>
    %102 = vector.shape_cast %92 : vector<8x32xf32> to vector<1x8x32xf32>
    %103 = vector.broadcast %102 : vector<1x8x32xf32> to vector<4x8x32xf32>
    %104 = arith.truncf %103 : vector<4x8x32xf32> to vector<4x8x32xbf16>
    %cst_60 = arith.constant dense<0.000000e+00> : vector<4x8x8xf32>
    %105 = tpu.matmul %98, %101, %cst_60 {dimension_numbers = #tpu.dot_dimension_numbers<[2], [2], [1], [1], [0, 0, 0, 1, 1, 1], [0], [0]>} : vector<4x8x32xbf16>, vector<4x8x32xbf16>, vector<4x8x8xf32> -> vector<4x8x8xf32>
    %c0_61 = arith.constant 0 : index
    %c0_62 = arith.constant 0 : index
    %106 = vector.load %arg9[%c0_61, %c0_62] : memref<8x8xf32, #tpu.memory_space<vmem>>, vector<8x8xf32>
    %107 = vector.shape_cast %106 : vector<8x8xf32> to vector<1x8x8xf32>
    %108 = vector.broadcast %107 : vector<1x8x8xf32> to vector<4x8x8xf32>
    %109 = arith.addf %105, %108 : vector<4x8x8xf32>
    %cst_63 = arith.constant dense<0xFF800000> : vector<4x8xf32>
    %110 = vector.multi_reduction <maximumf>, %109, %cst_63 [2] : vector<4x8x8xf32> to vector<4x8xf32>
    %111 = vector.shape_cast %110 : vector<4x8xf32> to vector<4x8x1xf32>
    %112 = vector.broadcast %111 : vector<4x8x1xf32> to vector<4x8x8xf32>
    %113 = arith.subf %109, %112 : vector<4x8x8xf32>
    %114 = math.exp %113 : vector<4x8x8xf32>
    %cst_64 = arith.constant dense<0.000000e+00> : vector<4x8xf32>
    %115 = vector.multi_reduction <add>, %114, %cst_64 [2] : vector<4x8x8xf32> to vector<4x8xf32>
    %116 = vector.shape_cast %115 : vector<4x8xf32> to vector<4x8x1xf32>
    %117 = tpu.reciprocal %116 {approx = true} : vector<4x8x1xf32> -> vector<4x8x1xf32>
    %118 = vector.broadcast %117 : vector<4x8x1xf32> to vector<4x8x8xf32>
    %119 = arith.mulf %114, %118 : vector<4x8x8xf32>
    %120 = arith.truncf %119 : vector<4x8x8xf32> to vector<4x8x8xbf16>
    %cst_65 = arith.constant dense<0.000000e+00> : vector<4x8x32xf32>
    %121 = tpu.matmul %120, %104, %cst_65 {dimension_numbers = #tpu.dot_dimension_numbers<[2], [1], [1], [2], [0, 0, 0, 1, 1, 2], [0], [0]>} : vector<4x8x8xbf16>, vector<4x8x32xbf16>, vector<4x8x32xf32> -> vector<4x8x32xf32>
    %122 = vector.broadcast %93 : vector<4x1x32xf32> to vector<4x8x32xf32>
    %123 = arith.mulf %121, %122 : vector<4x8x32xf32>
    %cst_66 = arith.constant dense<0.000000e+00> : vector<8x32xf32>
    %124 = vector.multi_reduction <add>, %123, %cst_66 [0] : vector<4x8x32xf32> to vector<8x32xf32>
    %c0_67 = arith.constant 0 : index
    %c0_68 = arith.constant 0 : index
    %125 = vector.load %arg7[%c0_67, %c0_68] : memref<128x8xbf16, #tpu.memory_space<vmem>>, vector<128x8xbf16>
    %126 = arith.truncf %124 : vector<8x32xf32> to vector<8x32xbf16>
    %cst_69 = arith.constant dense<0.000000e+00> : vector<128x32xf32>
    %127 = tpu.matmul %125, %126, %cst_69 {dimension_numbers = #tpu.dot_dimension_numbers<[1], [0], [0], [1], [0, 0, 1, 1], [], []>} : vector<128x8xbf16>, vector<8x32xbf16>, vector<128x32xf32> -> vector<128x32xf32>
    %128 = arith.addf %74, %127 : vector<128x32xf32>
    %c0_70 = arith.constant 0 : index
    %c0_71 = arith.constant 0 : index
    %129 = vector.load %arg23[%c0_70, %c0_71] : memref<1x32xf32, #tpu.memory_space<vmem>>, vector<1x32xf32>
    %c0_72 = arith.constant 0 : index
    %c0_73 = arith.constant 0 : index
    %130 = vector.load %arg24[%c0_72, %c0_73] : memref<1x32xf32, #tpu.memory_space<vmem>>, vector<1x32xf32>
    %cst_74 = arith.constant dense<0.000000e+00> : vector<128xf32>
    %131 = vector.multi_reduction <add>, %128, %cst_74 [1] : vector<128x32xf32> to vector<128xf32>
    %132 = vector.shape_cast %131 : vector<128xf32> to vector<128x1xf32>
    %cst_75 = arith.constant 3.200000e+01 : f32
    %133 = vector.broadcast %cst_75 : f32 to vector<128x1xf32>
    %134 = arith.divf %132, %133 : vector<128x1xf32>
    %135 = vector.broadcast %134 : vector<128x1xf32> to vector<128x32xf32>
    %136 = arith.subf %128, %135 : vector<128x32xf32>
    %137 = arith.mulf %136, %136 : vector<128x32xf32>
    %cst_76 = arith.constant dense<0.000000e+00> : vector<128xf32>
    %138 = vector.multi_reduction <add>, %137, %cst_76 [1] : vector<128x32xf32> to vector<128xf32>
    %139 = vector.shape_cast %138 : vector<128xf32> to vector<128x1xf32>
    %cst_77 = arith.constant 3.200000e+01 : f32
    %140 = vector.broadcast %cst_77 : f32 to vector<128x1xf32>
    %141 = arith.divf %139, %140 : vector<128x1xf32>
    %142 = vector.broadcast %134 : vector<128x1xf32> to vector<128x32xf32>
    %143 = arith.subf %128, %142 : vector<128x32xf32>
    %cst_78 = arith.constant 9.99999974E-6 : f32
    %144 = vector.broadcast %cst_78 : f32 to vector<128x1xf32>
    %145 = arith.addf %141, %144 : vector<128x1xf32>
    %146 = math.rsqrt %145 : vector<128x1xf32>
    %147 = vector.broadcast %146 : vector<128x1xf32> to vector<128x32xf32>
    %148 = arith.mulf %143, %147 : vector<128x32xf32>
    %149 = vector.broadcast %129 : vector<1x32xf32> to vector<128x32xf32>
    %150 = arith.mulf %148, %149 : vector<128x32xf32>
    %151 = vector.broadcast %130 : vector<1x32xf32> to vector<128x32xf32>
    %152 = arith.addf %150, %151 : vector<128x32xf32>
    %c0_79 = arith.constant 0 : index
    %c0_80 = arith.constant 0 : index
    %153 = vector.load %arg25[%c0_79, %c0_80] : memref<32x64xbf16, #tpu.memory_space<vmem>>, vector<32x64xbf16>
    %154 = arith.truncf %152 : vector<128x32xf32> to vector<128x32xbf16>
    %cst_81 = arith.constant dense<0.000000e+00> : vector<128x64xf32>
    %155 = tpu.matmul %154, %153, %cst_81 {dimension_numbers = #tpu.dot_dimension_numbers<[1], [0], [0], [1], [0, 0, 1, 1], [], []>} : vector<128x32xbf16>, vector<32x64xbf16>, vector<128x64xf32> -> vector<128x64xf32>
    %c0_82 = arith.constant 0 : index
    %c0_83 = arith.constant 0 : index
    %156 = vector.load %arg26[%c0_82, %c0_83] : memref<1x64xf32, #tpu.memory_space<vmem>>, vector<1x64xf32>
    %157 = vector.broadcast %156 : vector<1x64xf32> to vector<128x64xf32>
    %158 = arith.addf %155, %157 : vector<128x64xf32>
    %cst_84 = arith.constant 5.000000e-01 : f32
    %159 = vector.broadcast %cst_84 : f32 to vector<128x64xf32>
    %160 = arith.mulf %159, %158 : vector<128x64xf32>
    %cst_85 = arith.constant 0.707106769 : f32
    %161 = vector.broadcast %cst_85 : f32 to vector<128x64xf32>
    %162 = arith.mulf %158, %161 : vector<128x64xf32>
    %163 = math.erf %162 : vector<128x64xf32>
    %cst_86 = arith.constant 1.000000e+00 : f32
    %164 = vector.broadcast %cst_86 : f32 to vector<128x64xf32>
    %165 = arith.addf %164, %163 : vector<128x64xf32>
    %166 = arith.mulf %160, %165 : vector<128x64xf32>
    %c0_87 = arith.constant 0 : index
    %c0_88 = arith.constant 0 : index
    %167 = vector.load %arg27[%c0_87, %c0_88] : memref<64x32xbf16, #tpu.memory_space<vmem>>, vector<64x32xbf16>
    %168 = arith.truncf %166 : vector<128x64xf32> to vector<128x64xbf16>
    %cst_89 = arith.constant dense<0.000000e+00> : vector<128x32xf32>
    %169 = tpu.matmul %168, %167, %cst_89 {dimension_numbers = #tpu.dot_dimension_numbers<[1], [0], [0], [1], [0, 0, 1, 1], [], []>} : vector<128x64xbf16>, vector<64x32xbf16>, vector<128x32xf32> -> vector<128x32xf32>
    %c0_90 = arith.constant 0 : index
    %c0_91 = arith.constant 0 : index
    %170 = vector.load %arg28[%c0_90, %c0_91] : memref<1x32xf32, #tpu.memory_space<vmem>>, vector<1x32xf32>
    %171 = vector.broadcast %170 : vector<1x32xf32> to vector<128x32xf32>
    %172 = arith.addf %169, %171 : vector<128x32xf32>
    %173 = arith.addf %42, %172 : vector<128x32xf32>
    %c0_92 = arith.constant 0 : index
    %c0_93 = arith.constant 0 : index
    %174 = vector.load %arg29[%c0_92, %c0_93] : memref<1x32xf32, #tpu.memory_space<vmem>>, vector<1x32xf32>
    %c0_94 = arith.constant 0 : index
    %c0_95 = arith.constant 0 : index
    %175 = vector.load %arg30[%c0_94, %c0_95] : memref<1x32xf32, #tpu.memory_space<vmem>>, vector<1x32xf32>
    %cst_96 = arith.constant dense<0.000000e+00> : vector<128xf32>
    %176 = vector.multi_reduction <add>, %173, %cst_96 [1] : vector<128x32xf32> to vector<128xf32>
    %177 = vector.shape_cast %176 : vector<128xf32> to vector<128x1xf32>
    %cst_97 = arith.constant 3.200000e+01 : f32
    %178 = vector.broadcast %cst_97 : f32 to vector<128x1xf32>
    %179 = arith.divf %177, %178 : vector<128x1xf32>
    %180 = vector.broadcast %179 : vector<128x1xf32> to vector<128x32xf32>
    %181 = arith.subf %173, %180 : vector<128x32xf32>
    %182 = arith.mulf %181, %181 : vector<128x32xf32>
    %cst_98 = arith.constant dense<0.000000e+00> : vector<128xf32>
    %183 = vector.multi_reduction <add>, %182, %cst_98 [1] : vector<128x32xf32> to vector<128xf32>
    %184 = vector.shape_cast %183 : vector<128xf32> to vector<128x1xf32>
    %cst_99 = arith.constant 3.200000e+01 : f32
    %185 = vector.broadcast %cst_99 : f32 to vector<128x1xf32>
    %186 = arith.divf %184, %185 : vector<128x1xf32>
    %187 = vector.broadcast %179 : vector<128x1xf32> to vector<128x32xf32>
    %188 = arith.subf %173, %187 : vector<128x32xf32>
    %cst_100 = arith.constant 9.99999974E-6 : f32
    %189 = vector.broadcast %cst_100 : f32 to vector<128x1xf32>
    %190 = arith.addf %186, %189 : vector<128x1xf32>
    %191 = math.rsqrt %190 : vector<128x1xf32>
    %192 = vector.broadcast %191 : vector<128x1xf32> to vector<128x32xf32>
    %193 = arith.mulf %188, %192 : vector<128x32xf32>
    %194 = vector.broadcast %174 : vector<1x32xf32> to vector<128x32xf32>
    %195 = arith.mulf %193, %194 : vector<128x32xf32>
    %196 = vector.broadcast %175 : vector<1x32xf32> to vector<128x32xf32>
    %197 = arith.addf %195, %196 : vector<128x32xf32>
    %c0_101 = arith.constant 0 : index
    %c0_102 = arith.constant 0 : index
    %c0_103 = arith.constant 0 : index
    %198 = vector.load %arg31[%c0_101, %c0_102, %c0_103] : memref<1x128x32xf32, #tpu.memory_space<vmem>>, vector<1x128x32xf32>
    %199 = vector.shape_cast %198 : vector<1x128x32xf32> to vector<128x32xf32>
    %200 = vector.shape_cast %197 : vector<128x32xf32> to vector<1x128x32xf32>
    tpu.vector_store %arg31[%c0_101, %c0_102, %c0_103], %200 {strides = array<i32>} : memref<1x128x32xf32, #tpu.memory_space<vmem>>, vector<1x128x32xf32>,
    return
  }
  func.func @transform_0(%arg0: i32) -> (i32, i32, i32) {
    %c0_i32 = arith.constant 0 : i32
    %c0_i32_0 = arith.constant 0 : i32
    %c0_i32_1 = arith.constant 0 : i32
    return %arg0, %c0_i32, %c0_i32_0 : i32, i32, i32
  }
  func.func @transform_1(%arg0: i32) -> (i32, i32, i32) {
    %c0_i32 = arith.constant 0 : i32
    %c0_i32_0 = arith.constant 0 : i32
    %c0_i32_1 = arith.constant 0 : i32
    return %arg0, %c0_i32, %c0_i32_0 : i32, i32, i32
  }
  func.func @transform_2(%arg0: i32) -> (i32, i32, i32) {
    %c0_i32 = arith.constant 0 : i32
    %c0_i32_0 = arith.constant 0 : i32
    %c0_i32_1 = arith.constant 0 : i32
    return %arg0, %c0_i32, %c0_i32_0 : i32, i32, i32
  }
  func.func @transform_3(%arg0: i32) -> (i32, i32, i32) {
    %c0_i32 = arith.constant 0 : i32
    %c0_i32_0 = arith.constant 0 : i32
    %c0_i32_1 = arith.constant 0 : i32
    return %arg0, %c0_i32, %c0_i32_0 : i32, i32, i32
  }
  func.func @transform_4(%arg0: i32) -> (i32, i32, i32) {
    %c0_i32 = arith.constant 0 : i32
    %c0_i32_0 = arith.constant 0 : i32
    %c0_i32_1 = arith.constant 0 : i32
    return %arg0, %c0_i32, %c0_i32_0 : i32, i32, i32
  }
  func.func @transform_5(%arg0: i32) -> (i32, i32) {
    %c0_i32 = arith.constant 0 : i32
    %c0_i32_0 = arith.constant 0 : i32
    %c0_i32_1 = arith.constant 0 : i32
    return %c0_i32, %c0_i32_0 : i32, i32
  }
  func.func @transform_6(%arg0: i32) -> (i32, i32) {
    %c0_i32 = arith.constant 0 : i32
    %c0_i32_0 = arith.constant 0 : i32
    %c0_i32_1 = arith.constant 0 : i32
    return %c0_i32, %c0_i32_0 : i32, i32
  }
  func.func @transform_7(%arg0: i32) -> (i32, i32) {
    %c0_i32 = arith.constant 0 : i32
    %c0_i32_0 = arith.constant 0 : i32
    %c0_i32_1 = arith.constant 0 : i32
    return %c0_i32, %c0_i32_0 : i32, i32
  }
  func.func @transform_8(%arg0: i32) -> (i32, i32) {
    %c0_i32 = arith.constant 0 : i32
    %c0_i32_0 = arith.constant 0 : i32
    %c0_i32_1 = arith.constant 0 : i32
    return %c0_i32, %c0_i32_0 : i32, i32
  }
  func.func @transform_9(%arg0: i32) -> (i32, i32, i32) {
    %c0_i32 = arith.constant 0 : i32
    %c0_i32_0 = arith.constant 0 : i32
    %c0_i32_1 = arith.constant 0 : i32
    %c0_i32_2 = arith.constant 0 : i32
    return %c0_i32, %c0_i32_0, %c0_i32_1 : i32, i32, i32
  }
  func.func @transform_10(%arg0: i32) -> (i32, i32) {
    %c0_i32 = arith.constant 0 : i32
    %c0_i32_0 = arith.constant 0 : i32
    %c0_i32_1 = arith.constant 0 : i32
    return %c0_i32, %c0_i32_0 : i32, i32
  }
  func.func @transform_11(%arg0: i32) -> (i32, i32) {
    %c0_i32 = arith.constant 0 : i32
    %c0_i32_0 = arith.constant 0 : i32
    %c0_i32_1 = arith.constant 0 : i32
    return %c0_i32, %c0_i32_0 : i32, i32
  }
  func.func @transform_12(%arg0: i32) -> (i32, i32) {
    %c0_i32 = arith.constant 0 : i32
    %c0_i32_0 = arith.constant 0 : i32
    %c0_i32_1 = arith.constant 0 : i32
    return %c0_i32, %c0_i32_0 : i32, i32
  }
  func.func @transform_13(%arg0: i32) -> (i32, i32) {
    %c0_i32 = arith.constant 0 : i32
    %c0_i32_0 = arith.constant 0 : i32
    %c0_i32_1 = arith.constant 0 : i32
    return %c0_i32, %c0_i32_0 : i32, i32
  }
  func.func @transform_14(%arg0: i32) -> (i32, i32) {
    %c0_i32 = arith.constant 0 : i32
    %c0_i32_0 = arith.constant 0 : i32
    %c0_i32_1 = arith.constant 0 : i32
    return %c0_i32, %c0_i32_0 : i32, i32
  }
  func.func @transform_15(%arg0: i32) -> (i32, i32) {
    %c0_i32 = arith.constant 0 : i32
    %c0_i32_0 = arith.constant 0 : i32
    %c0_i32_1 = arith.constant 0 : i32
    return %c0_i32, %c0_i32_0 : i32, i32
  }
  func.func @transform_16(%arg0: i32) -> (i32, i32) {
    %c0_i32 = arith.constant 0 : i32
    %c0_i32_0 = arith.constant 0 : i32
    %c0_i32_1 = arith.constant 0 : i32
    return %c0_i32, %c0_i32_0 : i32, i32
  }
  func.func @transform_17(%arg0: i32) -> (i32, i32) {
    %c0_i32 = arith.constant 0 : i32
    %c0_i32_0 = arith.constant 0 : i32
    %c0_i32_1 = arith.constant 0 : i32
    return %c0_i32, %c0_i32_0 : i32, i32
  }
  func.func @transform_18(%arg0: i32) -> (i32, i32) {
    %c0_i32 = arith.constant 0 : i32
    %c0_i32_0 = arith.constant 0 : i32
    %c0_i32_1 = arith.constant 0 : i32
    return %c0_i32, %c0_i32_0 : i32, i32
  }
  func.func @transform_19(%arg0: i32) -> (i32, i32) {
    %c0_i32 = arith.constant 0 : i32
    %c0_i32_0 = arith.constant 0 : i32
    %c0_i32_1 = arith.constant 0 : i32
    return %c0_i32, %c0_i32_0 : i32, i32
  }
  func.func @transform_20(%arg0: i32) -> (i32, i32) {
    %c0_i32 = arith.constant 0 : i32
    %c0_i32_0 = arith.constant 0 : i32
    %c0_i32_1 = arith.constant 0 : i32
    return %c0_i32, %c0_i32_0 : i32, i32
  }
  func.func @transform_21(%arg0: i32) -> (i32, i32) {
    %c0_i32 = arith.constant 0 : i32
    %c0_i32_0 = arith.constant 0 : i32
    %c0_i32_1 = arith.constant 0 : i32
    return %c0_i32, %c0_i32_0 : i32, i32
  }
  func.func @transform_22(%arg0: i32) -> (i32, i32) {
    %c0_i32 = arith.constant 0 : i32
    %c0_i32_0 = arith.constant 0 : i32
    %c0_i32_1 = arith.constant 0 : i32
    return %c0_i32, %c0_i32_0 : i32, i32
  }
  func.func @transform_23(%arg0: i32) -> (i32, i32) {
    %c0_i32 = arith.constant 0 : i32
    %c0_i32_0 = arith.constant 0 : i32
    %c0_i32_1 = arith.constant 0 : i32
    return %c0_i32, %c0_i32_0 : i32, i32
  }
  func.func @transform_24(%arg0: i32) -> (i32, i32) {
    %c0_i32 = arith.constant 0 : i32
    %c0_i32_0 = arith.constant 0 : i32
    %c0_i32_1 = arith.constant 0 : i32
    return %c0_i32, %c0_i32_0 : i32, i32
  }
  func.func @transform_25(%arg0: i32) -> (i32, i32) {
    %c0_i32 = arith.constant 0 : i32
    %c0_i32_0 = arith.constant 0 : i32
    %c0_i32_1 = arith.constant 0 : i32
    return %c0_i32, %c0_i32_0 : i32, i32
  }
  func.func @transform_26(%arg0: i32) -> (i32, i32) {
    %c0_i32 = arith.constant 0 : i32
    %c0_i32_0 = arith.constant 0 : i32
    %c0_i32_1 = arith.constant 0 : i32
    return %c0_i32, %c0_i32_0 : i32, i32
  }
  func.func @transform_27(%arg0: i32) -> (i32, i32) {
    %c0_i32 = arith.constant 0 : i32
    %c0_i32_0 = arith.constant 0 : i32
    %c0_i32_1 = arith.constant 0 : i32
    return %c0_i32, %c0_i32_0 : i32, i32
  }
  func.func @transform_28(%arg0: i32) -> (i32, i32) {
    %c0_i32 = arith.constant 0 : i32
    %c0_i32_0 = arith.constant 0 : i32
    %c0_i32_1 = arith.constant 0 : i32
    return %c0_i32, %c0_i32_0 : i32, i32
  }
  func.func @transform_29(%arg0: i32) -> (i32, i32) {
    %c0_i32 = arith.constant 0 : i32
    %c0_i32_0 = arith.constant 0 : i32
    %c0_i32_1 = arith.constant 0 : i32
    return %c0_i32, %c0_i32_0 : i32, i32
  }
  func.func @transform_30(%arg0: i32) -> (i32, i32, i32) {
    %c0_i32 = arith.constant 0 : i32
    %c0_i32_0 = arith.constant 0 : i32
    %c0_i32_1 = arith.constant 0 : i32
    return %arg0, %c0_i32, %c0_i32_0 : i32, i32, i32
  }
}

</mosaic_0001>

<llo_original>
// kernel: transfusion_forward.1
$region0: #{transfusion_forward.1}
  #allocation0 [shape = 'u32[]', space=smem, size = 0x4, offset = 0x4, fixed_abs, tag = 'smem constant byte address 0x4 - core index']
  #allocation1 [shape = 'u32[144,128]{1,0:T(1,128)}', space=vmem, size = 0x12000, scoped, tag = 'internal scratch']
  %s0 = inlined_call_operand.smem [shape: u32[31], index: -1, kind: input, shape index: {}]
  %s1 = sld [smem:[%s0]]
  %s2 = scalar_lea.smem %s0, 1
  %s3 = sld [smem:[%s2]]
  %s4 = scalar_lea.smem %s0, 2
  %s5 = sld [smem:[%s4]]
  %s6 = scalar_lea.smem %s0, 3
  %s7 = sld [smem:[%s6]]
  %s8 = scalar_lea.smem %s0, 4
  %s9 = sld [smem:[%s8]]
  %s10 = scalar_lea.smem %s0, 5
  %s11 = sld [smem:[%s10]]
  %s12 = scalar_lea.smem %s0, 6
  %s13 = sld [smem:[%s12]]
  %s14 = scalar_lea.smem %s0, 7
  %s15 = sld [smem:[%s14]]
  %s16 = scalar_lea.smem %s0, 8
  %s17 = sld [smem:[%s16]]
  %s18 = scalar_lea.smem %s0, 9
  %s19 = sld [smem:[%s18]]
  %s20 = scalar_lea.smem %s0, 10
  %s21 = sld [smem:[%s20]]
  %s22 = scalar_lea.smem %s0, 11
  %s23 = sld [smem:[%s22]]
  %s24 = scalar_lea.smem %s0, 12
  %s25 = sld [smem:[%s24]]
  %s26 = scalar_lea.smem %s0, 13
  %s27 = sld [smem:[%s26]]
  %s28 = scalar_lea.smem %s0, 14
  %s29 = sld [smem:[%s28]]
  %s30 = scalar_lea.smem %s0, 15
  %s31 = sld [smem:[%s30]]
  %s32 = scalar_lea.smem %s0, 16
  %s33 = sld [smem:[%s32]]
  %s34 = scalar_lea.smem %s0, 17
  %s35 = sld [smem:[%s34]]
  %s36 = scalar_lea.smem %s0, 18
  %s37 = sld [smem:[%s36]]
  %s38 = scalar_lea.smem %s0, 19
  %s39 = sld [smem:[%s38]]
  %s40 = scalar_lea.smem %s0, 20
  %s41 = sld [smem:[%s40]]
  %s42 = scalar_lea.smem %s0, 21
  %s43 = sld [smem:[%s42]]
  %s44 = scalar_lea.smem %s0, 22
  %s45 = sld [smem:[%s44]]
  %s46 = scalar_lea.smem %s0, 23
  %s47 = sld [smem:[%s46]]
  %s48 = scalar_lea.smem %s0, 24
  %s49 = sld [smem:[%s48]]
  %s50 = scalar_lea.smem %s0, 25
  %s51 = sld [smem:[%s50]]
  %s52 = scalar_lea.smem %s0, 26
  %s53 = sld [smem:[%s52]]
  %s54 = scalar_lea.smem %s0, 27
  %s55 = sld [smem:[%s54]]
  %s56 = scalar_lea.smem %s0, 28
  %s57 = sld [smem:[%s56]]
  %s58 = scalar_lea.smem %s0, 29
  %s59 = sld [smem:[%s58]]
  %s60 = scalar_lea.smem %s0, 30
  %s61 = sld [smem:[%s60]]
  %s62 = sld [smem:[#allocation0]]
  $region130: #{transfusion_forward.1} parent=0
    _
  %s64 = ssub.s32 1, %s62
  %s65 = scalar_select 0, %s64, %s62
  // Predicated region
  $region2: #{transfusion_forward.1} parent=0 // pred_check
    _
  $region3: #{transfusion_forward.1} parent=0 // pred_check_branch
    %67 = sbr.rel (0) target = $region5
  $region4: #{transfusion_forward.1} parent=0 // pred_region
    _
  $region5: #{transfusion_forward.1} parent=0 // pred_fallthru
    _
  // Predicated region
  $region6: #{transfusion_forward.1} parent=0 // pred_check
    _
  $region7: #{transfusion_forward.1} parent=0 // pred_check_branch
    %69 = sbr.rel (0) target = $region9
  $region8: #{transfusion_forward.1} parent=0 // pred_region
    _
  $region9: #{transfusion_forward.1} parent=0 // pred_fallthru
    _
  // Predicated region
  $region10: #{transfusion_forward.1} parent=0 // pred_check
    _
  $region11: #{transfusion_forward.1} parent=0 // pred_check_branch
    %71 = sbr.rel (0) target = $region13
  $region12: #{transfusion_forward.1} parent=0 // pred_region
    _
  $region13: #{transfusion_forward.1} parent=0 // pred_fallthru
    _
  // Predicated region
  $region14: #{transfusion_forward.1} parent=0 // pred_check
    _
  $region15: #{transfusion_forward.1} parent=0 // pred_check_branch
    %73 = sbr.rel (0) target = $region17
  $region16: #{transfusion_forward.1} parent=0 // pred_region
    _
  $region17: #{transfusion_forward.1} parent=0 // pred_fallthru
    _
  // Predicated region
  $region18: #{transfusion_forward.1} parent=0 // pred_check
    _
  $region19: #{transfusion_forward.1} parent=0 // pred_check_branch
    %75 = sbr.rel (0) target = $region21
  $region20: #{transfusion_forward.1} parent=0 // pred_region
    _
  $region21: #{transfusion_forward.1} parent=0 // pred_fallthru
    _
  // Predicated region
  $region22: #{transfusion_forward.1} parent=0 // pred_check
    _
  $region23: #{transfusion_forward.1} parent=0 // pred_check_branch
    %77 = sbr.rel (0) target = $region25
  $region24: #{transfusion_forward.1} parent=0 // pred_region
    _
  $region25: #{transfusion_forward.1} parent=0 // pred_fallthru
    _
  // Predicated region
  $region26: #{transfusion_forward.1} parent=0 // pred_check
    _
  $region27: #{transfusion_forward.1} parent=0 // pred_check_branch
    %79 = sbr.rel (0) target = $region29
  $region28: #{transfusion_forward.1} parent=0 // pred_region
    _
  $region29: #{transfusion_forward.1} parent=0 // pred_fallthru
    _
  // Predicated region
  $region30: #{transfusion_forward.1} parent=0 // pred_check
    _
  $region31: #{transfusion_forward.1} parent=0 // pred_check_branch
    %81 = sbr.rel (0) target = $region33
  $region32: #{transfusion_forward.1} parent=0 // pred_region
    _
  $region33: #{transfusion_forward.1} parent=0 // pred_fallthru
    _
  // Predicated region
  $region34: #{transfusion_forward.1} parent=0 // pred_check
    _
  $region35: #{transfusion_forward.1} parent=0 // pred_check_branch
    %83 = sbr.rel (0) target = $region37
  $region36: #{transfusion_forward.1} parent=0 // pred_region
    _
  $region37: #{transfusion_forward.1} parent=0 // pred_fallthru
    _
  // Predicated region
  $region38: #{transfusion_forward.1} parent=0 // pred_check
    _
  $region39: #{transfusion_forward.1} parent=0 // pred_check_branch
    %85 = sbr.rel (0) target = $region41
  $region40: #{transfusion_forward.1} parent=0 // pred_region
    _
  $region41: #{transfusion_forward.1} parent=0 // pred_fallthru
    _
  // Predicated region
  $region42: #{transfusion_forward.1} parent=0 // pred_check
    _
  $region43: #{transfusion_forward.1} parent=0 // pred_check_branch
    %87 = sbr.rel (0) target = $region45
  $region44: #{transfusion_forward.1} parent=0 // pred_region
    _
  $region45: #{transfusion_forward.1} parent=0 // pred_fallthru
    _
  // Predicated region
  $region46: #{transfusion_forward.1} parent=0 // pred_check
    _
  $region47: #{transfusion_forward.1} parent=0 // pred_check_branch
    %89 = sbr.rel (0) target = $region49
  $region48: #{transfusion_forward.1} parent=0 // pred_region
    _
  $region49: #{transfusion_forward.1} parent=0 // pred_fallthru
    _
  // Predicated region
  $region50: #{transfusion_forward.1} parent=0 // pred_check
    _
  $region51: #{transfusion_forward.1} parent=0 // pred_check_branch
    %91 = sbr.rel (0) target = $region53
  $region52: #{transfusion_forward.1} parent=0 // pred_region
    _
  $region53: #{transfusion_forward.1} parent=0 // pred_fallthru
    _
  // Predicated region
  $region54: #{transfusion_forward.1} parent=0 // pred_check
    _
  $region55: #{transfusion_forward.1} parent=0 // pred_check_branch
    %93 = sbr.rel (0) target = $region57
  $region56: #{transfusion_forward.1} parent=0 // pred_region
    _
  $region57: #{transfusion_forward.1} parent=0 // pred_fallthru
    _
  // Predicated region
  $region58: #{transfusion_forward.1} parent=0 // pred_check
    _
  $region59: #{transfusion_forward.1} parent=0 // pred_check_branch
    %95 = sbr.rel (0) target = $region61
  $region60: #{transfusion_forward.1} parent=0 // pred_region
    _
  $region61: #{transfusion_forward.1} parent=0 // pred_fallthru
    _
  // Predicated region
  $region62: #{transfusion_forward.1} parent=0 // pred_check
    _
  $region63: #{transfusion_forward.1} parent=0 // pred_check_branch
    %97 = sbr.rel (0) target = $region65
  $region64: #{transfusion_forward.1} parent=0 // pred_region
    _
  $region65: #{transfusion_forward.1} parent=0 // pred_fallthru
    _
  // Predicated region
  $region66: #{transfusion_forward.1} parent=0 // pred_check
    _
  $region67: #{transfusion_forward.1} parent=0 // pred_check_branch
    %99 = sbr.rel (0) target = $region69
  $region68: #{transfusion_forward.1} parent=0 // pred_region
    _
  $region69: #{transfusion_forward.1} parent=0 // pred_fallthru
    _
  // Predicated region
  $region70: #{transfusion_forward.1} parent=0 // pred_check
    _
  $region71: #{transfusion_forward.1} parent=0 // pred_check_branch
    %101 = sbr.rel (0) target = $region73
  $region72: #{transfusion_forward.1} parent=0 // pred_region
    _
  $region73: #{transfusion_forward.1} parent=0 // pred_fallthru
    _
  // Predicated region
  $region74: #{transfusion_forward.1} parent=0 // pred_check
    _
  $region75: #{transfusion_forward.1} parent=0 // pred_check_branch
    %103 = sbr.rel (0) target = $region77
  $region76: #{transfusion_forward.1} parent=0 // pred_region
    _
  $region77: #{transfusion_forward.1} parent=0 // pred_fallthru
    _
  // Predicated region
  $region78: #{transfusion_forward.1} parent=0 // pred_check
    _
  $region79: #{transfusion_forward.1} parent=0 // pred_check_branch
    %105 = sbr.rel (0) target = $region81
  $region80: #{transfusion_forward.1} parent=0 // pred_region
    _
  $region81: #{transfusion_forward.1} parent=0 // pred_fallthru
    _
  // Predicated region
  $region82: #{transfusion_forward.1} parent=0 // pred_check
    _
  $region83: #{transfusion_forward.1} parent=0 // pred_check_branch
    %107 = sbr.rel (0) target = $region85
  $region84: #{transfusion_forward.1} parent=0 // pred_region
    _
  $region85: #{transfusion_forward.1} parent=0 // pred_fallthru
    _
  // Predicated region
  $region86: #{transfusion_forward.1} parent=0 // pred_check
    _
  $region87: #{transfusion_forward.1} parent=0 // pred_check_branch
    %109 = sbr.rel (0) target = $region89
  $region88: #{transfusion_forward.1} parent=0 // pred_region
    _
  $region89: #{transfusion_forward.1} parent=0 // pred_fallthru
    _
  // Predicated region
  $region90: #{transfusion_forward.1} parent=0 // pred_check
    _
  $region91: #{transfusion_forward.1} parent=0 // pred_check_branch
    %111 = sbr.rel (0) target = $region93
  $region92: #{transfusion_forward.1} parent=0 // pred_region
    _
  $region93: #{transfusion_forward.1} parent=0 // pred_fallthru
    _
  // Predicated region
  $region94: #{transfusion_forward.1} parent=0 // pred_check
    _
  $region95: #{transfusion_forward.1} parent=0 // pred_check_branch
    %113 = sbr.rel (0) target = $region97
  $region96: #{transfusion_forward.1} parent=0 // pred_region
    _
  $region97: #{transfusion_forward.1} parent=0 // pred_fallthru
    _
  // Predicated region
  $region98: #{transfusion_forward.1} parent=0 // pred_check
    _
  $region99: #{transfusion_forward.1} parent=0 // pred_check_branch
    %115 = sbr.rel (0) target = $region101
  $region100: #{transfusion_forward.1} parent=0 // pred_region
    _
  $region101: #{transfusion_forward.1} parent=0 // pred_fallthru
    _
  // Predicated region
  $region102: #{transfusion_forward.1} parent=0 // pred_check
    _
  $region103: #{transfusion_forward.1} parent=0 // pred_check_branch
    %117 = sbr.rel (0) target = $region105
  $region104: #{transfusion_forward.1} parent=0 // pred_region
    _
  $region105: #{transfusion_forward.1} parent=0 // pred_fallthru
    _
  // Predicated region
  $region106: #{transfusion_forward.1} parent=0 // pred_check
    _
  $region107: #{transfusion_forward.1} parent=0 // pred_check_branch
    %119 = sbr.rel (0) target = $region109
  $region108: #{transfusion_forward.1} parent=0 // pred_region
    _
  $region109: #{transfusion_forward.1} parent=0 // pred_fallthru
    _
  // Predicated region
  $region110: #{transfusion_forward.1} parent=0 // pred_check
    _
  $region111: #{transfusion_forward.1} parent=0 // pred_check_branch
    %121 = sbr.rel (0) target = $region113
  $region112: #{transfusion_forward.1} parent=0 // pred_region
    _
  $region113: #{transfusion_forward.1} parent=0 // pred_fallthru
    _
  // Predicated region
  $region114: #{transfusion_forward.1} parent=0 // pred_check
    _
  $region115: #{transfusion_forward.1} parent=0 // pred_check_branch
    %123 = sbr.rel (0) target = $region117
  $region116: #{transfusion_forward.1} parent=0 // pred_region
    _
  $region117: #{transfusion_forward.1} parent=0 // pred_fallthru
    _
  // Predicated region
  $region118: #{transfusion_forward.1} parent=0 // pred_check
    _
  $region119: #{transfusion_forward.1} parent=0 // pred_check_branch
    %125 = sbr.rel (0) target = $region121
  $region120: #{transfusion_forward.1} parent=0 // pred_region
    _
  $region121: #{transfusion_forward.1} parent=0 // pred_fallthru
    _
  %v127 = vld [vmem:[%s1] sm:$0xff]
  %v128 = vld [vmem:[%s1 + $0x8] sm:$0xff]
  %v129 = vld [vmem:[%s1 + $0x10] sm:$0xff]
  %v130 = vld [vmem:[%s1 + $0x18] sm:$0xff]
  %v131 = vld [vmem:[%s1 + $0x20] sm:$0xff]
  %v132 = vld [vmem:[%s1 + $0x28] sm:$0xff]
  %v133 = vld [vmem:[%s1 + $0x30] sm:$0xff]
  %v134 = vld [vmem:[%s1 + $0x38] sm:$0xff]
  %v135 = vld [vmem:[%s1 + $0x40] sm:$0xff]
  %v136 = vld [vmem:[%s1 + $0x48] sm:$0xff]
  %v137 = vld [vmem:[%s1 + $0x50] sm:$0xff]
  %v138 = vld [vmem:[%s1 + $0x58] sm:$0xff]
  %v139 = vld [vmem:[%s1 + $0x60] sm:$0xff]
  %v140 = vld [vmem:[%s1 + $0x68] sm:$0xff]
  %v141 = vld [vmem:[%s1 + $0x70] sm:$0xff]
  %v142 = vld [vmem:[%s1 + $0x78] sm:$0xff]
  %v143 = vld [vmem:[%s1 + $0x80] sm:$0xff]
  %v144 = vld [vmem:[%s1 + $0x88] sm:$0xff]
  %v145 = vld [vmem:[%s1 + $0x90] sm:$0xff]
  %v146 = vld [vmem:[%s1 + $0x98] sm:$0xff]
  %v147 = vld [vmem:[%s1 + $0xa0] sm:$0xff]
  %v148 = vld [vmem:[%s1 + $0xa8] sm:$0xff]
  %v149 = vld [vmem:[%s1 + $0xb0] sm:$0xff]
  %v150 = vld [vmem:[%s1 + $0xb8] sm:$0xff]
  %v151 = vld [vmem:[%s1 + $0xc0] sm:$0xff]
  %v152 = vld [vmem:[%s1 + $0xc8] sm:$0xff]
  %v153 = vld [vmem:[%s1 + $0xd0] sm:$0xff]
  %v154 = vld [vmem:[%s1 + $0xd8] sm:$0xff]
  %v155 = vld [vmem:[%s1 + $0xe0] sm:$0xff]
  %v156 = vld [vmem:[%s1 + $0xe8] sm:$0xff]
  %v157 = vld [vmem:[%s1 + $0xf0] sm:$0xff]
  %v158 = vld [vmem:[%s1 + $0xf8] sm:$0xff]
  %v159 = vld [vmem:[%s1 + $0x100] sm:$0xff]
  %v160 = vld [vmem:[%s1 + $0x108] sm:$0xff]
  %v161 = vld [vmem:[%s1 + $0x110] sm:$0xff]
  %v162 = vld [vmem:[%s1 + $0x118] sm:$0xff]
  %v163 = vld [vmem:[%s1 + $0x120] sm:$0xff]
  %v164 = vld [vmem:[%s1 + $0x128] sm:$0xff]
  %v165 = vld [vmem:[%s1 + $0x130] sm:$0xff]
  %v166 = vld [vmem:[%s1 + $0x138] sm:$0xff]
  %v167 = vld [vmem:[%s1 + $0x140] sm:$0xff]
  %v168 = vld [vmem:[%s1 + $0x148] sm:$0xff]
  %v169 = vld [vmem:[%s1 + $0x150] sm:$0xff]
  %v170 = vld [vmem:[%s1 + $0x158] sm:$0xff]
  %v171 = vld [vmem:[%s1 + $0x160] sm:$0xff]
  %v172 = vld [vmem:[%s1 + $0x168] sm:$0xff]
  %v173 = vld [vmem:[%s1 + $0x170] sm:$0xff]
  %v174 = vld [vmem:[%s1 + $0x178] sm:$0xff]
  %v175 = vld [vmem:[%s1 + $0x180] sm:$0xff]
  %v176 = vld [vmem:[%s1 + $0x188] sm:$0xff]
  %v177 = vld [vmem:[%s1 + $0x190] sm:$0xff]
  %v178 = vld [vmem:[%s1 + $0x198] sm:$0xff]
  %v179 = vld [vmem:[%s1 + $0x1a0] sm:$0xff]
  %v180 = vld [vmem:[%s1 + $0x1a8] sm:$0xff]
  %v181 = vld [vmem:[%s1 + $0x1b0] sm:$0xff]
  %v182 = vld [vmem:[%s1 + $0x1b8] sm:$0xff]
  %v183 = vld [vmem:[%s1 + $0x1c0] sm:$0xff]
  %v184 = vld [vmem:[%s1 + $0x1c8] sm:$0xff]
  %v185 = vld [vmem:[%s1 + $0x1d0] sm:$0xff]
  %v186 = vld [vmem:[%s1 + $0x1d8] sm:$0xff]
  %v187 = vld [vmem:[%s1 + $0x1e0] sm:$0xff]
  %v188 = vld [vmem:[%s1 + $0x1e8] sm:$0xff]
  %v189 = vld [vmem:[%s1 + $0x1f0] sm:$0xff]
  %v190 = vld [vmem:[%s1 + $0x1f8] sm:$0xff]
  %v191 = vld [vmem:[%s21] sm:$0x7]
  %v192 = vpack.c.bf16 %v128, %v127
  %v193 = vpack.c.bf16 %v130, %v129
  %v194 = vpack.c.bf16 %v132, %v131
  %v195 = vpack.c.bf16 %v134, %v133
  %v196 = vpack.c.bf16 %v136, %v135
  %v197 = vpack.c.bf16 %v138, %v137
  %v198 = vpack.c.bf16 %v140, %v139
  %v199 = vpack.c.bf16 %v142, %v141
  %v200 = vpack.c.bf16 %v144, %v143
  %v201 = vpack.c.bf16 %v146, %v145
  %v202 = vpack.c.bf16 %v148, %v147
  %v203 = vpack.c.bf16 %v150, %v149
  %v204 = vpack.c.bf16 %v152, %v151
  %v205 = vpack.c.bf16 %v154, %v153
  %v206 = vpack.c.bf16 %v156, %v155
  %v207 = vpack.c.bf16 %v158, %v157
  %v208 = vpack.c.bf16 %v160, %v159
  %v209 = vpack.c.bf16 %v162, %v161
  %v210 = vpack.c.bf16 %v164, %v163
  %v211 = vpack.c.bf16 %v166, %v165
  %v212 = vpack.c.bf16 %v168, %v167
  %v213 = vpack.c.bf16 %v170, %v169
  %v214 = vpack.c.bf16 %v172, %v171
  %v215 = vpack.c.bf16 %v174, %v173
  %v216 = vpack.c.bf16 %v176, %v175
  %v217 = vpack.c.bf16 %v178, %v177
  %v218 = vpack.c.bf16 %v180, %v179
  %v219 = vpack.c.bf16 %v182, %v181
  %v220 = vpack.c.bf16 %v184, %v183
  %v221 = vpack.c.bf16 %v186, %v185
  %v222 = vpack.c.bf16 %v188, %v187
  %v223 = vpack.c.bf16 %v190, %v189
  %v224 = vld [vmem:[%s23] sm:$0x1]
  %v226 = vlaneseq
  %v227 = vshrl.u32 %v226, 7
  %v228 = vsub.s32 0, %v227
  %v229 = vrot.slane %v224, %v228
  %vm231 = vcmask 48128
  %v233 = vsel %vm231, %v192, 0
  %v236 = vsel %vm231, %v193, 0
  %v239 = vsel %vm231, %v194, 0
  %v242 = vsel %vm231, %v195, 0
  %v245 = vsel %vm231, %v196, 0
  %v248 = vsel %vm231, %v197, 0
  %v251 = vsel %vm231, %v198, 0
  %v254 = vsel %vm231, %v199, 0
  %v257 = vsel %vm231, %v200, 0
  %v260 = vsel %vm231, %v201, 0
  %v263 = vsel %vm231, %v202, 0
  %v266 = vsel %vm231, %v203, 0
  %v269 = vsel %vm231, %v204, 0
  %v272 = vsel %vm231, %v205, 0
  %v275 = vsel %vm231, %v206, 0
  %v278 = vsel %vm231, %v207, 0
  %v281 = vsel %vm231, %v208, 0
  %v284 = vsel %vm231, %v209, 0
  %v287 = vsel %vm231, %v210, 0
  %v290 = vsel %vm231, %v211, 0
  %v293 = vsel %vm231, %v212, 0
  %v296 = vsel %vm231, %v213, 0
  %v299 = vsel %vm231, %v214, 0
  %v302 = vsel %vm231, %v215, 0
  %v305 = vsel %vm231, %v216, 0
  %v308 = vsel %vm231, %v217, 0
  %v311 = vsel %vm231, %v218, 0
  %v314 = vsel %vm231, %v219, 0
  %v317 = vsel %vm231, %v220, 0
  %v320 = vsel %vm231, %v221, 0
  %v323 = vsel %vm231, %v222, 0
  %v326 = vsel %vm231, %v223, 0
  %vm328 = vcmask 1042432
  %v330 = vsel %vm328, %v191, 0
  %332 = vmatprep.subr.bf16.mxu0 0
  %333 = vmatpush1.bf16.msra.mxu0 0
  %334 = vmatprep.subr.bf16.mxu0 0
  %335 = vmatpush1.bf16.msra.mxu0 0
  %336 = vmatprep.subr.bf16.mxu0 0
  %337 = vmatpush1.bf16.msra.mxu0 0
  %338 = vmatprep.subr.bf16.mxu0 0
  %339 = vmatpush1.bf16.msra.mxu0 0
  %340 = vmatprep.subr.bf16.mxu0 0
  %341 = vmatpush1.bf16.msra.mxu0 0
  %342 = vmatprep.subr.bf16.mxu0 0
  %343 = vmatpush1.bf16.msra.mxu0 0
  %344 = vmatprep.subr.bf16.mxu0 0
  %345 = vmatpush1.bf16.msra.mxu0 0
  %346 = vmatprep.subr.bf16.mxu0 0
  %347 = vmatpush1.bf16.msra.mxu0 %v330
  %348 = vmatprep.subr.bf16.mxu0 0
  %349 = vmatpush2.bf16.msra.mxu0 0
  %350 = vmatprep.subr.bf16.mxu0 0
  %351 = vmatpush2.bf16.msra.mxu0 0
  %352 = vmatprep.subr.bf16.mxu0 0
  %353 = vmatpush2.bf16.msra.mxu0 0
  %354 = vmatprep.subr.bf16.mxu0 0
  %355 = vmatpush2.bf16.msra.mxu0 0
  %356 = vmatprep.subr.bf16.mxu0 0
  %357 = vmatpush2.bf16.msra.mxu0 0
  %358 = vmatprep.subr.bf16.mxu0 0
  %359 = vmatpush2.bf16.msra.mxu0 0
  %360 = vmatprep.subr.bf16.mxu0 0
  %361 = vmatpush2.bf16.msra.mxu0 0
  %362 = vmatprep.subr.bf16.mxu0 0
  %363 = vmatpush2.bf16.msra.mxu0 0
  %364 = vmatprep.mubr.bf16.mxu0 0
  %365 = vmatmul.mubr.bf16.gmra.mxu0 %v233
  %v366 = vpop.f32.mrf.mxu0
  %v367 = vadd.f32 %v229, %v366
  %v368 = vpop.f32.mrf.mxu0
  %v369 = vpop.f32.mrf.mxu0
  %v370 = vadd.f32 %v229, %v369
  %v371 = vpop.f32.mrf.mxu0
  %372 = vmatprep.mubr.bf16.mxu0 0
  %373 = vmatmul.mubr.bf16.gmra.mxu0 %v236
  %v374 = vpop.f32.mrf.mxu0
  %v375 = vadd.f32 %v229, %v374
  %v376 = vpop.f32.mrf.mxu0
  %v377 = vpop.f32.mrf.mxu0
  %v378 = vadd.f32 %v229, %v377
  %v379 = vpop.f32.mrf.mxu0
  %380 = vmatprep.mubr.bf16.mxu0 0
  %381 = vmatmul.mubr.bf16.gmra.mxu0 %v239
  %v382 = vpop.f32.mrf.mxu0
  %v383 = vadd.f32 %v229, %v382
  %v384 = vpop.f32.mrf.mxu0
  %v385 = vpop.f32.mrf.mxu0
  %v386 = vadd.f32 %v229, %v385
  %v387 = vpop.f32.mrf.mxu0
  %388 = vmatprep.mubr.bf16.mxu0 0
  %389 = vmatmul.mubr.bf16.gmra.mxu0 %v242
  %v390 = vpop.f32.mrf.mxu0
  %v391 = vadd.f32 %v229, %v390
  %v392 = vpop.f32.mrf.mxu0
  %v393 = vpop.f32.mrf.mxu0
  %v394 = vadd.f32 %v229, %v393
  %v395 = vpop.f32.mrf.mxu0
  %396 = vmatprep.mubr.bf16.mxu0 0
  %397 = vmatmul.mubr.bf16.gmra.mxu0 %v245
  %v398 = vpop.f32.mrf.mxu0
  %v399 = vadd.f32 %v229, %v398
  %v400 = vpop.f32.mrf.mxu0
  %v401 = vpop.f32.mrf.mxu0
  %v402 = vadd.f32 %v229, %v401
  %v403 = vpop.f32.mrf.mxu0
  %404 = vmatprep.mubr.bf16.mxu0 0
  %405 = vmatmul.mubr.bf16.gmra.mxu0 %v248
  %v406 = vpop.f32.mrf.mxu0
  %v407 = vadd.f32 %v229, %v406
  %v408 = vpop.f32.mrf.mxu0
  %v409 = vpop.f32.mrf.mxu0
  %v410 = vadd.f32 %v229, %v409
  %v411 = vpop.f32.mrf.mxu0
  %412 = vmatprep.mubr.bf16.mxu0 0
  %413 = vmatmul.mubr.bf16.gmra.mxu0 %v251
  %v414 = vpop.f32.mrf.mxu0
  %v415 = vadd.f32 %v229, %v414
  %v416 = vpop.f32.mrf.mxu0
  %v417 = vpop.f32.mrf.mxu0
  %v418 = vadd.f32 %v229, %v417
  %v419 = vpop.f32.mrf.mxu0
  %420 = vmatprep.mubr.bf16.mxu0 0
  %421 = vmatmul.mubr.bf16.gmra.mxu0 %v254
  %v422 = vpop.f32.mrf.mxu0
  %v423 = vadd.f32 %v229, %v422
  %v424 = vpop.f32.mrf.mxu0
  %v425 = vpop.f32.mrf.mxu0
  %v426 = vadd.f32 %v229, %v425
  %v427 = vpop.f32.mrf.mxu0
  %428 = vmatprep.mubr.bf16.mxu0 0
  %429 = vmatmul.mubr.bf16.gmra.mxu0 %v257
  %v430 = vpop.f32.mrf.mxu0
  %v431 = vadd.f32 %v229, %v430
  %v432 = vpop.f32.mrf.mxu0
  %v433 = vpop.f32.mrf.mxu0
  %v434 = vadd.f32 %v229, %v433
  %v435 = vpop.f32.mrf.mxu0
  %436 = vmatprep.mubr.bf16.mxu0 0
  %437 = vmatmul.mubr.bf16.gmra.mxu0 %v260
  %v438 = vpop.f32.mrf.mxu0
  %v439 = vadd.f32 %v229, %v438
  %v440 = vpop.f32.mrf.mxu0
  %v441 = vpop.f32.mrf.mxu0
  %v442 = vadd.f32 %v229, %v441
  %v443 = vpop.f32.mrf.mxu0
  %444 = vmatprep.mubr.bf16.mxu0 0
  %445 = vmatmul.mubr.bf16.gmra.mxu0 %v263
  %v446 = vpop.f32.mrf.mxu0
  %v447 = vadd.f32 %v229, %v446
  %v448 = vpop.f32.mrf.mxu0
  %v449 = vpop.f32.mrf.mxu0
  %v450 = vadd.f32 %v229, %v449
  %v451 = vpop.f32.mrf.mxu0
  %452 = vmatprep.mubr.bf16.mxu0 0
  %453 = vmatmul.mubr.bf16.gmra.mxu0 %v266
  %v454 = vpop.f32.mrf.mxu0
  %v455 = vadd.f32 %v229, %v454
  %v456 = vpop.f32.mrf.mxu0
  %v457 = vpop.f32.mrf.mxu0
  %v458 = vadd.f32 %v229, %v457
  %v459 = vpop.f32.mrf.mxu0
  %460 = vmatprep.mubr.bf16.mxu0 0
  %461 = vmatmul.mubr.bf16.gmra.mxu0 %v269
  %v462 = vpop.f32.mrf.mxu0
  %v463 = vadd.f32 %v229, %v462
  %v464 = vpop.f32.mrf.mxu0
  %v465 = vpop.f32.mrf.mxu0
  %v466 = vadd.f32 %v229, %v465
  %v467 = vpop.f32.mrf.mxu0
  %468 = vmatprep.mubr.bf16.mxu0 0
  %469 = vmatmul.mubr.bf16.gmra.mxu0 %v272
  %v470 = vpop.f32.mrf.mxu0
  %v471 = vadd.f32 %v229, %v470
  %v472 = vpop.f32.mrf.mxu0
  %v473 = vpop.f32.mrf.mxu0
  %v474 = vadd.f32 %v229, %v473
  %v475 = vpop.f32.mrf.mxu0
  %476 = vmatprep.mubr.bf16.mxu0 0
  %477 = vmatmul.mubr.bf16.gmra.mxu0 %v275
  %v478 = vpop.f32.mrf.mxu0
  %v479 = vadd.f32 %v229, %v478
  %v480 = vpop.f32.mrf.mxu0
  %v481 = vpop.f32.mrf.mxu0
  %v482 = vadd.f32 %v229, %v481
  %v483 = vpop.f32.mrf.mxu0
  %484 = vmatprep.mubr.bf16.mxu0 0
  %485 = vmatmul.mubr.bf16.gmra.mxu0 %v278
  %v486 = vpop.f32.mrf.mxu0
  %v487 = vadd.f32 %v229, %v486
  %v488 = vpop.f32.mrf.mxu0
  %v489 = vpop.f32.mrf.mxu0
  %v490 = vadd.f32 %v229, %v489
  %v491 = vpop.f32.mrf.mxu0
  %492 = vmatprep.mubr.bf16.mxu0 0
  %493 = vmatmul.mubr.bf16.gmra.mxu0 %v281
  %v494 = vpop.f32.mrf.mxu0
  %v495 = vadd.f32 %v229, %v494
  %v496 = vpop.f32.mrf.mxu0
  %v497 = vpop.f32.mrf.mxu0
  %v498 = vadd.f32 %v229, %v497
  %v499 = vpop.f32.mrf.mxu0
  %500 = vmatprep.mubr.bf16.mxu0 0
  %501 = vmatmul.mubr.bf16.gmra.mxu0 %v284
  %v502 = vpop.f32.mrf.mxu0
  %v503 = vadd.f32 %v229, %v502
  %v504 = vpop.f32.mrf.mxu0
  %v505 = vpop.f32.mrf.mxu0
  %v506 = vadd.f32 %v229, %v505
  %v507 = vpop.f32.mrf.mxu0
  %508 = vmatprep.mubr.bf16.mxu0 0
  %509 = vmatmul.mubr.bf16.gmra.mxu0 %v287
  %v510 = vpop.f32.mrf.mxu0
  %v511 = vadd.f32 %v229, %v510
  %v512 = vpop.f32.mrf.mxu0
  %v513 = vpop.f32.mrf.mxu0
  %v514 = vadd.f32 %v229, %v513
  %v515 = vpop.f32.mrf.mxu0
  %516 = vmatprep.mubr.bf16.mxu0 0
  %517 = vmatmul.mubr.bf16.gmra.mxu0 %v290
  %v518 = vpop.f32.mrf.mxu0
  %v519 = vadd.f32 %v229, %v518
  %v520 = vpop.f32.mrf.mxu0
  %v521 = vpop.f32.mrf.mxu0
  %v522 = vadd.f32 %v229, %v521
  %v523 = vpop.f32.mrf.mxu0
  %524 = vmatprep.mubr.bf16.mxu0 0
  %525 = vmatmul.mubr.bf16.gmra.mxu0 %v293
  %v526 = vpop.f32.mrf.mxu0
  %v527 = vadd.f32 %v229, %v526
  %v528 = vpop.f32.mrf.mxu0
  %v529 = vpop.f32.mrf.mxu0
  %v530 = vadd.f32 %v229, %v529
  %v531 = vpop.f32.mrf.mxu0
  %532 = vmatprep.mubr.bf16.mxu0 0
  %533 = vmatmul.mubr.bf16.gmra.mxu0 %v296
  %v534 = vpop.f32.mrf.mxu0
  %v535 = vadd.f32 %v229, %v534
  %v536 = vpop.f32.mrf.mxu0
  %v537 = vpop.f32.mrf.mxu0
  %v538 = vadd.f32 %v229, %v537
  %v539 = vpop.f32.mrf.mxu0
  %540 = vmatprep.mubr.bf16.mxu0 0
  %541 = vmatmul.mubr.bf16.gmra.mxu0 %v299
  %v542 = vpop.f32.mrf.mxu0
  %v543 = vadd.f32 %v229, %v542
  %v544 = vpop.f32.mrf.mxu0
  %v545 = vpop.f32.mrf.mxu0
  %v546 = vadd.f32 %v229, %v545
  %v547 = vpop.f32.mrf.mxu0
  %548 = vmatprep.mubr.bf16.mxu0 0
  %549 = vmatmul.mubr.bf16.gmra.mxu0 %v302
  %v550 = vpop.f32.mrf.mxu0
  %v551 = vadd.f32 %v229, %v550
  %v552 = vpop.f32.mrf.mxu0
  %v553 = vpop.f32.mrf.mxu0
  %v554 = vadd.f32 %v229, %v553
  %v555 = vpop.f32.mrf.mxu0
  %556 = vmatprep.mubr.bf16.mxu0 0
  %557 = vmatmul.mubr.bf16.gmra.mxu0 %v305
  %v558 = vpop.f32.mrf.mxu0
  %v559 = vadd.f32 %v229, %v558
  %v560 = vpop.f32.mrf.mxu0
  %v561 = vpop.f32.mrf.mxu0
  %v562 = vadd.f32 %v229, %v561
  %v563 = vpop.f32.mrf.mxu0
  %564 = vmatprep.mubr.bf16.mxu0 0
  %565 = vmatmul.mubr.bf16.gmra.mxu0 %v308
  %v566 = vpop.f32.mrf.mxu0
  %v567 = vadd.f32 %v229, %v566
  %v568 = vpop.f32.mrf.mxu0
  %v569 = vpop.f32.mrf.mxu0
  %v570 = vadd.f32 %v229, %v569
  %v571 = vpop.f32.mrf.mxu0
  %572 = vmatprep.mubr.bf16.mxu0 0
  %573 = vmatmul.mubr.bf16.gmra.mxu0 %v311
  %v574 = vpop.f32.mrf.mxu0
  %v575 = vadd.f32 %v229, %v574
  %v576 = vpop.f32.mrf.mxu0
  %v577 = vpop.f32.mrf.mxu0
  %v578 = vadd.f32 %v229, %v577
  %v579 = vpop.f32.mrf.mxu0
  %580 = vmatprep.mubr.bf16.mxu0 0
  %581 = vmatmul.mubr.bf16.gmra.mxu0 %v314
  %v582 = vpop.f32.mrf.mxu0
  %v583 = vadd.f32 %v229, %v582
  %v584 = vpop.f32.mrf.mxu0
  %v585 = vpop.f32.mrf.mxu0
  %v586 = vadd.f32 %v229, %v585
  %v587 = vpop.f32.mrf.mxu0
  %588 = vmatprep.mubr.bf16.mxu0 0
  %589 = vmatmul.mubr.bf16.gmra.mxu0 %v317
  %v590 = vpop.f32.mrf.mxu0
  %v591 = vadd.f32 %v229, %v590
  %v592 = vpop.f32.mrf.mxu0
  %v593 = vpop.f32.mrf.mxu0
  %v594 = vadd.f32 %v229, %v593
  %v595 = vpop.f32.mrf.mxu0
  %596 = vmatprep.mubr.bf16.mxu0 0
  %597 = vmatmul.mubr.bf16.gmra.mxu0 %v320
  %v598 = vpop.f32.mrf.mxu0
  %v599 = vadd.f32 %v229, %v598
  %v600 = vpop.f32.mrf.mxu0
  %v601 = vpop.f32.mrf.mxu0
  %v602 = vadd.f32 %v229, %v601
  %v603 = vpop.f32.mrf.mxu0
  %604 = vmatprep.mubr.bf16.mxu0 0
  %605 = vmatmul.mubr.bf16.gmra.mxu0 %v323
  %v606 = vpop.f32.mrf.mxu0
  %v607 = vadd.f32 %v229, %v606
  %v608 = vpop.f32.mrf.mxu0
  %v609 = vpop.f32.mrf.mxu0
  %v610 = vadd.f32 %v229, %v609
  %v611 = vpop.f32.mrf.mxu0
  %612 = vmatprep.mubr.bf16.mxu0 0
  %613 = vmatmul.mubr.bf16.gmra.mxu0 %v326
  %v614 = vpop.f32.mrf.mxu0
  %v615 = vadd.f32 %v229, %v614
  %v616 = vpop.f32.mrf.mxu0
  %v617 = vpop.f32.mrf.mxu0
  %v618 = vadd.f32 %v229, %v617
  %v619 = vpop.f32.mrf.mxu0
  %620 = vdwg.mxu0
  %v621 = vld [vmem:[%s25] sm:$0x1]
  %v622 = vld [vmem:[%s27] sm:$0x1]
  %vm623 = vcmask 261120
  %v624 = vsel %vm623, %v367, 0.0
  %625 = vadd.xlane.f32.xlu0 %v624
  %v626 = vpop.xlane.xlu0 %625
  %v627 = vsel %vm623, %v370, 0.0
  %628 = vadd.xlane.f32.xlu0 %v627
  %v629 = vpop.xlane.xlu0 %628
  %v630 = vsel %vm623, %v375, 0.0
  %631 = vadd.xlane.f32.xlu0 %v630
  %v632 = vpop.xlane.xlu0 %631
  %v633 = vsel %vm623, %v378, 0.0
  %634 = vadd.xlane.f32.xlu0 %v633
  %v635 = vpop.xlane.xlu0 %634
  %v636 = vsel %vm623, %v383, 0.0
  %637 = vadd.xlane.f32.xlu0 %v636
  %v638 = vpop.xlane.xlu0 %637
  %v639 = vsel %vm623, %v386, 0.0
  %640 = vadd.xlane.f32.xlu0 %v639
  %v641 = vpop.xlane.xlu0 %640
  %v642 = vsel %vm623, %v391, 0.0
  %643 = vadd.xlane.f32.xlu0 %v642
  %v644 = vpop.xlane.xlu0 %643
  %v645 = vsel %vm623, %v394, 0.0
  %646 = vadd.xlane.f32.xlu0 %v645
  %v647 = vpop.xlane.xlu0 %646
  %v648 = vsel %vm623, %v399, 0.0
  %649 = vadd.xlane.f32.xlu0 %v648
  %v650 = vpop.xlane.xlu0 %649
  %v651 = vsel %vm623, %v402, 0.0
  %652 = vadd.xlane.f32.xlu0 %v651
  %v653 = vpop.xlane.xlu0 %652
  %v654 = vsel %vm623, %v407, 0.0
  %655 = vadd.xlane.f32.xlu0 %v654
  %v656 = vpop.xlane.xlu0 %655
  %v657 = vsel %vm623, %v410, 0.0
  %658 = vadd.xlane.f32.xlu0 %v657
  %v659 = vpop.xlane.xlu0 %658
  %v660 = vsel %vm623, %v415, 0.0
  %661 = vadd.xlane.f32.xlu0 %v660
  %v662 = vpop.xlane.xlu0 %661
  %v663 = vsel %vm623, %v418, 0.0
  %664 = vadd.xlane.f32.xlu0 %v663
  %v665 = vpop.xlane.xlu0 %664
  %v666 = vsel %vm623, %v423, 0.0
  %667 = vadd.xlane.f32.xlu0 %v666
  %v668 = vpop.xlane.xlu0 %667
  %v669 = vsel %vm623, %v426, 0.0
  %670 = vadd.xlane.f32.xlu0 %v669
  %v671 = vpop.xlane.xlu0 %670
  %v672 = vsel %vm623, %v431, 0.0
  %673 = vadd.xlane.f32.xlu0 %v672
  %v674 = vpop.xlane.xlu0 %673
  %v675 = vsel %vm623, %v434, 0.0
  %676 = vadd.xlane.f32.xlu0 %v675
  %v677 = vpop.xlane.xlu0 %676
  %v678 = vsel %vm623, %v439, 0.0
  %679 = vadd.xlane.f32.xlu0 %v678
  %v680 = vpop.xlane.xlu0 %679
  %v681 = vsel %vm623, %v442, 0.0
  %682 = vadd.xlane.f32.xlu0 %v681
  %v683 = vpop.xlane.xlu0 %682
  %v684 = vsel %vm623, %v447, 0.0
  %685 = vadd.xlane.f32.xlu0 %v684
  %v686 = vpop.xlane.xlu0 %685
  %v687 = vsel %vm623, %v450, 0.0
  %688 = vadd.xlane.f32.xlu0 %v687
  %v689 = vpop.xlane.xlu0 %688
  %v690 = vsel %vm623, %v455, 0.0
  %691 = vadd.xlane.f32.xlu0 %v690
  %v692 = vpop.xlane.xlu0 %691
  %v693 = vsel %vm623, %v458, 0.0
  %694 = vadd.xlane.f32.xlu0 %v693
  %v695 = vpop.xlane.xlu0 %694
  %v696 = vsel %vm623, %v463, 0.0
  %697 = vadd.xlane.f32.xlu0 %v696
  %v698 = vpop.xlane.xlu0 %697
  %v699 = vsel %vm623, %v466, 0.0
  %700 = vadd.xlane.f32.xlu0 %v699
  %v701 = vpop.xlane.xlu0 %700
  %v702 = vsel %vm623, %v471, 0.0
  %703 = vadd.xlane.f32.xlu0 %v702
  %v704 = vpop.xlane.xlu0 %703
  %v705 = vsel %vm623, %v474, 0.0
  %706 = vadd.xlane.f32.xlu0 %v705
  %v707 = vpop.xlane.xlu0 %706
  %v708 = vsel %vm623, %v479, 0.0
  %709 = vadd.xlane.f32.xlu0 %v708
  %v710 = vpop.xlane.xlu0 %709
  %v711 = vsel %vm623, %v482, 0.0
  %712 = vadd.xlane.f32.xlu0 %v711
  %v713 = vpop.xlane.xlu0 %712
  %v714 = vsel %vm623, %v487, 0.0
  %715 = vadd.xlane.f32.xlu0 %v714
  %v716 = vpop.xlane.xlu0 %715
  %v717 = vsel %vm623, %v490, 0.0
  %718 = vadd.xlane.f32.xlu0 %v717
  %v719 = vpop.xlane.xlu0 %718
  %v720 = vsel %vm623, %v495, 0.0
  %721 = vadd.xlane.f32.xlu0 %v720
  %v722 = vpop.xlane.xlu0 %721
  %v723 = vsel %vm623, %v498, 0.0
  %724 = vadd.xlane.f32.xlu0 %v723
  %v725 = vpop.xlane.xlu0 %724
  %v726 = vsel %vm623, %v503, 0.0
  %727 = vadd.xlane.f32.xlu0 %v726
  %v728 = vpop.xlane.xlu0 %727
  %v729 = vsel %vm623, %v506, 0.0
  %730 = vadd.xlane.f32.xlu0 %v729
  %v731 = vpop.xlane.xlu0 %730
  %v732 = vsel %vm623, %v511, 0.0
  %733 = vadd.xlane.f32.xlu0 %v732
  %v734 = vpop.xlane.xlu0 %733
  %v735 = vsel %vm623, %v514, 0.0
  %736 = vadd.xlane.f32.xlu0 %v735
  %v737 = vpop.xlane.xlu0 %736
  %v738 = vsel %vm623, %v519, 0.0
  %739 = vadd.xlane.f32.xlu0 %v738
  %v740 = vpop.xlane.xlu0 %739
  %v741 = vsel %vm623, %v522, 0.0
  %742 = vadd.xlane.f32.xlu0 %v741
  %v743 = vpop.xlane.xlu0 %742
  %v744 = vsel %vm623, %v527, 0.0
  %745 = vadd.xlane.f32.xlu0 %v744
  %v746 = vpop.xlane.xlu0 %745
  %v747 = vsel %vm623, %v530, 0.0
  %748 = vadd.xlane.f32.xlu0 %v747
  %v749 = vpop.xlane.xlu0 %748
  %v750 = vsel %vm623, %v535, 0.0
  %751 = vadd.xlane.f32.xlu0 %v750
  %v752 = vpop.xlane.xlu0 %751
  %v753 = vsel %vm623, %v538, 0.0
  %754 = vadd.xlane.f32.xlu0 %v753
  %v755 = vpop.xlane.xlu0 %754
  %v756 = vsel %vm623, %v543, 0.0
  %757 = vadd.xlane.f32.xlu0 %v756
  %v758 = vpop.xlane.xlu0 %757
  %v759 = vsel %vm623, %v546, 0.0
  %760 = vadd.xlane.f32.xlu0 %v759
  %v761 = vpop.xlane.xlu0 %760
  %v762 = vsel %vm623, %v551, 0.0
  %763 = vadd.xlane.f32.xlu0 %v762
  %v764 = vpop.xlane.xlu0 %763
  %v765 = vsel %vm623, %v554, 0.0
  %766 = vadd.xlane.f32.xlu0 %v765
  %v767 = vpop.xlane.xlu0 %766
  %v768 = vsel %vm623, %v559, 0.0
  %769 = vadd.xlane.f32.xlu0 %v768
  %v770 = vpop.xlane.xlu0 %769
  %v771 = vsel %vm623, %v562, 0.0
  %772 = vadd.xlane.f32.xlu0 %v771
  %v773 = vpop.xlane.xlu0 %772
  %v774 = vsel %vm623, %v567, 0.0
  %775 = vadd.xlane.f32.xlu0 %v774
  %v776 = vpop.xlane.xlu0 %775
  %v777 = vsel %vm623, %v570, 0.0
  %778 = vadd.xlane.f32.xlu0 %v777
  %v779 = vpop.xlane.xlu0 %778
  %v780 = vsel %vm623, %v575, 0.0
  %781 = vadd.xlane.f32.xlu0 %v780
  %v782 = vpop.xlane.xlu0 %781
  %v783 = vsel %vm623, %v578, 0.0
  %784 = vadd.xlane.f32.xlu0 %v783
  %v785 = vpop.xlane.xlu0 %784
  %v786 = vsel %vm623, %v583, 0.0
  %787 = vadd.xlane.f32.xlu0 %v786
  %v788 = vpop.xlane.xlu0 %787
  %v789 = vsel %vm623, %v586, 0.0
  %790 = vadd.xlane.f32.xlu0 %v789
  %v791 = vpop.xlane.xlu0 %790
  %v792 = vsel %vm623, %v591, 0.0
  %793 = vadd.xlane.f32.xlu0 %v792
  %v794 = vpop.xlane.xlu0 %793
  %v795 = vsel %vm623, %v594, 0.0
  %796 = vadd.xlane.f32.xlu0 %v795
  %v797 = vpop.xlane.xlu0 %796
  %v798 = vsel %vm623, %v599, 0.0
  %799 = vadd.xlane.f32.xlu0 %v798
  %v800 = vpop.xlane.xlu0 %799
  %v801 = vsel %vm623, %v602, 0.0
  %802 = vadd.xlane.f32.xlu0 %v801
  %v803 = vpop.xlane.xlu0 %802
  %v804 = vsel %vm623, %v607, 0.0
  %805 = vadd.xlane.f32.xlu0 %v804
  %v806 = vpop.xlane.xlu0 %805
  %v807 = vsel %vm623, %v610, 0.0
  %808 = vadd.xlane.f32.xlu0 %v807
  %v809 = vpop.xlane.xlu0 %808
  %v810 = vsel %vm623, %v615, 0.0
  %811 = vadd.xlane.f32.xlu0 %v810
  %v812 = vpop.xlane.xlu0 %811
  %v813 = vsel %vm623, %v618, 0.0
  %814 = vadd.xlane.f32.xlu0 %v813
  %v815 = vpop.xlane.xlu0 %814
  %v816 = vrcp.pop 32.0
  %v817 = vmul.f32 %v626, %v816
  %v818 = vmul.f32 %v629, %v816
  %v819 = vmul.f32 %v632, %v816
  %v820 = vmul.f32 %v635, %v816
  %v821 = vmul.f32 %v638, %v816
  %v822 = vmul.f32 %v641, %v816
  %v823 = vmul.f32 %v644, %v816
  %v824 = vmul.f32 %v647, %v816
  %v825 = vmul.f32 %v650, %v816
  %v826 = vmul.f32 %v653, %v816
  %v827 = vmul.f32 %v656, %v816
  %v828 = vmul.f32 %v659, %v816
  %v829 = vmul.f32 %v662, %v816
  %v830 = vmul.f32 %v665, %v816
  %v831 = vmul.f32 %v668, %v816
  %v832 = vmul.f32 %v671, %v816
  %v833 = vmul.f32 %v674, %v816
  %v834 = vmul.f32 %v677, %v816
  %v835 = vmul.f32 %v680, %v816
  %v836 = vmul.f32 %v683, %v816
  %v837 = vmul.f32 %v686, %v816
  %v838 = vmul.f32 %v689, %v816
  %v839 = vmul.f32 %v692, %v816
  %v840 = vmul.f32 %v695, %v816
  %v841 = vmul.f32 %v698, %v816
  %v842 = vmul.f32 %v701, %v816
  %v843 = vmul.f32 %v704, %v816
  %v844 = vmul.f32 %v707, %v816
  %v845 = vmul.f32 %v710, %v816
  %v846 = vmul.f32 %v713, %v816
  %v847 = vmul.f32 %v716, %v816
  %v848 = vmul.f32 %v719, %v816
  %v849 = vmul.f32 %v722, %v816
  %v850 = vmul.f32 %v725, %v816
  %v851 = vmul.f32 %v728, %v816
  %v852 = vmul.f32 %v731, %v816
  %v853 = vmul.f32 %v734, %v816
  %v854 = vmul.f32 %v737, %v816
  %v855 = vmul.f32 %v740, %v816
  %v856 = vmul.f32 %v743, %v816
  %v857 = vmul.f32 %v746, %v816
  %v858 = vmul.f32 %v749, %v816
  %v859 = vmul.f32 %v752, %v816
  %v860 = vmul.f32 %v755, %v816
  %v861 = vmul.f32 %v758, %v816
  %v862 = vmul.f32 %v761, %v816
  %v863 = vmul.f32 %v764, %v816
  %v864 = vmul.f32 %v767, %v816
  %v865 = vmul.f32 %v770, %v816
  %v866 = vmul.f32 %v773, %v816
  %v867 = vmul.f32 %v776, %v816
  %v868 = vmul.f32 %v779, %v816
  %v869 = vmul.f32 %v782, %v816
  %v870 = vmul.f32 %v785, %v816
  %v871 = vmul.f32 %v788, %v816
  %v872 = vmul.f32 %v791, %v816
  %v873 = vmul.f32 %v794, %v816
  %v874 = vmul.f32 %v797, %v816
  %v875 = vmul.f32 %v800, %v816
  %v876 = vmul.f32 %v803, %v816
  %v877 = vmul.f32 %v806, %v816
  %v878 = vmul.f32 %v809, %v816
  %v879 = vmul.f32 %v812, %v816
  %v880 = vmul.f32 %v815, %v816
  %v881 = vsub.f32 %v367, %v817
  %v882 = vsub.f32 %v370, %v818
  %v883 = vsub.f32 %v375, %v819
  %v884 = vsub.f32 %v378, %v820
  %v885 = vsub.f32 %v383, %v821
  %v886 = vsub.f32 %v386, %v822
  %v887 = vsub.f32 %v391, %v823
  %v888 = vsub.f32 %v394, %v824
  %v889 = vsub.f32 %v399, %v825
  %v890 = vsub.f32 %v402, %v826
  %v891 = vsub.f32 %v407, %v827
  %v892 = vsub.f32 %v410, %v828
  %v893 = vsub.f32 %v415, %v829
  %v894 = vsub.f32 %v418, %v830
  %v895 = vsub.f32 %v423, %v831
  %v896 = vsub.f32 %v426, %v832
  %v897 = vsub.f32 %v431, %v833
  %v898 = vsub.f32 %v434, %v834
  %v899 = vsub.f32 %v439, %v835
  %v900 = vsub.f32 %v442, %v836
  %v901 = vsub.f32 %v447, %v837
  %v902 = vsub.f32 %v450, %v838
  %v903 = vsub.f32 %v455, %v839
  %v904 = vsub.f32 %v458, %v840
  %v905 = vsub.f32 %v463, %v841
  %v906 = vsub.f32 %v466, %v842
  %v907 = vsub.f32 %v471, %v843
  %v908 = vsub.f32 %v474, %v844
  %v909 = vsub.f32 %v479, %v845
  %v910 = vsub.f32 %v482, %v846
  %v911 = vsub.f32 %v487, %v847
  %v912 = vsub.f32 %v490, %v848
  %v913 = vsub.f32 %v495, %v849
  %v914 = vsub.f32 %v498, %v850
  %v915 = vsub.f32 %v503, %v851
  %v916 = vsub.f32 %v506, %v852
  %v917 = vsub.f32 %v511, %v853
  %v918 = vsub.f32 %v514, %v854
  %v919 = vsub.f32 %v519, %v855
  %v920 = vsub.f32 %v522, %v856
  %v921 = vsub.f32 %v527, %v857
  %v922 = vsub.f32 %v530, %v858
  %v923 = vsub.f32 %v535, %v859
  %v924 = vsub.f32 %v538, %v860
  %v925 = vsub.f32 %v543, %v861
  %v926 = vsub.f32 %v546, %v862
  %v927 = vsub.f32 %v551, %v863
  %v928 = vsub.f32 %v554, %v864
  %v929 = vsub.f32 %v559, %v865
  %v930 = vsub.f32 %v562, %v866
  %v931 = vsub.f32 %v567, %v867
  %v932 = vsub.f32 %v570, %v868
  %v933 = vsub.f32 %v575, %v869
  %v934 = vsub.f32 %v578, %v870
  %v935 = vsub.f32 %v583, %v871
  %v936 = vsub.f32 %v586, %v872
  %v937 = vsub.f32 %v591, %v873
  %v938 = vsub.f32 %v594, %v874
  %v939 = vsub.f32 %v599, %v875
  %v940 = vsub.f32 %v602, %v876
  %v941 = vsub.f32 %v607, %v877
  %v942 = vsub.f32 %v610, %v878
  %v943 = vsub.f32 %v615, %v879
  %v944 = vsub.f32 %v618, %v880
  %v945 = vmul.f32 %v881, %v881
  %v946 = vmul.f32 %v882, %v882
  %v947 = vmul.f32 %v883, %v883
  %v948 = vmul.f32 %v884, %v884
  %v949 = vmul.f32 %v885, %v885
  %v950 = vmul.f32 %v886, %v886
  %v951 = vmul.f32 %v887, %v887
  %v952 = vmul.f32 %v888, %v888
  %v953 = vmul.f32 %v889, %v889
  %v954 = vmul.f32 %v890, %v890
  %v955 = vmul.f32 %v891, %v891
  %v956 = vmul.f32 %v892, %v892
  %v957 = vmul.f32 %v893, %v893
  %v958 = vmul.f32 %v894, %v894
  %v959 = vmul.f32 %v895, %v895
  %v960 = vmul.f32 %v896, %v896
  %v961 = vmul.f32 %v897, %v897
  %v962 = vmul.f32 %v898, %v898
  %v963 = vmul.f32 %v899, %v899
  %v964 = vmul.f32 %v900, %v900
  %v965 = vmul.f32 %v901, %v901
  %v966 = vmul.f32 %v902, %v902
  %v967 = vmul.f32 %v903, %v903
  %v968 = vmul.f32 %v904, %v904
  %v969 = vmul.f32 %v905, %v905
  %v970 = vmul.f32 %v906, %v906
  %v971 = vmul.f32 %v907, %v907
  %v972 = vmul.f32 %v908, %v908
  %v973 = vmul.f32 %v909, %v909
  %v974 = vmul.f32 %v910, %v910
  %v975 = vmul.f32 %v911, %v911
  %v976 = vmul.f32 %v912, %v912
  %v977 = vmul.f32 %v913, %v913
  %v978 = vmul.f32 %v914, %v914
  %v979 = vmul.f32 %v915, %v915
  %v980 = vmul.f32 %v916, %v916
  %v981 = vmul.f32 %v917, %v917
  %v982 = vmul.f32 %v918, %v918
  %v983 = vmul.f32 %v919, %v919
  %v984 = vmul.f32 %v920, %v920
  %v985 = vmul.f32 %v921, %v921
  %v986 = vmul.f32 %v922, %v922
  %v987 = vmul.f32 %v923, %v923
  %v988 = vmul.f32 %v924, %v924
  %v989 = vmul.f32 %v925, %v925
  %v990 = vmul.f32 %v926, %v926
  %v991 = vmul.f32 %v927, %v927
  %v992 = vmul.f32 %v928, %v928
  %v993 = vmul.f32 %v929, %v929
  %v994 = vmul.f32 %v930, %v930
  %v995 = vmul.f32 %v931, %v931
  %v996 = vmul.f32 %v932, %v932
  %v997 = vmul.f32 %v933, %v933
  %v998 = vmul.f32 %v934, %v934
  %v999 = vmul.f32 %v935, %v935
  %v1000 = vmul.f32 %v936, %v936
  %v1001 = vmul.f32 %v937, %v937
  %v1002 = vmul.f32 %v938, %v938
  %v1003 = vmul.f32 %v939, %v939
  %v1004 = vmul.f32 %v940, %v940
  %v1005 = vmul.f32 %v941, %v941
  %v1006 = vmul.f32 %v942, %v942
  %v1007 = vmul.f32 %v943, %v943
  %v1008 = vmul.f32 %v944, %v944
  %v1009 = vsel %vm623, %v945, 0.0
  %1010 = vadd.xlane.f32.xlu0 %v1009
  %v1011 = vpop.xlane.xlu0 %1010
  %v1012 = vsel %vm623, %v946, 0.0
  %1013 = vadd.xlane.f32.xlu0 %v1012
  %v1014 = vpop.xlane.xlu0 %1013
  %v1015 = vsel %vm623, %v947, 0.0
  %1016 = vadd.xlane.f32.xlu0 %v1015
  %v1017 = vpop.xlane.xlu0 %1016
  %v1018 = vsel %vm623, %v948, 0.0
  %1019 = vadd.xlane.f32.xlu0 %v1018
  %v1020 = vpop.xlane.xlu0 %1019
  %v1021 = vsel %vm623, %v949, 0.0
  %1022 = vadd.xlane.f32.xlu0 %v1021
  %v1023 = vpop.xlane.xlu0 %1022
  %v1024 = vsel %vm623, %v950, 0.0
  %1025 = vadd.xlane.f32.xlu0 %v1024
  %v1026 = vpop.xlane.xlu0 %1025
  %v1027 = vsel %vm623, %v951, 0.0
  %1028 = vadd.xlane.f32.xlu0 %v1027
  %v1029 = vpop.xlane.xlu0 %1028
  %v1030 = vsel %vm623, %v952, 0.0
  %1031 = vadd.xlane.f32.xlu0 %v1030
  %v1032 = vpop.xlane.xlu0 %1031
  %v1033 = vsel %vm623, %v953, 0.0
  %1034 = vadd.xlane.f32.xlu0 %v1033
  %v1035 = vpop.xlane.xlu0 %1034
  %v1036 = vsel %vm623, %v954, 0.0
  %1037 = vadd.xlane.f32.xlu0 %v1036
  %v1038 = vpop.xlane.xlu0 %1037
  %v1039 = vsel %vm623, %v955, 0.0
  %1040 = vadd.xlane.f32.xlu0 %v1039
  %v1041 = vpop.xlane.xlu0 %1040
  %v1042 = vsel %vm623, %v956, 0.0
  %1043 = vadd.xlane.f32.xlu0 %v1042
  %v1044 = vpop.xlane.xlu0 %1043
  %v1045 = vsel %vm623, %v957, 0.0
  %1046 = vadd.xlane.f32.xlu0 %v1045
  %v1047 = vpop.xlane.xlu0 %1046
  %v1048 = vsel %vm623, %v958, 0.0
  %1049 = vadd.xlane.f32.xlu0 %v1048
  %v1050 = vpop.xlane.xlu0 %1049
  %v1051 = vsel %vm623, %v959, 0.0
  %1052 = vadd.xlane.f32.xlu0 %v1051
  %v1053 = vpop.xlane.xlu0 %1052
  %v1054 = vsel %vm623, %v960, 0.0
  %1055 = vadd.xlane.f32.xlu0 %v1054
  %v1056 = vpop.xlane.xlu0 %1055
  %v1057 = vsel %vm623, %v961, 0.0
  %1058 = vadd.xlane.f32.xlu0 %v1057
  %v1059 = vpop.xlane.xlu0 %1058
  %v1060 = vsel %vm623, %v962, 0.0
  %1061 = vadd.xlane.f32.xlu0 %v1060
  %v1062 = vpop.xlane.xlu0 %1061
  %v1063 = vsel %vm623, %v963, 0.0
  %1064 = vadd.xlane.f32.xlu0 %v1063
  %v1065 = vpop.xlane.xlu0 %1064
  %v1066 = vsel %vm623, %v964, 0.0
  %1067 = vadd.xlane.f32.xlu0 %v1066
  %v1068 = vpop.xlane.xlu0 %1067
  %v1069 = vsel %vm623, %v965, 0.0
  %1070 = vadd.xlane.f32.xlu0 %v1069
  %v1071 = vpop.xlane.xlu0 %1070
  %v1072 = vsel %vm623, %v966, 0.0
  %1073 = vadd.xlane.f32.xlu0 %v1072
  %v1074 = vpop.xlane.xlu0 %1073
  %v1075 = vsel %vm623, %v967, 0.0
  %1076 = vadd.xlane.f32.xlu0 %v1075
  %v1077 = vpop.xlane.xlu0 %1076
  %v1078 = vsel %vm623, %v968, 0.0
  %1079 = vadd.xlane.f32.xlu0 %v1078
  %v1080 = vpop.xlane.xlu0 %1079
  %v1081 = vsel %vm623, %v969, 0.0
  %1082 = vadd.xlane.f32.xlu0 %v1081
  %v1083 = vpop.xlane.xlu0 %1082
  %v1084 = vsel %vm623, %v970, 0.0
  %1085 = vadd.xlane.f32.xlu0 %v1084
  %v1086 = vpop.xlane.xlu0 %1085
  %v1087 = vsel %vm623, %v971, 0.0
  %1088 = vadd.xlane.f32.xlu0 %v1087
  %v1089 = vpop.xlane.xlu0 %1088
  %v1090 = vsel %vm623, %v972, 0.0
  %1091 = vadd.xlane.f32.xlu0 %v1090
  %v1092 = vpop.xlane.xlu0 %1091
  %v1093 = vsel %vm623, %v973, 0.0
  %1094 = vadd.xlane.f32.xlu0 %v1093
  %v1095 = vpop.xlane.xlu0 %1094
  %v1096 = vsel %vm623, %v974, 0.0
  %1097 = vadd.xlane.f32.xlu0 %v1096
  %v1098 = vpop.xlane.xlu0 %1097
  %v1099 = vsel %vm623, %v975, 0.0
  %1100 = vadd.xlane.f32.xlu0 %v1099
  %v1101 = vpop.xlane.xlu0 %1100
  %v1102 = vsel %vm623, %v976, 0.0
  %1103 = vadd.xlane.f32.xlu0 %v1102
  %v1104 = vpop.xlane.xlu0 %1103
  %v1105 = vsel %vm623, %v977, 0.0
  %1106 = vadd.xlane.f32.xlu0 %v1105
  %v1107 = vpop.xlane.xlu0 %1106
  %v1108 = vsel %vm623, %v978, 0.0
  %1109 = vadd.xlane.f32.xlu0 %v1108
  %v1110 = vpop.xlane.xlu0 %1109
  %v1111 = vsel %vm623, %v979, 0.0
  %1112 = vadd.xlane.f32.xlu0 %v1111
  %v1113 = vpop.xlane.xlu0 %1112
  %v1114 = vsel %vm623, %v980, 0.0
  %1115 = vadd.xlane.f32.xlu0 %v1114
  %v1116 = vpop.xlane.xlu0 %1115
  %v1117 = vsel %vm623, %v981, 0.0
  %1118 = vadd.xlane.f32.xlu0 %v1117
  %v1119 = vpop.xlane.xlu0 %1118
  %v1120 = vsel %vm623, %v982, 0.0
  %1121 = vadd.xlane.f32.xlu0 %v1120
  %v1122 = vpop.xlane.xlu0 %1121
  %v1123 = vsel %vm623, %v983, 0.0
  %1124 = vadd.xlane.f32.xlu0 %v1123
  %v1125 = vpop.xlane.xlu0 %1124
  %v1126 = vsel %vm623, %v984, 0.0
  %1127 = vadd.xlane.f32.xlu0 %v1126
  %v1128 = vpop.xlane.xlu0 %1127
  %v1129 = vsel %vm623, %v985, 0.0
  %1130 = vadd.xlane.f32.xlu0 %v1129
  %v1131 = vpop.xlane.xlu0 %1130
  %v1132 = vsel %vm623, %v986, 0.0
  %1133 = vadd.xlane.f32.xlu0 %v1132
  %v1134 = vpop.xlane.xlu0 %1133
  %v1135 = vsel %vm623, %v987, 0.0
  %1136 = vadd.xlane.f32.xlu0 %v1135
  %v1137 = vpop.xlane.xlu0 %1136
  %v1138 = vsel %vm623, %v988, 0.0
  %1139 = vadd.xlane.f32.xlu0 %v1138
  %v1140 = vpop.xlane.xlu0 %1139
  %v1141 = vsel %vm623, %v989, 0.0
  %1142 = vadd.xlane.f32.xlu0 %v1141
  %v1143 = vpop.xlane.xlu0 %1142
  %v1144 = vsel %vm623, %v990, 0.0
  %1145 = vadd.xlane.f32.xlu0 %v1144
  %v1146 = vpop.xlane.xlu0 %1145
  %v1147 = vsel %vm623, %v991, 0.0
  %1148 = vadd.xlane.f32.xlu0 %v1147
  %v1149 = vpop.xlane.xlu0 %1148
  %v1150 = vsel %vm623, %v992, 0.0
  %1151 = vadd.xlane.f32.xlu0 %v1150
  %v1152 = vpop.xlane.xlu0 %1151
  %v1153 = vsel %vm623, %v993, 0.0
  %1154 = vadd.xlane.f32.xlu0 %v1153
  %v1155 = vpop.xlane.xlu0 %1154
  %v1156 = vsel %vm623, %v994, 0.0
  %1157 = vadd.xlane.f32.xlu0 %v1156
  %v1158 = vpop.xlane.xlu0 %1157
  %v1159 = vsel %vm623, %v995, 0.0
  %1160 = vadd.xlane.f32.xlu0 %v1159
  %v1161 = vpop.xlane.xlu0 %1160
  %v1162 = vsel %vm623, %v996, 0.0
  %1163 = vadd.xlane.f32.xlu0 %v1162
  %v1164 = vpop.xlane.xlu0 %1163
  %v1165 = vsel %vm623, %v997, 0.0
  %1166 = vadd.xlane.f32.xlu0 %v1165
  %v1167 = vpop.xlane.xlu0 %1166
  %v1168 = vsel %vm623, %v998, 0.0
  %1169 = vadd.xlane.f32.xlu0 %v1168
  %v1170 = vpop.xlane.xlu0 %1169
  %v1171 = vsel %vm623, %v999, 0.0
  %1172 = vadd.xlane.f32.xlu0 %v1171
  %v1173 = vpop.xlane.xlu0 %1172
  %v1174 = vsel %vm623, %v1000, 0.0
  %1175 = vadd.xlane.f32.xlu0 %v1174
  %v1176 = vpop.xlane.xlu0 %1175
  %v1177 = vsel %vm623, %v1001, 0.0
  %1178 = vadd.xlane.f32.xlu0 %v1177
  %v1179 = vpop.xlane.xlu0 %1178
  %v1180 = vsel %vm623, %v1002, 0.0
  %1181 = vadd.xlane.f32.xlu0 %v1180
  %v1182 = vpop.xlane.xlu0 %1181
  %v1183 = vsel %vm623, %v1003, 0.0
  %1184 = vadd.xlane.f32.xlu0 %v1183
  %v1185 = vpop.xlane.xlu0 %1184
  %v1186 = vsel %vm623, %v1004, 0.0
  %1187 = vadd.xlane.f32.xlu0 %v1186
  %v1188 = vpop.xlane.xlu0 %1187
  %v1189 = vsel %vm623, %v1005, 0.0
  %1190 = vadd.xlane.f32.xlu0 %v1189
  %v1191 = vpop.xlane.xlu0 %1190
  %v1192 = vsel %vm623, %v1006, 0.0
  %1193 = vadd.xlane.f32.xlu0 %v1192
  %v1194 = vpop.xlane.xlu0 %1193
  %v1195 = vsel %vm623, %v1007, 0.0
  %1196 = vadd.xlane.f32.xlu0 %v1195
  %v1197 = vpop.xlane.xlu0 %1196
  %v1198 = vsel %vm623, %v1008, 0.0
  %1199 = vadd.xlane.f32.xlu0 %v1198
  %v1200 = vpop.xlane.xlu0 %1199
  %v1201 = vmul.f32 %v1011, %v816
  %v1202 = vmul.f32 %v1014, %v816
  %v1203 = vmul.f32 %v1017, %v816
  %v1204 = vmul.f32 %v1020, %v816
  %v1205 = vmul.f32 %v1023, %v816
  %v1206 = vmul.f32 %v1026, %v816
  %v1207 = vmul.f32 %v1029, %v816
  %v1208 = vmul.f32 %v1032, %v816
  %v1209 = vmul.f32 %v1035, %v816
  %v1210 = vmul.f32 %v1038, %v816
  %v1211 = vmul.f32 %v1041, %v816
  %v1212 = vmul.f32 %v1044, %v816
  %v1213 = vmul.f32 %v1047, %v816
  %v1214 = vmul.f32 %v1050, %v816
  %v1215 = vmul.f32 %v1053, %v816
  %v1216 = vmul.f32 %v1056, %v816
  %v1217 = vmul.f32 %v1059, %v816
  %v1218 = vmul.f32 %v1062, %v816
  %v1219 = vmul.f32 %v1065, %v816
  %v1220 = vmul.f32 %v1068, %v816
  %v1221 = vmul.f32 %v1071, %v816
  %v1222 = vmul.f32 %v1074, %v816
  %v1223 = vmul.f32 %v1077, %v816
  %v1224 = vmul.f32 %v1080, %v816
  %v1225 = vmul.f32 %v1083, %v816
  %v1226 = vmul.f32 %v1086, %v816
  %v1227 = vmul.f32 %v1089, %v816
  %v1228 = vmul.f32 %v1092, %v816
  %v1229 = vmul.f32 %v1095, %v816
  %v1230 = vmul.f32 %v1098, %v816
  %v1231 = vmul.f32 %v1101, %v816
  %v1232 = vmul.f32 %v1104, %v816
  %v1233 = vmul.f32 %v1107, %v816
  %v1234 = vmul.f32 %v1110, %v816
  %v1235 = vmul.f32 %v1113, %v816
  %v1236 = vmul.f32 %v1116, %v816
  %v1237 = vmul.f32 %v1119, %v816
  %v1238 = vmul.f32 %v1122, %v816
  %v1239 = vmul.f32 %v1125, %v816
  %v1240 = vmul.f32 %v1128, %v816
  %v1241 = vmul.f32 %v1131, %v816
  %v1242 = vmul.f32 %v1134, %v816
  %v1243 = vmul.f32 %v1137, %v816
  %v1244 = vmul.f32 %v1140, %v816
  %v1245 = vmul.f32 %v1143, %v816
  %v1246 = vmul.f32 %v1146, %v816
  %v1247 = vmul.f32 %v1149, %v816
  %v1248 = vmul.f32 %v1152, %v816
  %v1249 = vmul.f32 %v1155, %v816
  %v1250 = vmul.f32 %v1158, %v816
  %v1251 = vmul.f32 %v1161, %v816
  %v1252 = vmul.f32 %v1164, %v816
  %v1253 = vmul.f32 %v1167, %v816
  %v1254 = vmul.f32 %v1170, %v816
  %v1255 = vmul.f32 %v1173, %v816
  %v1256 = vmul.f32 %v1176, %v816
  %v1257 = vmul.f32 %v1179, %v816
  %v1258 = vmul.f32 %v1182, %v816
  %v1259 = vmul.f32 %v1185, %v816
  %v1260 = vmul.f32 %v1188, %v816
  %v1261 = vmul.f32 %v1191, %v816
  %v1262 = vmul.f32 %v1194, %v816
  %v1263 = vmul.f32 %v1197, %v816
  %v1264 = vmul.f32 %v1200, %v816
  %v1265 = vadd.f32 %v1201, 1e-05
  %v1266 = vadd.f32 %v1202, 1e-05
  %v1267 = vadd.f32 %v1203, 1e-05
  %v1268 = vadd.f32 %v1204, 1e-05
  %v1269 = vadd.f32 %v1205, 1e-05
  %v1270 = vadd.f32 %v1206, 1e-05
  %v1271 = vadd.f32 %v1207, 1e-05
  %v1272 = vadd.f32 %v1208, 1e-05
  %v1273 = vadd.f32 %v1209, 1e-05
  %v1274 = vadd.f32 %v1210, 1e-05
  %v1275 = vadd.f32 %v1211, 1e-05
  %v1276 = vadd.f32 %v1212, 1e-05
  %v1277 = vadd.f32 %v1213, 1e-05
  %v1278 = vadd.f32 %v1214, 1e-05
  %v1279 = vadd.f32 %v1215, 1e-05
  %v1280 = vadd.f32 %v1216, 1e-05
  %v1281 = vadd.f32 %v1217, 1e-05
  %v1282 = vadd.f32 %v1218, 1e-05
  %v1283 = vadd.f32 %v1219, 1e-05
  %v1284 = vadd.f32 %v1220, 1e-05
  %v1285 = vadd.f32 %v1221, 1e-05
  %v1286 = vadd.f32 %v1222, 1e-05
  %v1287 = vadd.f32 %v1223, 1e-05
  %v1288 = vadd.f32 %v1224, 1e-05
  %v1289 = vadd.f32 %v1225, 1e-05
  %v1290 = vadd.f32 %v1226, 1e-05
  %v1291 = vadd.f32 %v1227, 1e-05
  %v1292 = vadd.f32 %v1228, 1e-05
  %v1293 = vadd.f32 %v1229, 1e-05
  %v1294 = vadd.f32 %v1230, 1e-05
  %v1295 = vadd.f32 %v1231, 1e-05
  %v1296 = vadd.f32 %v1232, 1e-05
  %v1297 = vadd.f32 %v1233, 1e-05
  %v1298 = vadd.f32 %v1234, 1e-05
  %v1299 = vadd.f32 %v1235, 1e-05
  %v1300 = vadd.f32 %v1236, 1e-05
  %v1301 = vadd.f32 %v1237, 1e-05
  %v1302 = vadd.f32 %v1238, 1e-05
  %v1303 = vadd.f32 %v1239, 1e-05
  %v1304 = vadd.f32 %v1240, 1e-05
  %v1305 = vadd.f32 %v1241, 1e-05
  %v1306 = vadd.f32 %v1242, 1e-05
  %v1307 = vadd.f32 %v1243, 1e-05
  %v1308 = vadd.f32 %v1244, 1e-05
  %v1309 = vadd.f32 %v1245, 1e-05
  %v1310 = vadd.f32 %v1246, 1e-05
  %v1311 = vadd.f32 %v1247, 1e-05
  %v1312 = vadd.f32 %v1248, 1e-05
  %v1313 = vadd.f32 %v1249, 1e-05
  %v1314 = vadd.f32 %v1250, 1e-05
  %v1315 = vadd.f32 %v1251, 1e-05
  %v1316 = vadd.f32 %v1252, 1e-05
  %v1317 = vadd.f32 %v1253, 1e-05
  %v1318 = vadd.f32 %v1254, 1e-05
  %v1319 = vadd.f32 %v1255, 1e-05
  %v1320 = vadd.f32 %v1256, 1e-05
  %v1321 = vadd.f32 %v1257, 1e-05
  %v1322 = vadd.f32 %v1258, 1e-05
  %v1323 = vadd.f32 %v1259, 1e-05
  %v1324 = vadd.f32 %v1260, 1e-05
  %v1325 = vadd.f32 %v1261, 1e-05
  %v1326 = vadd.f32 %v1262, 1e-05
  %v1327 = vadd.f32 %v1263, 1e-05
  %v1328 = vadd.f32 %v1264, 1e-05
  %v1329 = vrsqrt.pop %v1265
  %v1330 = vrsqrt.pop %v1266
  %v1331 = vrsqrt.pop %v1267
  %v1332 = vrsqrt.pop %v1268
  %v1333 = vrsqrt.pop %v1269
  %v1334 = vrsqrt.pop %v1270
  %v1335 = vrsqrt.pop %v1271
  %v1336 = vrsqrt.pop %v1272
  %v1337 = vrsqrt.pop %v1273
  %v1338 = vrsqrt.pop %v1274
  %v1339 = vrsqrt.pop %v1275
  %v1340 = vrsqrt.pop %v1276
  %v1341 = vrsqrt.pop %v1277
  %v1342 = vrsqrt.pop %v1278
  %v1343 = vrsqrt.pop %v1279
  %v1344 = vrsqrt.pop %v1280
  %v1345 = vrsqrt.pop %v1281
  %v1346 = vrsqrt.pop %v1282
  %v1347 = vrsqrt.pop %v1283
  %v1348 = vrsqrt.pop %v1284
  %v1349 = vrsqrt.pop %v1285
  %v1350 = vrsqrt.pop %v1286
  %v1351 = vrsqrt.pop %v1287
  %v1352 = vrsqrt.pop %v1288
  %v1353 = vrsqrt.pop %v1289
  %v1354 = vrsqrt.pop %v1290
  %v1355 = vrsqrt.pop %v1291
  %v1356 = vrsqrt.pop %v1292
  %v1357 = vrsqrt.pop %v1293
  %v1358 = vrsqrt.pop %v1294
  %v1359 = vrsqrt.pop %v1295
  %v1360 = vrsqrt.pop %v1296
  %v1361 = vrsqrt.pop %v1297
  %v1362 = vrsqrt.pop %v1298
  %v1363 = vrsqrt.pop %v1299
  %v1364 = vrsqrt.pop %v1300
  %v1365 = vrsqrt.pop %v1301
  %v1366 = vrsqrt.pop %v1302
  %v1367 = vrsqrt.pop %v1303
  %v1368 = vrsqrt.pop %v1304
  %v1369 = vrsqrt.pop %v1305
  %v1370 = vrsqrt.pop %v1306
  %v1371 = vrsqrt.pop %v1307
  %v1372 = vrsqrt.pop %v1308
  %v1373 = vrsqrt.pop %v1309
  %v1374 = vrsqrt.pop %v1310
  %v1375 = vrsqrt.pop %v1311
  %v1376 = vrsqrt.pop %v1312
  %v1377 = vrsqrt.pop %v1313
  %v1378 = vrsqrt.pop %v1314
  %v1379 = vrsqrt.pop %v1315
  %v1380 = vrsqrt.pop %v1316
  %v1381 = vrsqrt.pop %v1317
  %v1382 = vrsqrt.pop %v1318
  %v1383 = vrsqrt.pop %v1319
  %v1384 = vrsqrt.pop %v1320
  %v1385 = vrsqrt.pop %v1321
  %v1386 = vrsqrt.pop %v1322
  %v1387 = vrsqrt.pop %v1323
  %v1388 = vrsqrt.pop %v1324
  %v1389 = vrsqrt.pop %v1325
  %v1390 = vrsqrt.pop %v1326
  %v1391 = vrsqrt.pop %v1327
  %v1392 = vrsqrt.pop %v1328
  %v1393 = vmul.f32 %v881, %v1329
  %v1394 = vmul.f32 %v882, %v1330
  %v1395 = vmul.f32 %v883, %v1331
  %v1396 = vmul.f32 %v884, %v1332
  %v1397 = vmul.f32 %v885, %v1333
  %v1398 = vmul.f32 %v886, %v1334
  %v1399 = vmul.f32 %v887, %v1335
  %v1400 = vmul.f32 %v888, %v1336
  %v1401 = vmul.f32 %v889, %v1337
  %v1402 = vmul.f32 %v890, %v1338
  %v1403 = vmul.f32 %v891, %v1339
  %v1404 = vmul.f32 %v892, %v1340
  %v1405 = vmul.f32 %v893, %v1341
  %v1406 = vmul.f32 %v894, %v1342
  %v1407 = vmul.f32 %v895, %v1343
  %v1408 = vmul.f32 %v896, %v1344
  %v1409 = vmul.f32 %v897, %v1345
  %v1410 = vmul.f32 %v898, %v1346
  %v1411 = vmul.f32 %v899, %v1347
  %v1412 = vmul.f32 %v900, %v1348
  %v1413 = vmul.f32 %v901, %v1349
  %v1414 = vmul.f32 %v902, %v1350
  %v1415 = vmul.f32 %v903, %v1351
  %v1416 = vmul.f32 %v904, %v1352
  %v1417 = vmul.f32 %v905, %v1353
  %v1418 = vmul.f32 %v906, %v1354
  %v1419 = vmul.f32 %v907, %v1355
  %v1420 = vmul.f32 %v908, %v1356
  %v1421 = vmul.f32 %v909, %v1357
  %v1422 = vmul.f32 %v910, %v1358
  %v1423 = vmul.f32 %v911, %v1359
  %v1424 = vmul.f32 %v912, %v1360
  %v1425 = vmul.f32 %v913, %v1361
  %v1426 = vmul.f32 %v914, %v1362
  %v1427 = vmul.f32 %v915, %v1363
  %v1428 = vmul.f32 %v916, %v1364
  %v1429 = vmul.f32 %v917, %v1365
  %v1430 = vmul.f32 %v918, %v1366
  %v1431 = vmul.f32 %v919, %v1367
  %v1432 = vmul.f32 %v920, %v1368
  %v1433 = vmul.f32 %v921, %v1369
  %v1434 = vmul.f32 %v922, %v1370
  %v1435 = vmul.f32 %v923, %v1371
  %v1436 = vmul.f32 %v924, %v1372
  %v1437 = vmul.f32 %v925, %v1373
  %v1438 = vmul.f32 %v926, %v1374
  %v1439 = vmul.f32 %v927, %v1375
  %v1440 = vmul.f32 %v928, %v1376
  %v1441 = vmul.f32 %v929, %v1377
  %v1442 = vmul.f32 %v930, %v1378
  %v1443 = vmul.f32 %v931, %v1379
  %v1444 = vmul.f32 %v932, %v1380
  %v1445 = vmul.f32 %v933, %v1381
  %v1446 = vmul.f32 %v934, %v1382
  %v1447 = vmul.f32 %v935, %v1383
  %v1448 = vmul.f32 %v936, %v1384
  %v1449 = vmul.f32 %v937, %v1385
  %v1450 = vmul.f32 %v938, %v1386
  %v1451 = vmul.f32 %v939, %v1387
  %v1452 = vmul.f32 %v940, %v1388
  %v1453 = vmul.f32 %v941, %v1389
  %v1454 = vmul.f32 %v942, %v1390
  %v1455 = vmul.f32 %v943, %v1391
  %v1456 = vmul.f32 %v944, %v1392
  %v1458 = vlaneseq
  %v1459 = vshrl.u32 %v1458, 7
  %v1460 = vsub.s32 0, %v1459
  %v1461 = vrot.slane %v621, %v1460
  %v1463 = vmul.f32 %v1393, %v1461
  %v1464 = vmul.f32 %v1394, %v1461
  %v1465 = vmul.f32 %v1395, %v1461
  %v1466 = vmul.f32 %v1396, %v1461
  %v1467 = vmul.f32 %v1397, %v1461
  %v1468 = vmul.f32 %v1398, %v1461
  %v1469 = vmul.f32 %v1399, %v1461
  %v1470 = vmul.f32 %v1400, %v1461
  %v1471 = vmul.f32 %v1401, %v1461
  %v1472 = vmul.f32 %v1402, %v1461
  %v1473 = vmul.f32 %v1403, %v1461
  %v1474 = vmul.f32 %v1404, %v1461
  %v1475 = vmul.f32 %v1405, %v1461
  %v1476 = vmul.f32 %v1406, %v1461
  %v1477 = vmul.f32 %v1407, %v1461
  %v1478 = vmul.f32 %v1408, %v1461
  %v1479 = vmul.f32 %v1409, %v1461
  %v1480 = vmul.f32 %v1410, %v1461
  %v1481 = vmul.f32 %v1411, %v1461
  %v1482 = vmul.f32 %v1412, %v1461
  %v1483 = vmul.f32 %v1413, %v1461
  %v1484 = vmul.f32 %v1414, %v1461
  %v1485 = vmul.f32 %v1415, %v1461
  %v1486 = vmul.f32 %v1416, %v1461
  %v1487 = vmul.f32 %v1417, %v1461
  %v1488 = vmul.f32 %v1418, %v1461
  %v1489 = vmul.f32 %v1419, %v1461
  %v1490 = vmul.f32 %v1420, %v1461
  %v1491 = vmul.f32 %v1421, %v1461
  %v1492 = vmul.f32 %v1422, %v1461
  %v1493 = vmul.f32 %v1423, %v1461
  %v1494 = vmul.f32 %v1424, %v1461
  %v1495 = vmul.f32 %v1425, %v1461
  %v1496 = vmul.f32 %v1426, %v1461
  %v1497 = vmul.f32 %v1427, %v1461
  %v1498 = vmul.f32 %v1428, %v1461
  %v1499 = vmul.f32 %v1429, %v1461
  %v1500 = vmul.f32 %v1430, %v1461
  %v1501 = vmul.f32 %v1431, %v1461
  %v1502 = vmul.f32 %v1432, %v1461
  %v1503 = vmul.f32 %v1433, %v1461
  %v1504 = vmul.f32 %v1434, %v1461
  %v1505 = vmul.f32 %v1435, %v1461
  %v1506 = vmul.f32 %v1436, %v1461
  %v1507 = vmul.f32 %v1437, %v1461
  %v1508 = vmul.f32 %v1438, %v1461
  %v1509 = vmul.f32 %v1439, %v1461
  %v1510 = vmul.f32 %v1440, %v1461
  %v1511 = vmul.f32 %v1441, %v1461
  %v1512 = vmul.f32 %v1442, %v1461
  %v1513 = vmul.f32 %v1443, %v1461
  %v1514 = vmul.f32 %v1444, %v1461
  %v1515 = vmul.f32 %v1445, %v1461
  %v1516 = vmul.f32 %v1446, %v1461
  %v1517 = vmul.f32 %v1447, %v1461
  %v1518 = vmul.f32 %v1448, %v1461
  %v1519 = vmul.f32 %v1449, %v1461
  %v1520 = vmul.f32 %v1450, %v1461
  %v1521 = vmul.f32 %v1451, %v1461
  %v1522 = vmul.f32 %v1452, %v1461
  %v1523 = vmul.f32 %v1453, %v1461
  %v1524 = vmul.f32 %v1454, %v1461
  %v1525 = vmul.f32 %v1455, %v1461
  %v1526 = vmul.f32 %v1456, %v1461
  %v1528 = vlaneseq
  %v1529 = vshrl.u32 %v1528, 7
  %v1530 = vsub.s32 0, %v1529
  %v1531 = vrot.slane %v622, %v1530
  %v1533 = vadd.f32 %v1463, %v1531
  %v1534 = vadd.f32 %v1464, %v1531
  %v1535 = vadd.f32 %v1465, %v1531
  %v1536 = vadd.f32 %v1466, %v1531
  %v1537 = vadd.f32 %v1467, %v1531
  %v1538 = vadd.f32 %v1468, %v1531
  %v1539 = vadd.f32 %v1469, %v1531
  %v1540 = vadd.f32 %v1470, %v1531
  %v1541 = vadd.f32 %v1471, %v1531
  %v1542 = vadd.f32 %v1472, %v1531
  %v1543 = vadd.f32 %v1473, %v1531
  %v1544 = vadd.f32 %v1474, %v1531
  %v1545 = vadd.f32 %v1475, %v1531
  %v1546 = vadd.f32 %v1476, %v1531
  %v1547 = vadd.f32 %v1477, %v1531
  %v1548 = vadd.f32 %v1478, %v1531
  %v1549 = vadd.f32 %v1479, %v1531
  %v1550 = vadd.f32 %v1480, %v1531
  %v1551 = vadd.f32 %v1481, %v1531
  %v1552 = vadd.f32 %v1482, %v1531
  %v1553 = vadd.f32 %v1483, %v1531
  %v1554 = vadd.f32 %v1484, %v1531
  %v1555 = vadd.f32 %v1485, %v1531
  %v1556 = vadd.f32 %v1486, %v1531
  %v1557 = vadd.f32 %v1487, %v1531
  %v1558 = vadd.f32 %v1488, %v1531
  %v1559 = vadd.f32 %v1489, %v1531
  %v1560 = vadd.f32 %v1490, %v1531
  %v1561 = vadd.f32 %v1491, %v1531
  %v1562 = vadd.f32 %v1492, %v1531
  %v1563 = vadd.f32 %v1493, %v1531
  %v1564 = vadd.f32 %v1494, %v1531
  %v1565 = vadd.f32 %v1495, %v1531
  %v1566 = vadd.f32 %v1496, %v1531
  %v1567 = vadd.f32 %v1497, %v1531
  %v1568 = vadd.f32 %v1498, %v1531
  %v1569 = vadd.f32 %v1499, %v1531
  %v1570 = vadd.f32 %v1500, %v1531
  %v1571 = vadd.f32 %v1501, %v1531
  %v1572 = vadd.f32 %v1502, %v1531
  %v1573 = vadd.f32 %v1503, %v1531
  %v1574 = vadd.f32 %v1504, %v1531
  %v1575 = vadd.f32 %v1505, %v1531
  %v1576 = vadd.f32 %v1506, %v1531
  %v1577 = vadd.f32 %v1507, %v1531
  %v1578 = vadd.f32 %v1508, %v1531
  %v1579 = vadd.f32 %v1509, %v1531
  %v1580 = vadd.f32 %v1510, %v1531
  %v1581 = vadd.f32 %v1511, %v1531
  %v1582 = vadd.f32 %v1512, %v1531
  %v1583 = vadd.f32 %v1513, %v1531
  %v1584 = vadd.f32 %v1514, %v1531
  %v1585 = vadd.f32 %v1515, %v1531
  %v1586 = vadd.f32 %v1516, %v1531
  %v1587 = vadd.f32 %v1517, %v1531
  %v1588 = vadd.f32 %v1518, %v1531
  %v1589 = vadd.f32 %v1519, %v1531
  %v1590 = vadd.f32 %v1520, %v1531
  %v1591 = vadd.f32 %v1521, %v1531
  %v1592 = vadd.f32 %v1522, %v1531
  %v1593 = vadd.f32 %v1523, %v1531
  %v1594 = vadd.f32 %v1524, %v1531
  %v1595 = vadd.f32 %v1525, %v1531
  %v1596 = vadd.f32 %v1526, %v1531
  %v1597 = vmul.f32 %v1533, 0.5
  %v1598 = vmul.f32 %v1534, 0.5
  %v1599 = vmul.f32 %v1535, 0.5
  %v1600 = vmul.f32 %v1536, 0.5
  %v1601 = vmul.f32 %v1537, 0.5
  %v1602 = vmul.f32 %v1538, 0.5
  %v1603 = vmul.f32 %v1539, 0.5
  %v1604 = vmul.f32 %v1540, 0.5
  %v1605 = vmul.f32 %v1541, 0.5
  %v1606 = vmul.f32 %v1542, 0.5
  %v1607 = vmul.f32 %v1543, 0.5
  %v1608 = vmul.f32 %v1544, 0.5
  %v1609 = vmul.f32 %v1545, 0.5
  %v1610 = vmul.f32 %v1546, 0.5
  %v1611 = vmul.f32 %v1547, 0.5
  %v1612 = vmul.f32 %v1548, 0.5
  %v1613 = vmul.f32 %v1549, 0.5
  %v1614 = vmul.f32 %v1550, 0.5
  %v1615 = vmul.f32 %v1551, 0.5
  %v1616 = vmul.f32 %v1552, 0.5
  %v1617 = vmul.f32 %v1553, 0.5
  %v1618 = vmul.f32 %v1554, 0.5
  %v1619 = vmul.f32 %v1555, 0.5
  %v1620 = vmul.f32 %v1556, 0.5
  %v1621 = vmul.f32 %v1557, 0.5
  %v1622 = vmul.f32 %v1558, 0.5
  %v1623 = vmul.f32 %v1559, 0.5
  %v1624 = vmul.f32 %v1560, 0.5
  %v1625 = vmul.f32 %v1561, 0.5
  %v1626 = vmul.f32 %v1562, 0.5
  %v1627 = vmul.f32 %v1563, 0.5
  %v1628 = vmul.f32 %v1564, 0.5
  %v1629 = vmul.f32 %v1565, 0.5
  %v1630 = vmul.f32 %v1566, 0.5
  %v1631 = vmul.f32 %v1567, 0.5
  %v1632 = vmul.f32 %v1568, 0.5
  %v1633 = vmul.f32 %v1569, 0.5
  %v1634 = vmul.f32 %v1570, 0.5
  %v1635 = vmul.f32 %v1571, 0.5
  %v1636 = vmul.f32 %v1572, 0.5
  %v1637 = vmul.f32 %v1573, 0.5
  %v1638 = vmul.f32 %v1574, 0.5
  %v1639 = vmul.f32 %v1575, 0.5
  %v1640 = vmul.f32 %v1576, 0.5
  %v1641 = vmul.f32 %v1577, 0.5
  %v1642 = vmul.f32 %v1578, 0.5
  %v1643 = vmul.f32 %v1579, 0.5
  %v1644 = vmul.f32 %v1580, 0.5
  %v1645 = vmul.f32 %v1581, 0.5
  %v1646 = vmul.f32 %v1582, 0.5
  %v1647 = vmul.f32 %v1583, 0.5
  %v1648 = vmul.f32 %v1584, 0.5
  %v1649 = vmul.f32 %v1585, 0.5
  %v1650 = vmul.f32 %v1586, 0.5
  %v1651 = vmul.f32 %v1587, 0.5
  %v1652 = vmul.f32 %v1588, 0.5
  %v1653 = vmul.f32 %v1589, 0.5
  %v1654 = vmul.f32 %v1590, 0.5
  %v1655 = vmul.f32 %v1591, 0.5
  %v1656 = vmul.f32 %v1592, 0.5
  %v1657 = vmul.f32 %v1593, 0.5
  %v1658 = vmul.f32 %v1594, 0.5
  %v1659 = vmul.f32 %v1595, 0.5
  %v1660 = vmul.f32 %v1596, 0.5
  %v1661 = vmul.f32 %v1533, 0.70710677
  %v1662 = vmul.f32 %v1534, 0.70710677
  %v1663 = vmul.f32 %v1535, 0.70710677
  %v1664 = vmul.f32 %v1536, 0.70710677
  %v1665 = vmul.f32 %v1537, 0.70710677
  %v1666 = vmul.f32 %v1538, 0.70710677
  %v1667 = vmul.f32 %v1539, 0.70710677
  %v1668 = vmul.f32 %v1540, 0.70710677
  %v1669 = vmul.f32 %v1541, 0.70710677
  %v1670 = vmul.f32 %v1542, 0.70710677
  %v1671 = vmul.f32 %v1543, 0.70710677
  %v1672 = vmul.f32 %v1544, 0.70710677
  %v1673 = vmul.f32 %v1545, 0.70710677
  %v1674 = vmul.f32 %v1546, 0.70710677
  %v1675 = vmul.f32 %v1547, 0.70710677
  %v1676 = vmul.f32 %v1548, 0.70710677
  %v1677 = vmul.f32 %v1549, 0.70710677
  %v1678 = vmul.f32 %v1550, 0.70710677
  %v1679 = vmul.f32 %v1551, 0.70710677
  %v1680 = vmul.f32 %v1552, 0.70710677
  %v1681 = vmul.f32 %v1553, 0.70710677
  %v1682 = vmul.f32 %v1554, 0.70710677
  %v1683 = vmul.f32 %v1555, 0.70710677
  %v1684 = vmul.f32 %v1556, 0.70710677
  %v1685 = vmul.f32 %v1557, 0.70710677
  %v1686 = vmul.f32 %v1558, 0.70710677
  %v1687 = vmul.f32 %v1559, 0.70710677
  %v1688 = vmul.f32 %v1560, 0.70710677
  %v1689 = vmul.f32 %v1561, 0.70710677
  %v1690 = vmul.f32 %v1562, 0.70710677
  %v1691 = vmul.f32 %v1563, 0.70710677
  %v1692 = vmul.f32 %v1564, 0.70710677
  %v1693 = vmul.f32 %v1565, 0.70710677
  %v1694 = vmul.f32 %v1566, 0.70710677
  %v1695 = vmul.f32 %v1567, 0.70710677
  %v1696 = vmul.f32 %v1568, 0.70710677
  %v1697 = vmul.f32 %v1569, 0.70710677
  %v1698 = vmul.f32 %v1570, 0.70710677
  %v1699 = vmul.f32 %v1571, 0.70710677
  %v1700 = vmul.f32 %v1572, 0.70710677
  %v1701 = vmul.f32 %v1573, 0.70710677
  %v1702 = vmul.f32 %v1574, 0.70710677
  %v1703 = vmul.f32 %v1575, 0.70710677
  %v1704 = vmul.f32 %v1576, 0.70710677
  %v1705 = vmul.f32 %v1577, 0.70710677
  %v1706 = vmul.f32 %v1578, 0.70710677
  %v1707 = vmul.f32 %v1579, 0.70710677
  %v1708 = vmul.f32 %v1580, 0.70710677
  %v1709 = vmul.f32 %v1581, 0.70710677
  %v1710 = vmul.f32 %v1582, 0.70710677
  %v1711 = vmul.f32 %v1583, 0.70710677
  %v1712 = vmul.f32 %v1584, 0.70710677
  %v1713 = vmul.f32 %v1585, 0.70710677
  %v1714 = vmul.f32 %v1586, 0.70710677
  %v1715 = vmul.f32 %v1587, 0.70710677
  %v1716 = vmul.f32 %v1588, 0.70710677
  %v1717 = vmul.f32 %v1589, 0.70710677
  %v1718 = vmul.f32 %v1590, 0.70710677
  %v1719 = vmul.f32 %v1591, 0.70710677
  %v1720 = vmul.f32 %v1592, 0.70710677
  %v1721 = vmul.f32 %v1593, 0.70710677
  %v1722 = vmul.f32 %v1594, 0.70710677
  %v1723 = vmul.f32 %v1595, 0.70710677
  %v1724 = vmul.f32 %v1596, 0.70710677
  %v1725 = verf.f32.pop %v1661
  %v1726 = verf.f32.pop %v1662
  %v1727 = verf.f32.pop %v1663
  %v1728 = verf.f32.pop %v1664
  %v1729 = verf.f32.pop %v1665
  %v1730 = verf.f32.pop %v1666
  %v1731 = verf.f32.pop %v1667
  %v1732 = verf.f32.pop %v1668
  %v1733 = verf.f32.pop %v1669
  %v1734 = verf.f32.pop %v1670
  %v1735 = verf.f32.pop %v1671
  %v1736 = verf.f32.pop %v1672
  %v1737 = verf.f32.pop %v1673
  %v1738 = verf.f32.pop %v1674
  %v1739 = verf.f32.pop %v1675
  %v1740 = verf.f32.pop %v1676
  %v1741 = verf.f32.pop %v1677
  %v1742 = verf.f32.pop %v1678
  %v1743 = verf.f32.pop %v1679
  %v1744 = verf.f32.pop %v1680
  %v1745 = verf.f32.pop %v1681
  %v1746 = verf.f32.pop %v1682
  %v1747 = verf.f32.pop %v1683
  %v1748 = verf.f32.pop %v1684
  %v1749 = verf.f32.pop %v1685
  %v1750 = verf.f32.pop %v1686
  %v1751 = verf.f32.pop %v1687
  %v1752 = verf.f32.pop %v1688
  %v1753 = verf.f32.pop %v1689
  %v1754 = verf.f32.pop %v1690
  %v1755 = verf.f32.pop %v1691
  %v1756 = verf.f32.pop %v1692
  %v1757 = verf.f32.pop %v1693
  %v1758 = verf.f32.pop %v1694
  %v1759 = verf.f32.pop %v1695
  %v1760 = verf.f32.pop %v1696
  %v1761 = verf.f32.pop %v1697
  %v1762 = verf.f32.pop %v1698
  %v1763 = verf.f32.pop %v1699
  %v1764 = verf.f32.pop %v1700
  %v1765 = verf.f32.pop %v1701
  %v1766 = verf.f32.pop %v1702
  %v1767 = verf.f32.pop %v1703
  %v1768 = verf.f32.pop %v1704
  %v1769 = verf.f32.pop %v1705
  %v1770 = verf.f32.pop %v1706
  %v1771 = verf.f32.pop %v1707
  %v1772 = verf.f32.pop %v1708
  %v1773 = verf.f32.pop %v1709
  %v1774 = verf.f32.pop %v1710
  %v1775 = verf.f32.pop %v1711
  %v1776 = verf.f32.pop %v1712
  %v1777 = verf.f32.pop %v1713
  %v1778 = verf.f32.pop %v1714
  %v1779 = verf.f32.pop %v1715
  %v1780 = verf.f32.pop %v1716
  %v1781 = verf.f32.pop %v1717
  %v1782 = verf.f32.pop %v1718
  %v1783 = verf.f32.pop %v1719
  %v1784 = verf.f32.pop %v1720
  %v1785 = verf.f32.pop %v1721
  %v1786 = verf.f32.pop %v1722
  %v1787 = verf.f32.pop %v1723
  %v1788 = verf.f32.pop %v1724
  %v1789 = vadd.f32 %v1725, 1.0
  %v1790 = vadd.f32 %v1726, 1.0
  %v1791 = vadd.f32 %v1727, 1.0
  %v1792 = vadd.f32 %v1728, 1.0
  %v1793 = vadd.f32 %v1729, 1.0
  %v1794 = vadd.f32 %v1730, 1.0
  %v1795 = vadd.f32 %v1731, 1.0
  %v1796 = vadd.f32 %v1732, 1.0
  %v1797 = vadd.f32 %v1733, 1.0
  %v1798 = vadd.f32 %v1734, 1.0
  %v1799 = vadd.f32 %v1735, 1.0
  %v1800 = vadd.f32 %v1736, 1.0
  %v1801 = vadd.f32 %v1737, 1.0
  %v1802 = vadd.f32 %v1738, 1.0
  %v1803 = vadd.f32 %v1739, 1.0
  %v1804 = vadd.f32 %v1740, 1.0
  %v1805 = vadd.f32 %v1741, 1.0
  %v1806 = vadd.f32 %v1742, 1.0
  %v1807 = vadd.f32 %v1743, 1.0
  %v1808 = vadd.f32 %v1744, 1.0
  %v1809 = vadd.f32 %v1745, 1.0
  %v1810 = vadd.f32 %v1746, 1.0
  %v1811 = vadd.f32 %v1747, 1.0
  %v1812 = vadd.f32 %v1748, 1.0
  %v1813 = vadd.f32 %v1749, 1.0
  %v1814 = vadd.f32 %v1750, 1.0
  %v1815 = vadd.f32 %v1751, 1.0
  %v1816 = vadd.f32 %v1752, 1.0
  %v1817 = vadd.f32 %v1753, 1.0
  %v1818 = vadd.f32 %v1754, 1.0
  %v1819 = vadd.f32 %v1755, 1.0
  %v1820 = vadd.f32 %v1756, 1.0
  %v1821 = vadd.f32 %v1757, 1.0
  %v1822 = vadd.f32 %v1758, 1.0
  %v1823 = vadd.f32 %v1759, 1.0
  %v1824 = vadd.f32 %v1760, 1.0
  %v1825 = vadd.f32 %v1761, 1.0
  %v1826 = vadd.f32 %v1762, 1.0
  %v1827 = vadd.f32 %v1763, 1.0
  %v1828 = vadd.f32 %v1764, 1.0
  %v1829 = vadd.f32 %v1765, 1.0
  %v1830 = vadd.f32 %v1766, 1.0
  %v1831 = vadd.f32 %v1767, 1.0
  %v1832 = vadd.f32 %v1768, 1.0
  %v1833 = vadd.f32 %v1769, 1.0
  %v1834 = vadd.f32 %v1770, 1.0
  %v1835 = vadd.f32 %v1771, 1.0
  %v1836 = vadd.f32 %v1772, 1.0
  %v1837 = vadd.f32 %v1773, 1.0
  %v1838 = vadd.f32 %v1774, 1.0
  %v1839 = vadd.f32 %v1775, 1.0
  %v1840 = vadd.f32 %v1776, 1.0
  %v1841 = vadd.f32 %v1777, 1.0
  %v1842 = vadd.f32 %v1778, 1.0
  %v1843 = vadd.f32 %v1779, 1.0
  %v1844 = vadd.f32 %v1780, 1.0
  %v1845 = vadd.f32 %v1781, 1.0
  %v1846 = vadd.f32 %v1782, 1.0
  %v1847 = vadd.f32 %v1783, 1.0
  %v1848 = vadd.f32 %v1784, 1.0
  %v1849 = vadd.f32 %v1785, 1.0
  %v1850 = vadd.f32 %v1786, 1.0
  %v1851 = vadd.f32 %v1787, 1.0
  %v1852 = vadd.f32 %v1788, 1.0
  %v1853 = vmul.f32 %v1597, %v1789
  %v1854 = vmul.f32 %v1598, %v1790
  %v1855 = vmul.f32 %v1599, %v1791
  %v1856 = vmul.f32 %v1600, %v1792
  %v1857 = vmul.f32 %v1601, %v1793
  %v1858 = vmul.f32 %v1602, %v1794
  %v1859 = vmul.f32 %v1603, %v1795
  %v1860 = vmul.f32 %v1604, %v1796
  %v1861 = vmul.f32 %v1605, %v1797
  %v1862 = vmul.f32 %v1606, %v1798
  %v1863 = vmul.f32 %v1607, %v1799
  %v1864 = vmul.f32 %v1608, %v1800
  %v1865 = vmul.f32 %v1609, %v1801
  %v1866 = vmul.f32 %v1610, %v1802
  %v1867 = vmul.f32 %v1611, %v1803
  %v1868 = vmul.f32 %v1612, %v1804
  %v1869 = vmul.f32 %v1613, %v1805
  %v1870 = vmul.f32 %v1614, %v1806
  %v1871 = vmul.f32 %v1615, %v1807
  %v1872 = vmul.f32 %v1616, %v1808
  %v1873 = vmul.f32 %v1617, %v1809
  %v1874 = vmul.f32 %v1618, %v1810
  %v1875 = vmul.f32 %v1619, %v1811
  %v1876 = vmul.f32 %v1620, %v1812
  %v1877 = vmul.f32 %v1621, %v1813
  %v1878 = vmul.f32 %v1622, %v1814
  %v1879 = vmul.f32 %v1623, %v1815
  %v1880 = vmul.f32 %v1624, %v1816
  %v1881 = vmul.f32 %v1625, %v1817
  %v1882 = vmul.f32 %v1626, %v1818
  %v1883 = vmul.f32 %v1627, %v1819
  %v1884 = vmul.f32 %v1628, %v1820
  %v1885 = vmul.f32 %v1629, %v1821
  %v1886 = vmul.f32 %v1630, %v1822
  %v1887 = vmul.f32 %v1631, %v1823
  %v1888 = vmul.f32 %v1632, %v1824
  %v1889 = vmul.f32 %v1633, %v1825
  %v1890 = vmul.f32 %v1634, %v1826
  %v1891 = vmul.f32 %v1635, %v1827
  %v1892 = vmul.f32 %v1636, %v1828
  %v1893 = vmul.f32 %v1637, %v1829
  %v1894 = vmul.f32 %v1638, %v1830
  %v1895 = vmul.f32 %v1639, %v1831
  %v1896 = vmul.f32 %v1640, %v1832
  %v1897 = vmul.f32 %v1641, %v1833
  %v1898 = vmul.f32 %v1642, %v1834
  %v1899 = vmul.f32 %v1643, %v1835
  %v1900 = vmul.f32 %v1644, %v1836
  %v1901 = vmul.f32 %v1645, %v1837
  %v1902 = vmul.f32 %v1646, %v1838
  %v1903 = vmul.f32 %v1647, %v1839
  %v1904 = vmul.f32 %v1648, %v1840
  %v1905 = vmul.f32 %v1649, %v1841
  %v1906 = vmul.f32 %v1650, %v1842
  %v1907 = vmul.f32 %v1651, %v1843
  %v1908 = vmul.f32 %v1652, %v1844
  %v1909 = vmul.f32 %v1653, %v1845
  %v1910 = vmul.f32 %v1654, %v1846
  %v1911 = vmul.f32 %v1655, %v1847
  %v1912 = vmul.f32 %v1656, %v1848
  %v1913 = vmul.f32 %v1657, %v1849
  %v1914 = vmul.f32 %v1658, %v1850
  %v1915 = vmul.f32 %v1659, %v1851
  %v1916 = vmul.f32 %v1660, %v1852
  %v1917 = vld [vmem:[%s11] sm:$0xff]
  %v1918 = vld [vmem:[%s11 + $0x8] sm:$0xff]
  %v1919 = vld [vmem:[%s11 + $0x10] sm:$0xff]
  %v1920 = vld [vmem:[%s11 + $0x18] sm:$0xff]
  %v1921 = vld [vmem:[%s11 + $0x20] sm:$0xff]
  %v1922 = vld [vmem:[%s11 + $0x28] sm:$0xff]
  %v1923 = vld [vmem:[%s11 + $0x30] sm:$0xff]
  %v1924 = vld [vmem:[%s11 + $0x38] sm:$0xff]
  %v1925 = vld [vmem:[%s11 + $0x40] sm:$0xff]
  %v1926 = vld [vmem:[%s11 + $0x48] sm:$0xff]
  %v1927 = vld [vmem:[%s11 + $0x50] sm:$0xff]
  %v1928 = vld [vmem:[%s11 + $0x58] sm:$0xff]
  %v1929 = vld [vmem:[%s11 + $0x60] sm:$0xff]
  %v1930 = vld [vmem:[%s11 + $0x68] sm:$0xff]
  %v1931 = vld [vmem:[%s11 + $0x70] sm:$0xff]
  %v1932 = vld [vmem:[%s11 + $0x78] sm:$0xff]
  %v1933 = vld [vmem:[%s11 + $0x80] sm:$0xff]
  %v1934 = vld [vmem:[%s11 + $0x88] sm:$0xff]
  %v1935 = vld [vmem:[%s11 + $0x90] sm:$0xff]
  %v1936 = vld [vmem:[%s11 + $0x98] sm:$0xff]
  %v1937 = vld [vmem:[%s11 + $0xa0] sm:$0xff]
  %v1938 = vld [vmem:[%s11 + $0xa8] sm:$0xff]
  %v1939 = vld [vmem:[%s11 + $0xb0] sm:$0xff]
  %v1940 = vld [vmem:[%s11 + $0xb8] sm:$0xff]
  %v1941 = vld [vmem:[%s11 + $0xc0] sm:$0xff]
  %v1942 = vld [vmem:[%s11 + $0xc8] sm:$0xff]
  %v1943 = vld [vmem:[%s11 + $0xd0] sm:$0xff]
  %v1944 = vld [vmem:[%s11 + $0xd8] sm:$0xff]
  %v1945 = vld [vmem:[%s11 + $0xe0] sm:$0xff]
  %v1946 = vld [vmem:[%s11 + $0xe8] sm:$0xff]
  %v1947 = vld [vmem:[%s11 + $0xf0] sm:$0xff]
  %v1948 = vld [vmem:[%s11 + $0xf8] sm:$0xff]
  %v1949 = vpack.c.bf16 %v1854, %v1853
  %v1950 = vpack.c.bf16 %v1856, %v1855
  %v1951 = vpack.c.bf16 %v1858, %v1857
  %v1952 = vpack.c.bf16 %v1860, %v1859
  %v1953 = vpack.c.bf16 %v1862, %v1861
  %v1954 = vpack.c.bf16 %v1864, %v1863
  %v1955 = vpack.c.bf16 %v1866, %v1865
  %v1956 = vpack.c.bf16 %v1868, %v1867
  %v1957 = vpack.c.bf16 %v1870, %v1869
  %v1958 = vpack.c.bf16 %v1872, %v1871
  %v1959 = vpack.c.bf16 %v1874, %v1873
  %v1960 = vpack.c.bf16 %v1876, %v1875
  %v1961 = vpack.c.bf16 %v1878, %v1877
  %v1962 = vpack.c.bf16 %v1880, %v1879
  %v1963 = vpack.c.bf16 %v1882, %v1881
  %v1964 = vpack.c.bf16 %v1884, %v1883
  %v1965 = vpack.c.bf16 %v1886, %v1885
  %v1966 = vpack.c.bf16 %v1888, %v1887
  %v1967 = vpack.c.bf16 %v1890, %v1889
  %v1968 = vpack.c.bf16 %v1892, %v1891
  %v1969 = vpack.c.bf16 %v1894, %v1893
  %v1970 = vpack.c.bf16 %v1896, %v1895
  %v1971 = vpack.c.bf16 %v1898, %v1897
  %v1972 = vpack.c.bf16 %v1900, %v1899
  %v1973 = vpack.c.bf16 %v1902, %v1901
  %v1974 = vpack.c.bf16 %v1904, %v1903
  %v1975 = vpack.c.bf16 %v1906, %v1905
  %v1976 = vpack.c.bf16 %v1908, %v1907
  %v1977 = vpack.c.bf16 %v1910, %v1909
  %v1978 = vpack.c.bf16 %v1912, %v1911
  %v1979 = vpack.c.bf16 %v1914, %v1913
  %v1980 = vpack.c.bf16 %v1916, %v1915
  %v1981 = vld [vmem:[%s3] sm:$0xff]
  %v1982 = vld [vmem:[%s3 + $0x8] sm:$0xff]
  %v1983 = vld [vmem:[%s3 + $0x10] sm:$0xff]
  %v1984 = vld [vmem:[%s3 + $0x18] sm:$0xff]
  %v1985 = vld [vmem:[%s3 + $0x20] sm:$0xff]
  %v1986 = vld [vmem:[%s3 + $0x28] sm:$0xff]
  %v1987 = vld [vmem:[%s3 + $0x30] sm:$0xff]
  %v1988 = vld [vmem:[%s3 + $0x38] sm:$0xff]
  %v1989 = vld [vmem:[%s3 + $0x40] sm:$0xff]
  %v1990 = vld [vmem:[%s3 + $0x48] sm:$0xff]
  %v1991 = vld [vmem:[%s3 + $0x50] sm:$0xff]
  %v1992 = vld [vmem:[%s3 + $0x58] sm:$0xff]
  %v1993 = vld [vmem:[%s3 + $0x60] sm:$0xff]
  %v1994 = vld [vmem:[%s3 + $0x68] sm:$0xff]
  %v1995 = vld [vmem:[%s3 + $0x70] sm:$0xff]
  %v1996 = vld [vmem:[%s3 + $0x78] sm:$0xff]
  %v1997 = vld [vmem:[%s29] sm:$0x3]
  %v1998 = vpack.c.bf16 %v1982, %v1981
  %v1999 = vpack.c.bf16 %v1984, %v1983
  %v2000 = vpack.c.bf16 %v1986, %v1985
  %v2001 = vpack.c.bf16 %v1988, %v1987
  %v2002 = vpack.c.bf16 %v1990, %v1989
  %v2003 = vpack.c.bf16 %v1992, %v1991
  %v2004 = vpack.c.bf16 %v1994, %v1993
  %v2005 = vpack.c.bf16 %v1996, %v1995
  %v2006 = vld [vmem:[%s31] sm:$0x1]
  %v2008 = vlaneseq
  %v2009 = vshrl.u32 %v2008, 7
  %v2010 = vsub.s32 0, %v2009
  %v2011 = vrot.slane %v2006, %v2010
  %vm2013 = vcmask 31744
  %v2015 = vsel %vm2013, %v1998, 0
  %v2018 = vsel %vm2013, %v1999, 0
  %v2021 = vsel %vm2013, %v2000, 0
  %v2024 = vsel %vm2013, %v2001, 0
  %v2027 = vsel %vm2013, %v2002, 0
  %v2030 = vsel %vm2013, %v2003, 0
  %v2033 = vsel %vm2013, %v2004, 0
  %v2036 = vsel %vm2013, %v2005, 0
  %vm2038 = vcmask 1041408
  %v2040 = vsel %vm2038, %v1997, 0
  %2042 = vmatprep.subr.bf16.mxu0 0
  %2043 = vmatpush1.bf16.msra.mxu0 0
  %2044 = vmatprep.subr.bf16.mxu0 0
  %2045 = vmatpush1.bf16.msra.mxu0 0
  %2046 = vmatprep.subr.bf16.mxu0 0
  %2047 = vmatpush1.bf16.msra.mxu0 0
  %2048 = vmatprep.subr.bf16.mxu0 0
  %2049 = vmatpush1.bf16.msra.mxu0 0
  %2050 = vmatprep.subr.bf16.mxu0 0
  %2051 = vmatpush1.bf16.msra.mxu0 0
  %2052 = vmatprep.subr.bf16.mxu0 0
  %2053 = vmatpush1.bf16.msra.mxu0 0
  %2054 = vmatprep.subr.bf16.mxu0 0
  %2055 = vmatpush1.bf16.msra.mxu0 0
  %2056 = vmatprep.subr.bf16.mxu0 0
  %2057 = vmatpush1.bf16.msra.mxu0 %v2040
  %2058 = vmatprep.subr.bf16.mxu0 0
  %2059 = vmatpush2.bf16.msra.mxu0 0
  %2060 = vmatprep.subr.bf16.mxu0 0
  %2061 = vmatpush2.bf16.msra.mxu0 0
  %2062 = vmatprep.subr.bf16.mxu0 0
  %2063 = vmatpush2.bf16.msra.mxu0 0
  %2064 = vmatprep.subr.bf16.mxu0 0
  %2065 = vmatpush2.bf16.msra.mxu0 0
  %2066 = vmatprep.subr.bf16.mxu0 0
  %2067 = vmatpush2.bf16.msra.mxu0 0
  %2068 = vmatprep.subr.bf16.mxu0 0
  %2069 = vmatpush2.bf16.msra.mxu0 0
  %2070 = vmatprep.subr.bf16.mxu0 0
  %2071 = vmatpush2.bf16.msra.mxu0 0
  %2072 = vmatprep.subr.bf16.mxu0 0
  %2073 = vmatpush2.bf16.msra.mxu0 0
  %2074 = vmatprep.mubr.bf16.mxu0 0
  %2075 = vmatmul.mubr.bf16.gmra.mxu0 %v2015
  %v2076 = vpop.f32.mrf.mxu0
  %v2077 = vadd.f32 %v2011, %v2076
  %v2078 = vpop.f32.mrf.mxu0
  %v2079 = vpop.f32.mrf.mxu0
  %v2080 = vadd.f32 %v2011, %v2079
  %v2081 = vpop.f32.mrf.mxu0
  %2082 = vmatprep.mubr.bf16.mxu0 0
  %2083 = vmatmul.mubr.bf16.gmra.mxu0 %v2018
  %v2084 = vpop.f32.mrf.mxu0
  %v2085 = vadd.f32 %v2011, %v2084
  %v2086 = vpop.f32.mrf.mxu0
  %v2087 = vpop.f32.mrf.mxu0
  %v2088 = vadd.f32 %v2011, %v2087
  %v2089 = vpop.f32.mrf.mxu0
  %2090 = vmatprep.mubr.bf16.mxu0 0
  %2091 = vmatmul.mubr.bf16.gmra.mxu0 %v2021
  %v2092 = vpop.f32.mrf.mxu0
  %v2093 = vadd.f32 %v2011, %v2092
  %v2094 = vpop.f32.mrf.mxu0
  %v2095 = vpop.f32.mrf.mxu0
  %v2096 = vadd.f32 %v2011, %v2095
  %v2097 = vpop.f32.mrf.mxu0
  %2098 = vmatprep.mubr.bf16.mxu0 0
  %2099 = vmatmul.mubr.bf16.gmra.mxu0 %v2024
  %v2100 = vpop.f32.mrf.mxu0
  %v2101 = vadd.f32 %v2011, %v2100
  %v2102 = vpop.f32.mrf.mxu0
  %v2103 = vpop.f32.mrf.mxu0
  %v2104 = vadd.f32 %v2011, %v2103
  %v2105 = vpop.f32.mrf.mxu0
  %2106 = vmatprep.mubr.bf16.mxu0 0
  %2107 = vmatmul.mubr.bf16.gmra.mxu0 %v2027
  %v2108 = vpop.f32.mrf.mxu0
  %v2109 = vadd.f32 %v2011, %v2108
  %v2110 = vpop.f32.mrf.mxu0
  %v2111 = vpop.f32.mrf.mxu0
  %v2112 = vadd.f32 %v2011, %v2111
  %v2113 = vpop.f32.mrf.mxu0
  %2114 = vmatprep.mubr.bf16.mxu0 0
  %2115 = vmatmul.mubr.bf16.gmra.mxu0 %v2030
  %v2116 = vpop.f32.mrf.mxu0
  %v2117 = vadd.f32 %v2011, %v2116
  %v2118 = vpop.f32.mrf.mxu0
  %v2119 = vpop.f32.mrf.mxu0
  %v2120 = vadd.f32 %v2011, %v2119
  %v2121 = vpop.f32.mrf.mxu0
  %2122 = vmatprep.mubr.bf16.mxu0 0
  %2123 = vmatmul.mubr.bf16.gmra.mxu0 %v2033
  %v2124 = vpop.f32.mrf.mxu0
  %v2125 = vadd.f32 %v2011, %v2124
  %v2126 = vpop.f32.mrf.mxu0
  %v2127 = vpop.f32.mrf.mxu0
  %v2128 = vadd.f32 %v2011, %v2127
  %v2129 = vpop.f32.mrf.mxu0
  %2130 = vmatprep.mubr.bf16.mxu0 0
  %2131 = vmatmul.mubr.bf16.gmra.mxu0 %v2036
  %v2132 = vpop.f32.mrf.mxu0
  %v2133 = vadd.f32 %v2011, %v2132
  %v2134 = vpop.f32.mrf.mxu0
  %v2135 = vpop.f32.mrf.mxu0
  %v2136 = vadd.f32 %v2011, %v2135
  %v2137 = vpop.f32.mrf.mxu0
  %2138 = vdwg.mxu0
  %v2139 = vld [vmem:[%s5] sm:$0xff]
  %v2140 = vld [vmem:[%s5 + $0x8] sm:$0xff]
  %v2141 = vld [vmem:[%s5 + $0x10] sm:$0xff]
  %v2142 = vld [vmem:[%s5 + $0x18] sm:$0xff]
  %v2143 = vld [vmem:[%s5 + $0x20] sm:$0xff]
  %v2144 = vld [vmem:[%s5 + $0x28] sm:$0xff]
  %v2145 = vld [vmem:[%s5 + $0x30] sm:$0xff]
  %v2146 = vld [vmem:[%s5 + $0x38] sm:$0xff]
  %v2147 = vld [vmem:[%s5 + $0x40] sm:$0xff]
  %v2148 = vld [vmem:[%s5 + $0x48] sm:$0xff]
  %v2149 = vld [vmem:[%s5 + $0x50] sm:$0xff]
  %v2150 = vld [vmem:[%s5 + $0x58] sm:$0xff]
  %v2151 = vld [vmem:[%s5 + $0x60] sm:$0xff]
  %v2152 = vld [vmem:[%s5 + $0x68] sm:$0xff]
  %v2153 = vld [vmem:[%s5 + $0x70] sm:$0xff]
  %v2154 = vld [vmem:[%s5 + $0x78] sm:$0xff]
  %v2155 = vld [vmem:[%s5 + $0x80] sm:$0xff]
  %v2156 = vld [vmem:[%s5 + $0x88] sm:$0xff]
  %v2157 = vld [vmem:[%s5 + $0x90] sm:$0xff]
  %v2158 = vld [vmem:[%s5 + $0x98] sm:$0xff]
  %v2159 = vld [vmem:[%s5 + $0xa0] sm:$0xff]
  %v2160 = vld [vmem:[%s5 + $0xa8] sm:$0xff]
  %v2161 = vld [vmem:[%s5 + $0xb0] sm:$0xff]
  %v2162 = vld [vmem:[%s5 + $0xb8] sm:$0xff]
  %v2163 = vld [vmem:[%s5 + $0xc0] sm:$0xff]
  %v2164 = vld [vmem:[%s5 + $0xc8] sm:$0xff]
  %v2165 = vld [vmem:[%s5 + $0xd0] sm:$0xff]
  %v2166 = vld [vmem:[%s5 + $0xd8] sm:$0xff]
  %v2167 = vld [vmem:[%s5 + $0xe0] sm:$0xff]
  %v2168 = vld [vmem:[%s5 + $0xe8] sm:$0xff]
  %v2169 = vld [vmem:[%s5 + $0xf0] sm:$0xff]
  %v2170 = vld [vmem:[%s5 + $0xf8] sm:$0xff]
  %v2171 = vld [vmem:[%s5 + $0x100] sm:$0xff]
  %v2172 = vld [vmem:[%s5 + $0x108] sm:$0xff]
  %v2173 = vld [vmem:[%s5 + $0x110] sm:$0xff]
  %v2174 = vld [vmem:[%s5 + $0x118] sm:$0xff]
  %v2175 = vld [vmem:[%s5 + $0x120] sm:$0xff]
  %v2176 = vld [vmem:[%s5 + $0x128] sm:$0xff]
  %v2177 = vld [vmem:[%s5 + $0x130] sm:$0xff]
  %v2178 = vld [vmem:[%s5 + $0x138] sm:$0xff]
  %v2179 = vld [vmem:[%s5 + $0x140] sm:$0xff]
  %v2180 = vld [vmem:[%s5 + $0x148] sm:$0xff]
  %v2181 = vld [vmem:[%s5 + $0x150] sm:$0xff]
  %v2182 = vld [vmem:[%s5 + $0x158] sm:$0xff]
  %v2183 = vld [vmem:[%s5 + $0x160] sm:$0xff]
  %v2184 = vld [vmem:[%s5 + $0x168] sm:$0xff]
  %v2185 = vld [vmem:[%s5 + $0x170] sm:$0xff]
  %v2186 = vld [vmem:[%s5 + $0x178] sm:$0xff]
  %v2187 = vld [vmem:[%s5 + $0x180] sm:$0xff]
  %v2188 = vld [vmem:[%s5 + $0x188] sm:$0xff]
  %v2189 = vld [vmem:[%s5 + $0x190] sm:$0xff]
  %v2190 = vld [vmem:[%s5 + $0x198] sm:$0xff]
  %v2191 = vld [vmem:[%s5 + $0x1a0] sm:$0xff]
  %v2192 = vld [vmem:[%s5 + $0x1a8] sm:$0xff]
  %v2193 = vld [vmem:[%s5 + $0x1b0] sm:$0xff]
  %v2194 = vld [vmem:[%s5 + $0x1b8] sm:$0xff]
  %v2195 = vld [vmem:[%s5 + $0x1c0] sm:$0xff]
  %v2196 = vld [vmem:[%s5 + $0x1c8] sm:$0xff]
  %v2197 = vld [vmem:[%s5 + $0x1d0] sm:$0xff]
  %v2198 = vld [vmem:[%s5 + $0x1d8] sm:$0xff]
  %v2199 = vld [vmem:[%s5 + $0x1e0] sm:$0xff]
  %v2200 = vld [vmem:[%s5 + $0x1e8] sm:$0xff]
  %v2201 = vld [vmem:[%s5 + $0x1f0] sm:$0xff]
  %v2202 = vld [vmem:[%s5 + $0x1f8] sm:$0xff]
  %v2203 = vld [vmem:[%s33] sm:$0x7]
  %v2204 = vpack.c.bf16 %v2140, %v2139
  %v2205 = vpack.c.bf16 %v2142, %v2141
  %v2206 = vpack.c.bf16 %v2144, %v2143
  %v2207 = vpack.c.bf16 %v2146, %v2145
  %v2208 = vpack.c.bf16 %v2148, %v2147
  %v2209 = vpack.c.bf16 %v2150, %v2149
  %v2210 = vpack.c.bf16 %v2152, %v2151
  %v2211 = vpack.c.bf16 %v2154, %v2153
  %v2212 = vpack.c.bf16 %v2156, %v2155
  %v2213 = vpack.c.bf16 %v2158, %v2157
  %v2214 = vpack.c.bf16 %v2160, %v2159
  %v2215 = vpack.c.bf16 %v2162, %v2161
  %v2216 = vpack.c.bf16 %v2164, %v2163
  %v2217 = vpack.c.bf16 %v2166, %v2165
  %v2218 = vpack.c.bf16 %v2168, %v2167
  %v2219 = vpack.c.bf16 %v2170, %v2169
  %v2220 = vpack.c.bf16 %v2172, %v2171
  %v2221 = vpack.c.bf16 %v2174, %v2173
  %v2222 = vpack.c.bf16 %v2176, %v2175
  %v2223 = vpack.c.bf16 %v2178, %v2177
  %v2224 = vpack.c.bf16 %v2180, %v2179
  %v2225 = vpack.c.bf16 %v2182, %v2181
  %v2226 = vpack.c.bf16 %v2184, %v2183
  %v2227 = vpack.c.bf16 %v2186, %v2185
  %v2228 = vpack.c.bf16 %v2188, %v2187
  %v2229 = vpack.c.bf16 %v2190, %v2189
  %v2230 = vpack.c.bf16 %v2192, %v2191
  %v2231 = vpack.c.bf16 %v2194, %v2193
  %v2232 = vpack.c.bf16 %v2196, %v2195
  %v2233 = vpack.c.bf16 %v2198, %v2197
  %v2234 = vpack.c.bf16 %v2200, %v2199
  %v2235 = vpack.c.bf16 %v2202, %v2201
  %v2236 = vld [vmem:[%s35] sm:$0x1]
  %v2238 = vlaneseq
  %v2239 = vshrl.u32 %v2238, 7
  %v2240 = vsub.s32 0, %v2239
  %v2241 = vrot.slane %v2236, %v2240
  %v2244 = vsel %vm231, %v2204, 0
  %v2247 = vsel %vm231, %v2205, 0
  %v2250 = vsel %vm231, %v2206, 0
  %v2253 = vsel %vm231, %v2207, 0
  %v2256 = vsel %vm231, %v2208, 0
  %v2259 = vsel %vm231, %v2209, 0
  %v2262 = vsel %vm231, %v2210, 0
  %v2265 = vsel %vm231, %v2211, 0
  %v2268 = vsel %vm231, %v2212, 0
  %v2271 = vsel %vm231, %v2213, 0
  %v2274 = vsel %vm231, %v2214, 0
  %v2277 = vsel %vm231, %v2215, 0
  %v2280 = vsel %vm231, %v2216, 0
  %v2283 = vsel %vm231, %v2217, 0
  %v2286 = vsel %vm231, %v2218, 0
  %v2289 = vsel %vm231, %v2219, 0
  %v2292 = vsel %vm231, %v2220, 0
  %v2295 = vsel %vm231, %v2221, 0
  %v2298 = vsel %vm231, %v2222, 0
  %v2301 = vsel %vm231, %v2223, 0
  %v2304 = vsel %vm231, %v2224, 0
  %v2307 = vsel %vm231, %v2225, 0
  %v2310 = vsel %vm231, %v2226, 0
  %v2313 = vsel %vm231, %v2227, 0
  %v2316 = vsel %vm231, %v2228, 0
  %v2319 = vsel %vm231, %v2229, 0
  %v2322 = vsel %vm231, %v2230, 0
  %v2325 = vsel %vm231, %v2231, 0
  %v2328 = vsel %vm231, %v2232, 0
  %v2331 = vsel %vm231, %v2233, 0
  %v2334 = vsel %vm231, %v2234, 0
  %v2337 = vsel %vm231, %v2235, 0
  %v2340 = vsel %vm328, %v2203, 0
  %2342 = vmatprep.subr.bf16.mxu0 0
  %2343 = vmatpush1.bf16.msra.mxu0 0
  %2344 = vmatprep.subr.bf16.mxu0 0
  %2345 = vmatpush1.bf16.msra.mxu0 0
  %2346 = vmatprep.subr.bf16.mxu0 0
  %2347 = vmatpush1.bf16.msra.mxu0 0
  %2348 = vmatprep.subr.bf16.mxu0 0
  %2349 = vmatpush1.bf16.msra.mxu0 0
  %2350 = vmatprep.subr.bf16.mxu0 0
  %2351 = vmatpush1.bf16.msra.mxu0 0
  %2352 = vmatprep.subr.bf16.mxu0 0
  %2353 = vmatpush1.bf16.msra.mxu0 0
  %2354 = vmatprep.subr.bf16.mxu0 0
  %2355 = vmatpush1.bf16.msra.mxu0 0
  %2356 = vmatprep.subr.bf16.mxu0 0
  %2357 = vmatpush1.bf16.msra.mxu0 %v2340
  %2358 = vmatprep.subr.bf16.mxu0 0
  %2359 = vmatpush2.bf16.msra.mxu0 0
  %2360 = vmatprep.subr.bf16.mxu0 0
  %2361 = vmatpush2.bf16.msra.mxu0 0
  %2362 = vmatprep.subr.bf16.mxu0 0
  %2363 = vmatpush2.bf16.msra.mxu0 0
  %2364 = vmatprep.subr.bf16.mxu0 0
  %2365 = vmatpush2.bf16.msra.mxu0 0
  %2366 = vmatprep.subr.bf16.mxu0 0
  %2367 = vmatpush2.bf16.msra.mxu0 0
  %2368 = vmatprep.subr.bf16.mxu0 0
  %2369 = vmatpush2.bf16.msra.mxu0 0
  %2370 = vmatprep.subr.bf16.mxu0 0
  %2371 = vmatpush2.bf16.msra.mxu0 0
  %2372 = vmatprep.subr.bf16.mxu0 0
  %2373 = vmatpush2.bf16.msra.mxu0 0
  %2374 = vmatprep.mubr.bf16.mxu0 0
  %2375 = vmatmul.mubr.bf16.gmra.mxu0 %v2244
  %v2376 = vpop.f32.mrf.mxu0
  %v2377 = vadd.f32 %v2241, %v2376
  %v2378 = vpop.f32.mrf.mxu0
  %v2379 = vpop.f32.mrf.mxu0
  %v2380 = vadd.f32 %v2241, %v2379
  %v2381 = vpop.f32.mrf.mxu0
  %2382 = vmatprep.mubr.bf16.mxu0 0
  %2383 = vmatmul.mubr.bf16.gmra.mxu0 %v2247
  %v2384 = vpop.f32.mrf.mxu0
  %v2385 = vadd.f32 %v2241, %v2384
  %v2386 = vpop.f32.mrf.mxu0
  %v2387 = vpop.f32.mrf.mxu0
  %v2388 = vadd.f32 %v2241, %v2387
  %v2389 = vpop.f32.mrf.mxu0
  %2390 = vmatprep.mubr.bf16.mxu0 0
  %2391 = vmatmul.mubr.bf16.gmra.mxu0 %v2250
  %v2392 = vpop.f32.mrf.mxu0
  %v2393 = vadd.f32 %v2241, %v2392
  %v2394 = vpop.f32.mrf.mxu0
  %v2395 = vpop.f32.mrf.mxu0
  %v2396 = vadd.f32 %v2241, %v2395
  %v2397 = vpop.f32.mrf.mxu0
  %2398 = vmatprep.mubr.bf16.mxu0 0
  %2399 = vmatmul.mubr.bf16.gmra.mxu0 %v2253
  %v2400 = vpop.f32.mrf.mxu0
  %v2401 = vadd.f32 %v2241, %v2400
  %v2402 = vpop.f32.mrf.mxu0
  %v2403 = vpop.f32.mrf.mxu0
  %v2404 = vadd.f32 %v2241, %v2403
  %v2405 = vpop.f32.mrf.mxu0
  %2406 = vmatprep.mubr.bf16.mxu0 0
  %2407 = vmatmul.mubr.bf16.gmra.mxu0 %v2256
  %v2408 = vpop.f32.mrf.mxu0
  %v2409 = vadd.f32 %v2241, %v2408
  %v2410 = vpop.f32.mrf.mxu0
  %v2411 = vpop.f32.mrf.mxu0
  %v2412 = vadd.f32 %v2241, %v2411
  %v2413 = vpop.f32.mrf.mxu0
  %2414 = vmatprep.mubr.bf16.mxu0 0
  %2415 = vmatmul.mubr.bf16.gmra.mxu0 %v2259
  %v2416 = vpop.f32.mrf.mxu0
  %v2417 = vadd.f32 %v2241, %v2416
  %v2418 = vpop.f32.mrf.mxu0
  %v2419 = vpop.f32.mrf.mxu0
  %v2420 = vadd.f32 %v2241, %v2419
  %v2421 = vpop.f32.mrf.mxu0
  %2422 = vmatprep.mubr.bf16.mxu0 0
  %2423 = vmatmul.mubr.bf16.gmra.mxu0 %v2262
  %v2424 = vpop.f32.mrf.mxu0
  %v2425 = vadd.f32 %v2241, %v2424
  %v2426 = vpop.f32.mrf.mxu0
  %v2427 = vpop.f32.mrf.mxu0
  %v2428 = vadd.f32 %v2241, %v2427
  %v2429 = vpop.f32.mrf.mxu0
  %2430 = vmatprep.mubr.bf16.mxu0 0
  %2431 = vmatmul.mubr.bf16.gmra.mxu0 %v2265
  %v2432 = vpop.f32.mrf.mxu0
  %v2433 = vadd.f32 %v2241, %v2432
  %v2434 = vpop.f32.mrf.mxu0
  %v2435 = vpop.f32.mrf.mxu0
  %v2436 = vadd.f32 %v2241, %v2435
  %v2437 = vpop.f32.mrf.mxu0
  %2438 = vmatprep.mubr.bf16.mxu0 0
  %2439 = vmatmul.mubr.bf16.gmra.mxu0 %v2268
  %v2440 = vpop.f32.mrf.mxu0
  %v2441 = vadd.f32 %v2241, %v2440
  %v2442 = vpop.f32.mrf.mxu0
  %v2443 = vpop.f32.mrf.mxu0
  %v2444 = vadd.f32 %v2241, %v2443
  %v2445 = vpop.f32.mrf.mxu0
  %2446 = vmatprep.mubr.bf16.mxu0 0
  %2447 = vmatmul.mubr.bf16.gmra.mxu0 %v2271
  %v2448 = vpop.f32.mrf.mxu0
  %v2449 = vadd.f32 %v2241, %v2448
  %v2450 = vpop.f32.mrf.mxu0
  %v2451 = vpop.f32.mrf.mxu0
  %v2452 = vadd.f32 %v2241, %v2451
  %v2453 = vpop.f32.mrf.mxu0
  %2454 = vmatprep.mubr.bf16.mxu0 0
  %2455 = vmatmul.mubr.bf16.gmra.mxu0 %v2274
  %v2456 = vpop.f32.mrf.mxu0
  %v2457 = vadd.f32 %v2241, %v2456
  %v2458 = vpop.f32.mrf.mxu0
  %v2459 = vpop.f32.mrf.mxu0
  %v2460 = vadd.f32 %v2241, %v2459
  %v2461 = vpop.f32.mrf.mxu0
  %2462 = vmatprep.mubr.bf16.mxu0 0
  %2463 = vmatmul.mubr.bf16.gmra.mxu0 %v2277
  %v2464 = vpop.f32.mrf.mxu0
  %v2465 = vadd.f32 %v2241, %v2464
  %v2466 = vpop.f32.mrf.mxu0
  %v2467 = vpop.f32.mrf.mxu0
  %v2468 = vadd.f32 %v2241, %v2467
  %v2469 = vpop.f32.mrf.mxu0
  %2470 = vmatprep.mubr.bf16.mxu0 0
  %2471 = vmatmul.mubr.bf16.gmra.mxu0 %v2280
  %v2472 = vpop.f32.mrf.mxu0
  %v2473 = vadd.f32 %v2241, %v2472
  %v2474 = vpop.f32.mrf.mxu0
  %v2475 = vpop.f32.mrf.mxu0
  %v2476 = vadd.f32 %v2241, %v2475
  %v2477 = vpop.f32.mrf.mxu0
  %2478 = vmatprep.mubr.bf16.mxu0 0
  %2479 = vmatmul.mubr.bf16.gmra.mxu0 %v2283
  %v2480 = vpop.f32.mrf.mxu0
  %v2481 = vadd.f32 %v2241, %v2480
  %v2482 = vpop.f32.mrf.mxu0
  %v2483 = vpop.f32.mrf.mxu0
  %v2484 = vadd.f32 %v2241, %v2483
  %v2485 = vpop.f32.mrf.mxu0
  %2486 = vmatprep.mubr.bf16.mxu0 0
  %2487 = vmatmul.mubr.bf16.gmra.mxu0 %v2286
  %v2488 = vpop.f32.mrf.mxu0
  %v2489 = vadd.f32 %v2241, %v2488
  %v2490 = vpop.f32.mrf.mxu0
  %v2491 = vpop.f32.mrf.mxu0
  %v2492 = vadd.f32 %v2241, %v2491
  %v2493 = vpop.f32.mrf.mxu0
  %2494 = vmatprep.mubr.bf16.mxu0 0
  %2495 = vmatmul.mubr.bf16.gmra.mxu0 %v2289
  %v2496 = vpop.f32.mrf.mxu0
  %v2497 = vadd.f32 %v2241, %v2496
  %v2498 = vpop.f32.mrf.mxu0
  %v2499 = vpop.f32.mrf.mxu0
  %v2500 = vadd.f32 %v2241, %v2499
  %v2501 = vpop.f32.mrf.mxu0
  %2502 = vmatprep.mubr.bf16.mxu0 0
  %2503 = vmatmul.mubr.bf16.gmra.mxu0 %v2292
  %v2504 = vpop.f32.mrf.mxu0
  %v2505 = vadd.f32 %v2241, %v2504
  %v2506 = vpop.f32.mrf.mxu0
  %v2507 = vpop.f32.mrf.mxu0
  %v2508 = vadd.f32 %v2241, %v2507
  %v2509 = vpop.f32.mrf.mxu0
  %2510 = vmatprep.mubr.bf16.mxu0 0
  %2511 = vmatmul.mubr.bf16.gmra.mxu0 %v2295
  %v2512 = vpop.f32.mrf.mxu0
  %v2513 = vadd.f32 %v2241, %v2512
  %v2514 = vpop.f32.mrf.mxu0
  %v2515 = vpop.f32.mrf.mxu0
  %v2516 = vadd.f32 %v2241, %v2515
  %v2517 = vpop.f32.mrf.mxu0
  %2518 = vmatprep.mubr.bf16.mxu0 0
  %2519 = vmatmul.mubr.bf16.gmra.mxu0 %v2298
  %v2520 = vpop.f32.mrf.mxu0
  %v2521 = vadd.f32 %v2241, %v2520
  %v2522 = vpop.f32.mrf.mxu0
  %v2523 = vpop.f32.mrf.mxu0
  %v2524 = vadd.f32 %v2241, %v2523
  %v2525 = vpop.f32.mrf.mxu0
  %2526 = vmatprep.mubr.bf16.mxu0 0
  %2527 = vmatmul.mubr.bf16.gmra.mxu0 %v2301
  %v2528 = vpop.f32.mrf.mxu0
  %v2529 = vadd.f32 %v2241, %v2528
  %v2530 = vpop.f32.mrf.mxu0
  %v2531 = vpop.f32.mrf.mxu0
  %v2532 = vadd.f32 %v2241, %v2531
  %v2533 = vpop.f32.mrf.mxu0
  %2534 = vmatprep.mubr.bf16.mxu0 0
  %2535 = vmatmul.mubr.bf16.gmra.mxu0 %v2304
  %v2536 = vpop.f32.mrf.mxu0
  %v2537 = vadd.f32 %v2241, %v2536
  %v2538 = vpop.f32.mrf.mxu0
  %v2539 = vpop.f32.mrf.mxu0
  %v2540 = vadd.f32 %v2241, %v2539
  %v2541 = vpop.f32.mrf.mxu0
  %2542 = vmatprep.mubr.bf16.mxu0 0
  %2543 = vmatmul.mubr.bf16.gmra.mxu0 %v2307
  %v2544 = vpop.f32.mrf.mxu0
  %v2545 = vadd.f32 %v2241, %v2544
  %v2546 = vpop.f32.mrf.mxu0
  %v2547 = vpop.f32.mrf.mxu0
  %v2548 = vadd.f32 %v2241, %v2547
  %v2549 = vpop.f32.mrf.mxu0
  %2550 = vmatprep.mubr.bf16.mxu0 0
  %2551 = vmatmul.mubr.bf16.gmra.mxu0 %v2310
  %v2552 = vpop.f32.mrf.mxu0
  %v2553 = vadd.f32 %v2241, %v2552
  %v2554 = vpop.f32.mrf.mxu0
  %v2555 = vpop.f32.mrf.mxu0
  %v2556 = vadd.f32 %v2241, %v2555
  %v2557 = vpop.f32.mrf.mxu0
  %2558 = vmatprep.mubr.bf16.mxu0 0
  %2559 = vmatmul.mubr.bf16.gmra.mxu0 %v2313
  %v2560 = vpop.f32.mrf.mxu0
  %v2561 = vadd.f32 %v2241, %v2560
  %v2562 = vpop.f32.mrf.mxu0
  %v2563 = vpop.f32.mrf.mxu0
  %v2564 = vadd.f32 %v2241, %v2563
  %v2565 = vpop.f32.mrf.mxu0
  %2566 = vmatprep.mubr.bf16.mxu0 0
  %2567 = vmatmul.mubr.bf16.gmra.mxu0 %v2316
  %v2568 = vpop.f32.mrf.mxu0
  %v2569 = vadd.f32 %v2241, %v2568
  %v2570 = vpop.f32.mrf.mxu0
  %v2571 = vpop.f32.mrf.mxu0
  %v2572 = vadd.f32 %v2241, %v2571
  %v2573 = vpop.f32.mrf.mxu0
  %2574 = vmatprep.mubr.bf16.mxu0 0
  %2575 = vmatmul.mubr.bf16.gmra.mxu0 %v2319
  %v2576 = vpop.f32.mrf.mxu0
  %v2577 = vadd.f32 %v2241, %v2576
  %v2578 = vpop.f32.mrf.mxu0
  %v2579 = vpop.f32.mrf.mxu0
  %v2580 = vadd.f32 %v2241, %v2579
  %v2581 = vpop.f32.mrf.mxu0
  %2582 = vmatprep.mubr.bf16.mxu0 0
  %2583 = vmatmul.mubr.bf16.gmra.mxu0 %v2322
  %v2584 = vpop.f32.mrf.mxu0
  %v2585 = vadd.f32 %v2241, %v2584
  %v2586 = vpop.f32.mrf.mxu0
  %v2587 = vpop.f32.mrf.mxu0
  %v2588 = vadd.f32 %v2241, %v2587
  %v2589 = vpop.f32.mrf.mxu0
  %2590 = vmatprep.mubr.bf16.mxu0 0
  %2591 = vmatmul.mubr.bf16.gmra.mxu0 %v2325
  %v2592 = vpop.f32.mrf.mxu0
  %v2593 = vadd.f32 %v2241, %v2592
  %v2594 = vpop.f32.mrf.mxu0
  %v2595 = vpop.f32.mrf.mxu0
  %v2596 = vadd.f32 %v2241, %v2595
  %v2597 = vpop.f32.mrf.mxu0
  %2598 = vmatprep.mubr.bf16.mxu0 0
  %2599 = vmatmul.mubr.bf16.gmra.mxu0 %v2328
  %v2600 = vpop.f32.mrf.mxu0
  %v2601 = vadd.f32 %v2241, %v2600
  %v2602 = vpop.f32.mrf.mxu0
  %v2603 = vpop.f32.mrf.mxu0
  %v2604 = vadd.f32 %v2241, %v2603
  %v2605 = vpop.f32.mrf.mxu0
  %2606 = vmatprep.mubr.bf16.mxu0 0
  %2607 = vmatmul.mubr.bf16.gmra.mxu0 %v2331
  %v2608 = vpop.f32.mrf.mxu0
  %v2609 = vadd.f32 %v2241, %v2608
  %v2610 = vpop.f32.mrf.mxu0
  %v2611 = vpop.f32.mrf.mxu0
  %v2612 = vadd.f32 %v2241, %v2611
  %v2613 = vpop.f32.mrf.mxu0
  %2614 = vmatprep.mubr.bf16.mxu0 0
  %2615 = vmatmul.mubr.bf16.gmra.mxu0 %v2334
  %v2616 = vpop.f32.mrf.mxu0
  %v2617 = vadd.f32 %v2241, %v2616
  %v2618 = vpop.f32.mrf.mxu0
  %v2619 = vpop.f32.mrf.mxu0
  %v2620 = vadd.f32 %v2241, %v2619
  %v2621 = vpop.f32.mrf.mxu0
  %2622 = vmatprep.mubr.bf16.mxu0 0
  %2623 = vmatmul.mubr.bf16.gmra.mxu0 %v2337
  %v2624 = vpop.f32.mrf.mxu0
  %v2625 = vadd.f32 %v2241, %v2624
  %v2626 = vpop.f32.mrf.mxu0
  %v2627 = vpop.f32.mrf.mxu0
  %v2628 = vadd.f32 %v2241, %v2627
  %v2629 = vpop.f32.mrf.mxu0
  %2630 = vdwg.mxu0
  %v2631 = vpack.c.bf16 %v2380, %v2377
  %v2632 = vpack.c.bf16 %v2388, %v2385
  %v2633 = vpack.c.bf16 %v2396, %v2393
  %v2634 = vpack.c.bf16 %v2404, %v2401
  %v2635 = vpack.c.bf16 %v2412, %v2409
  %v2636 = vpack.c.bf16 %v2420, %v2417
  %v2637 = vpack.c.bf16 %v2428, %v2425
  %v2638 = vpack.c.bf16 %v2436, %v2433
  %v2639 = vpack.c.bf16 %v2444, %v2441
  %v2640 = vpack.c.bf16 %v2452, %v2449
  %v2641 = vpack.c.bf16 %v2460, %v2457
  %v2642 = vpack.c.bf16 %v2468, %v2465
  %v2643 = vpack.c.bf16 %v2476, %v2473
  %v2644 = vpack.c.bf16 %v2484, %v2481
  %v2645 = vpack.c.bf16 %v2492, %v2489
  %v2646 = vpack.c.bf16 %v2500, %v2497
  %v2647 = vpack.c.bf16 %v2508, %v2505
  %v2648 = vpack.c.bf16 %v2516, %v2513
  %v2649 = vpack.c.bf16 %v2524, %v2521
  %v2650 = vpack.c.bf16 %v2532, %v2529
  %v2651 = vpack.c.bf16 %v2540, %v2537
  %v2652 = vpack.c.bf16 %v2548, %v2545
  %v2653 = vpack.c.bf16 %v2556, %v2553
  %v2654 = vpack.c.bf16 %v2564, %v2561
  %v2655 = vpack.c.bf16 %v2572, %v2569
  %v2656 = vpack.c.bf16 %v2580, %v2577
  %v2657 = vpack.c.bf16 %v2588, %v2585
  %v2658 = vpack.c.bf16 %v2596, %v2593
  %v2659 = vpack.c.bf16 %v2604, %v2601
  %v2660 = vpack.c.bf16 %v2612, %v2609
  %v2661 = vpack.c.bf16 %v2620, %v2617
  %v2662 = vpack.c.bf16 %v2628, %v2625
  %v2663 = vpack.c.bf16 %v2080, %v2077
  %v2664 = vpack.c.bf16 %v2088, %v2085
  %v2665 = vpack.c.bf16 %v2096, %v2093
  %v2666 = vpack.c.bf16 %v2104, %v2101
  %v2667 = vpack.c.bf16 %v2112, %v2109
  %v2668 = vpack.c.bf16 %v2120, %v2117
  %v2669 = vpack.c.bf16 %v2128, %v2125
  %v2670 = vpack.c.bf16 %v2136, %v2133
  %2671 = vxpose.xlu0.c.b16.start [1/8] %v2631, 128
  %2672 = vxpose.xlu0.c.b16.cont [2/8] %v2632, 128
  %2673 = vxpose.xlu0.c.b16.cont [3/8] %v2633, 128
  %2674 = vxpose.xlu0.c.b16.cont [4/8] %v2634, 128
  %2675 = vxpose.xlu0.c.b16.cont [5/8] 0, 128
  %2676 = vxpose.xlu0.c.b16.cont [6/8] 0, 128
  %2677 = vxpose.xlu0.c.b16.cont [7/8] 0, 128
  %2678 = vxpose.xlu0.c.b16.end [8/8] 0, 128
  %v2679 = vpop.trf.xlu0
  %v2680 = vpop.trf.xlu0
  %v2681 = vpop.trf.xlu0
  %v2682 = vpop.trf.xlu0
  %v2683 = vpop.trf.xlu0
  %v2684 = vpop.trf.xlu0
  %v2685 = vpop.trf.xlu0
  %v2686 = vpop.trf.xlu0
  %2691 = vrot.lane.b32.xlu0 %v2631, 96
  %v2692 = vpop.permute.xlu0 %2691
  %2693 = vrot.lane.b32.xlu0 %v2632, 96
  %v2694 = vpop.permute.xlu0 %2693
  %2695 = vrot.lane.b32.xlu0 %v2633, 96
  %v2696 = vpop.permute.xlu0 %2695
  %2697 = vrot.lane.b32.xlu0 %v2634, 96
  %v2698 = vpop.permute.xlu0 %2697
  %vm2703 = vcmask 523264
  %v2705 = vsel %vm2703, %v2679, 0
  %v2708 = vsel %vm2703, %v2680, 0
  %2710 = vmatprep.subr.bf16.mxu0 0
  %2711 = vmatpush1.bf16.msra.mxu0 0
  %2712 = vmatprep.subr.bf16.mxu0 0
  %2713 = vmatpush1.bf16.msra.mxu0 0
  %2714 = vmatprep.subr.bf16.mxu0 0
  %2715 = vmatpush1.bf16.msra.mxu0 0
  %2716 = vmatprep.subr.bf16.mxu0 0
  %2717 = vmatpush1.bf16.msra.mxu0 0
  %2718 = vmatprep.subr.bf16.mxu0 0
  %2719 = vmatpush1.bf16.msra.mxu0 %v2698
  %2720 = vmatprep.subr.bf16.mxu0 0
  %2721 = vmatpush1.bf16.msra.mxu0 %v2696
  %2722 = vmatprep.subr.bf16.mxu0 0
  %2723 = vmatpush1.bf16.msra.mxu0 %v2694
  %2724 = vmatprep.subr.bf16.mxu0 0
  %2725 = vmatpush1.bf16.msra.mxu0 %v2692
  %2726 = vmatprep.subr.bf16.mxu0 0
  %2727 = vmatpush2.bf16.msra.mxu0 0
  %2728 = vmatprep.subr.bf16.mxu0 0
  %2729 = vmatpush2.bf16.msra.mxu0 0
  %2730 = vmatprep.subr.bf16.mxu0 0
  %2731 = vmatpush2.bf16.msra.mxu0 0
  %2732 = vmatprep.subr.bf16.mxu0 0
  %2733 = vmatpush2.bf16.msra.mxu0 0
  %2734 = vmatprep.subr.bf16.mxu0 0
  %2735 = vmatpush2.bf16.msra.mxu0 0
  %2736 = vmatprep.subr.bf16.mxu0 0
  %2737 = vmatpush2.bf16.msra.mxu0 0
  %2738 = vmatprep.subr.bf16.mxu0 0
  %2739 = vmatpush2.bf16.msra.mxu0 0
  %2740 = vmatprep.subr.bf16.mxu0 0
  %2741 = vmatpush2.bf16.msra.mxu0 0
  %2742 = vmatprep.mubr.bf16.mxu0 0
  %2743 = vmatmul.mubr.bf16.gmra.mxu0 %v2705
  %v2744 = vpop.f32.mrf.mxu0
  %v2745 = vadd.f32 0.0, %v2744
  %v2746 = vpop.f32.mrf.mxu0
  %v2747 = vpop.f32.mrf.mxu0
  %v2748 = vadd.f32 0.0, %v2747
  %v2749 = vpop.f32.mrf.mxu0
  %2750 = vmatprep.mubr.bf16.mxu0 0
  %2751 = vmatmul.mubr.bf16.gmra.mxu0 %v2708
  %v2752 = vpop.f32.mrf.mxu0
  %v2753 = vadd.f32 0.0, %v2752
  %v2754 = vpop.f32.mrf.mxu0
  %v2755 = vpop.f32.mrf.mxu0
  %v2756 = vadd.f32 0.0, %v2755
  %v2757 = vpop.f32.mrf.mxu0
  %2758 = vdwg.mxu0
  %2759 = vxpose.xlu0.c.b16.start [1/8] %v2635, 128
  %2760 = vxpose.xlu0.c.b16.cont [2/8] %v2636, 128
  %2761 = vxpose.xlu0.c.b16.cont [3/8] %v2637, 128
  %2762 = vxpose.xlu0.c.b16.cont [4/8] %v2638, 128
  %2763 = vxpose.xlu0.c.b16.cont [5/8] 0, 128
  %2764 = vxpose.xlu0.c.b16.cont [6/8] 0, 128
  %2765 = vxpose.xlu0.c.b16.cont [7/8] 0, 128
  %2766 = vxpose.xlu0.c.b16.end [8/8] 0, 128
  %v2767 = vpop.trf.xlu0
  %v2768 = vpop.trf.xlu0
  %v2769 = vpop.trf.xlu0
  %v2770 = vpop.trf.xlu0
  %v2771 = vpop.trf.xlu0
  %v2772 = vpop.trf.xlu0
  %v2773 = vpop.trf.xlu0
  %v2774 = vpop.trf.xlu0
  %2779 = vrot.lane.b32.xlu0 %v2635, 96
  %v2780 = vpop.permute.xlu0 %2779
  %2781 = vrot.lane.b32.xlu0 %v2636, 96
  %v2782 = vpop.permute.xlu0 %2781
  %2783 = vrot.lane.b32.xlu0 %v2637, 96
  %v2784 = vpop.permute.xlu0 %2783
  %2785 = vrot.lane.b32.xlu0 %v2638, 96
  %v2786 = vpop.permute.xlu0 %2785
  %v2792 = vsel %vm2703, %v2767, 0
  %v2795 = vsel %vm2703, %v2768, 0
  %2797 = vmatprep.subr.bf16.mxu0 0
  %2798 = vmatpush1.bf16.msra.mxu0 0
  %2799 = vmatprep.subr.bf16.mxu0 0
  %2800 = vmatpush1.bf16.msra.mxu0 0
  %2801 = vmatprep.subr.bf16.mxu0 0
  %2802 = vmatpush1.bf16.msra.mxu0 0
  %2803 = vmatprep.subr.bf16.mxu0 0
  %2804 = vmatpush1.bf16.msra.mxu0 0
  %2805 = vmatprep.subr.bf16.mxu0 0
  %2806 = vmatpush1.bf16.msra.mxu0 %v2786
  %2807 = vmatprep.subr.bf16.mxu0 0
  %2808 = vmatpush1.bf16.msra.mxu0 %v2784
  %2809 = vmatprep.subr.bf16.mxu0 0
  %2810 = vmatpush1.bf16.msra.mxu0 %v2782
  %2811 = vmatprep.subr.bf16.mxu0 0
  %2812 = vmatpush1.bf16.msra.mxu0 %v2780
  %2813 = vmatprep.subr.bf16.mxu0 0
  %2814 = vmatpush2.bf16.msra.mxu0 0
  %2815 = vmatprep.subr.bf16.mxu0 0
  %2816 = vmatpush2.bf16.msra.mxu0 0
  %2817 = vmatprep.subr.bf16.mxu0 0
  %2818 = vmatpush2.bf16.msra.mxu0 0
  %2819 = vmatprep.subr.bf16.mxu0 0
  %2820 = vmatpush2.bf16.msra.mxu0 0
  %2821 = vmatprep.subr.bf16.mxu0 0
  %2822 = vmatpush2.bf16.msra.mxu0 0
  %2823 = vmatprep.subr.bf16.mxu0 0
  %2824 = vmatpush2.bf16.msra.mxu0 0
  %2825 = vmatprep.subr.bf16.mxu0 0
  %2826 = vmatpush2.bf16.msra.mxu0 0
  %2827 = vmatprep.subr.bf16.mxu0 0
  %2828 = vmatpush2.bf16.msra.mxu0 0
  %2829 = vmatprep.mubr.bf16.mxu0 0
  %2830 = vmatmul.mubr.bf16.gmra.mxu0 %v2792
  %v2831 = vpop.f32.mrf.mxu0
  %v2832 = vadd.f32 0.0, %v2831
  %v2833 = vpop.f32.mrf.mxu0
  %v2834 = vpop.f32.mrf.mxu0
  %v2835 = vadd.f32 0.0, %v2834
  %v2836 = vpop.f32.mrf.mxu0
  %2837 = vmatprep.mubr.bf16.mxu0 0
  %2838 = vmatmul.mubr.bf16.gmra.mxu0 %v2795
  %v2839 = vpop.f32.mrf.mxu0
  %v2840 = vadd.f32 0.0, %v2839
  %v2841 = vpop.f32.mrf.mxu0
  %v2842 = vpop.f32.mrf.mxu0
  %v2843 = vadd.f32 0.0, %v2842
  %v2844 = vpop.f32.mrf.mxu0
  %2845 = vdwg.mxu0
  %2846 = vxpose.xlu0.c.b16.start [1/8] %v2639, 128
  %2847 = vxpose.xlu0.c.b16.cont [2/8] %v2640, 128
  %2848 = vxpose.xlu0.c.b16.cont [3/8] %v2641, 128
  %2849 = vxpose.xlu0.c.b16.cont [4/8] %v2642, 128
  %2850 = vxpose.xlu0.c.b16.cont [5/8] 0, 128
  %2851 = vxpose.xlu0.c.b16.cont [6/8] 0, 128
  %2852 = vxpose.xlu0.c.b16.cont [7/8] 0, 128
  %2853 = vxpose.xlu0.c.b16.end [8/8] 0, 128
  %v2854 = vpop.trf.xlu0
  %v2855 = vpop.trf.xlu0
  %v2856 = vpop.trf.xlu0
  %v2857 = vpop.trf.xlu0
  %v2858 = vpop.trf.xlu0
  %v2859 = vpop.trf.xlu0
  %v2860 = vpop.trf.xlu0
  %v2861 = vpop.trf.xlu0
  %2866 = vrot.lane.b32.xlu0 %v2639, 96
  %v2867 = vpop.permute.xlu0 %2866
  %2868 = vrot.lane.b32.xlu0 %v2640, 96
  %v2869 = vpop.permute.xlu0 %2868
  %2870 = vrot.lane.b32.xlu0 %v2641, 96
  %v2871 = vpop.permute.xlu0 %2870
  %2872 = vrot.lane.b32.xlu0 %v2642, 96
  %v2873 = vpop.permute.xlu0 %2872
  %v2879 = vsel %vm2703, %v2854, 0
  %v2882 = vsel %vm2703, %v2855, 0
  %2884 = vmatprep.subr.bf16.mxu0 0
  %2885 = vmatpush1.bf16.msra.mxu0 0
  %2886 = vmatprep.subr.bf16.mxu0 0
  %2887 = vmatpush1.bf16.msra.mxu0 0
  %2888 = vmatprep.subr.bf16.mxu0 0
  %2889 = vmatpush1.bf16.msra.mxu0 0
  %2890 = vmatprep.subr.bf16.mxu0 0
  %2891 = vmatpush1.bf16.msra.mxu0 0
  %2892 = vmatprep.subr.bf16.mxu0 0
  %2893 = vmatpush1.bf16.msra.mxu0 %v2873
  %2894 = vmatprep.subr.bf16.mxu0 0
  %2895 = vmatpush1.bf16.msra.mxu0 %v2871
  %2896 = vmatprep.subr.bf16.mxu0 0
  %2897 = vmatpush1.bf16.msra.mxu0 %v2869
  %2898 = vmatprep.subr.bf16.mxu0 0
  %2899 = vmatpush1.bf16.msra.mxu0 %v2867
  %2900 = vmatprep.subr.bf16.mxu0 0
  %2901 = vmatpush2.bf16.msra.mxu0 0
  %2902 = vmatprep.subr.bf16.mxu0 0
  %2903 = vmatpush2.bf16.msra.mxu0 0
  %2904 = vmatprep.subr.bf16.mxu0 0
  %2905 = vmatpush2.bf16.msra.mxu0 0
  %2906 = vmatprep.subr.bf16.mxu0 0
  %2907 = vmatpush2.bf16.msra.mxu0 0
  %2908 = vmatprep.subr.bf16.mxu0 0
  %2909 = vmatpush2.bf16.msra.mxu0 0
  %2910 = vmatprep.subr.bf16.mxu0 0
  %2911 = vmatpush2.bf16.msra.mxu0 0
  %2912 = vmatprep.subr.bf16.mxu0 0
  %2913 = vmatpush2.bf16.msra.mxu0 0
  %2914 = vmatprep.subr.bf16.mxu0 0
  %2915 = vmatpush2.bf16.msra.mxu0 0
  %2916 = vmatprep.mubr.bf16.mxu0 0
  %2917 = vmatmul.mubr.bf16.gmra.mxu0 %v2879
  %v2918 = vpop.f32.mrf.mxu0
  %v2919 = vadd.f32 0.0, %v2918
  %v2920 = vpop.f32.mrf.mxu0
  %v2921 = vpop.f32.mrf.mxu0
  %v2922 = vadd.f32 0.0, %v2921
  %v2923 = vpop.f32.mrf.mxu0
  %2924 = vmatprep.mubr.bf16.mxu0 0
  %2925 = vmatmul.mubr.bf16.gmra.mxu0 %v2882
  %v2926 = vpop.f32.mrf.mxu0
  %v2927 = vadd.f32 0.0, %v2926
  %v2928 = vpop.f32.mrf.mxu0
  %v2929 = vpop.f32.mrf.mxu0
  %v2930 = vadd.f32 0.0, %v2929
  %v2931 = vpop.f32.mrf.mxu0
  %2932 = vdwg.mxu0
  %2933 = vxpose.xlu0.c.b16.start [1/8] %v2643, 128
  %2934 = vxpose.xlu0.c.b16.cont [2/8] %v2644, 128
  %2935 = vxpose.xlu0.c.b16.cont [3/8] %v2645, 128
  %2936 = vxpose.xlu0.c.b16.cont [4/8] %v2646, 128
  %2937 = vxpose.xlu0.c.b16.cont [5/8] 0, 128
  %2938 = vxpose.xlu0.c.b16.cont [6/8] 0, 128
  %2939 = vxpose.xlu0.c.b16.cont [7/8] 0, 128
  %2940 = vxpose.xlu0.c.b16.end [8/8] 0, 128
  %v2941 = vpop.trf.xlu0
  %v2942 = vpop.trf.xlu0
  %v2943 = vpop.trf.xlu0
  %v2944 = vpop.trf.xlu0
  %v2945 = vpop.trf.xlu0
  %v2946 = vpop.trf.xlu0
  %v2947 = vpop.trf.xlu0
  %v2948 = vpop.trf.xlu0
  %2953 = vrot.lane.b32.xlu0 %v2643, 96
  %v2954 = vpop.permute.xlu0 %2953
  %2955 = vrot.lane.b32.xlu0 %v2644, 96
  %v2956 = vpop.permute.xlu0 %2955
  %2957 = vrot.lane.b32.xlu0 %v2645, 96
  %v2958 = vpop.permute.xlu0 %2957
  %2959 = vrot.lane.b32.xlu0 %v2646, 96
  %v2960 = vpop.permute.xlu0 %2959
  %v2966 = vsel %vm2703, %v2941, 0
  %v2969 = vsel %vm2703, %v2942, 0
  %2971 = vmatprep.subr.bf16.mxu0 0
  %2972 = vmatpush1.bf16.msra.mxu0 0
  %2973 = vmatprep.subr.bf16.mxu0 0
  %2974 = vmatpush1.bf16.msra.mxu0 0
  %2975 = vmatprep.subr.bf16.mxu0 0
  %2976 = vmatpush1.bf16.msra.mxu0 0
  %2977 = vmatprep.subr.bf16.mxu0 0
  %2978 = vmatpush1.bf16.msra.mxu0 0
  %2979 = vmatprep.subr.bf16.mxu0 0
  %2980 = vmatpush1.bf16.msra.mxu0 %v2960
  %2981 = vmatprep.subr.bf16.mxu0 0
  %2982 = vmatpush1.bf16.msra.mxu0 %v2958
  %2983 = vmatprep.subr.bf16.mxu0 0
  %2984 = vmatpush1.bf16.msra.mxu0 %v2956
  %2985 = vmatprep.subr.bf16.mxu0 0
  %2986 = vmatpush1.bf16.msra.mxu0 %v2954
  %2987 = vmatprep.subr.bf16.mxu0 0
  %2988 = vmatpush2.bf16.msra.mxu0 0
  %2989 = vmatprep.subr.bf16.mxu0 0
  %2990 = vmatpush2.bf16.msra.mxu0 0
  %2991 = vmatprep.subr.bf16.mxu0 0
  %2992 = vmatpush2.bf16.msra.mxu0 0
  %2993 = vmatprep.subr.bf16.mxu0 0
  %2994 = vmatpush2.bf16.msra.mxu0 0
  %2995 = vmatprep.subr.bf16.mxu0 0
  %2996 = vmatpush2.bf16.msra.mxu0 0
  %2997 = vmatprep.subr.bf16.mxu0 0
  %2998 = vmatpush2.bf16.msra.mxu0 0
  %2999 = vmatprep.subr.bf16.mxu0 0
  %3000 = vmatpush2.bf16.msra.mxu0 0
  %3001 = vmatprep.subr.bf16.mxu0 0
  %3002 = vmatpush2.bf16.msra.mxu0 0
  %3003 = vmatprep.mubr.bf16.mxu0 0
  %3004 = vmatmul.mubr.bf16.gmra.mxu0 %v2966
  %v3005 = vpop.f32.mrf.mxu0
  %v3006 = vadd.f32 0.0, %v3005
  %v3007 = vpop.f32.mrf.mxu0
  %v3008 = vpop.f32.mrf.mxu0
  %v3009 = vadd.f32 0.0, %v3008
  %v3010 = vpop.f32.mrf.mxu0
  %3011 = vmatprep.mubr.bf16.mxu0 0
  %3012 = vmatmul.mubr.bf16.gmra.mxu0 %v2969
  %v3013 = vpop.f32.mrf.mxu0
  %v3014 = vadd.f32 0.0, %v3013
  %v3015 = vpop.f32.mrf.mxu0
  %v3016 = vpop.f32.mrf.mxu0
  %v3017 = vadd.f32 0.0, %v3016
  %v3018 = vpop.f32.mrf.mxu0
  %3019 = vdwg.mxu0
  %3020 = vxpose.xlu0.c.b16.start [1/8] %v2647, 128
  %3021 = vxpose.xlu0.c.b16.cont [2/8] %v2648, 128
  %3022 = vxpose.xlu0.c.b16.cont [3/8] %v2649, 128
  %3023 = vxpose.xlu0.c.b16.cont [4/8] %v2650, 128
  %3024 = vxpose.xlu0.c.b16.cont [5/8] 0, 128
  %3025 = vxpose.xlu0.c.b16.cont [6/8] 0, 128
  %3026 = vxpose.xlu0.c.b16.cont [7/8] 0, 128
  %3027 = vxpose.xlu0.c.b16.end [8/8] 0, 128
  %v3028 = vpop.trf.xlu0
  %v3029 = vpop.trf.xlu0
  %v3030 = vpop.trf.xlu0
  %v3031 = vpop.trf.xlu0
  %v3032 = vpop.trf.xlu0
  %v3033 = vpop.trf.xlu0
  %v3034 = vpop.trf.xlu0
  %v3035 = vpop.trf.xlu0
  %3040 = vrot.lane.b32.xlu0 %v2647, 96
  %v3041 = vpop.permute.xlu0 %3040
  %3042 = vrot.lane.b32.xlu0 %v2648, 96
  %v3043 = vpop.permute.xlu0 %3042
  %3044 = vrot.lane.b32.xlu0 %v2649, 96
  %v3045 = vpop.permute.xlu0 %3044
  %3046 = vrot.lane.b32.xlu0 %v2650, 96
  %v3047 = vpop.permute.xlu0 %3046
  %v3053 = vsel %vm2703, %v3028, 0
  %v3056 = vsel %vm2703, %v3029, 0
  %3058 = vmatprep.subr.bf16.mxu0 0
  %3059 = vmatpush1.bf16.msra.mxu0 0
  %3060 = vmatprep.subr.bf16.mxu0 0
  %3061 = vmatpush1.bf16.msra.mxu0 0
  %3062 = vmatprep.subr.bf16.mxu0 0
  %3063 = vmatpush1.bf16.msra.mxu0 0
  %3064 = vmatprep.subr.bf16.mxu0 0
  %3065 = vmatpush1.bf16.msra.mxu0 0
  %3066 = vmatprep.subr.bf16.mxu0 0
  %3067 = vmatpush1.bf16.msra.mxu0 %v3047
  %3068 = vmatprep.subr.bf16.mxu0 0
  %3069 = vmatpush1.bf16.msra.mxu0 %v3045
  %3070 = vmatprep.subr.bf16.mxu0 0
  %3071 = vmatpush1.bf16.msra.mxu0 %v3043
  %3072 = vmatprep.subr.bf16.mxu0 0
  %3073 = vmatpush1.bf16.msra.mxu0 %v3041
  %3074 = vmatprep.subr.bf16.mxu0 0
  %3075 = vmatpush2.bf16.msra.mxu0 0
  %3076 = vmatprep.subr.bf16.mxu0 0
  %3077 = vmatpush2.bf16.msra.mxu0 0
  %3078 = vmatprep.subr.bf16.mxu0 0
  %3079 = vmatpush2.bf16.msra.mxu0 0
  %3080 = vmatprep.subr.bf16.mxu0 0
  %3081 = vmatpush2.bf16.msra.mxu0 0
  %3082 = vmatprep.subr.bf16.mxu0 0
  %3083 = vmatpush2.bf16.msra.mxu0 0
  %3084 = vmatprep.subr.bf16.mxu0 0
  %3085 = vmatpush2.bf16.msra.mxu0 0
  %3086 = vmatprep.subr.bf16.mxu0 0
  %3087 = vmatpush2.bf16.msra.mxu0 0
  %3088 = vmatprep.subr.bf16.mxu0 0
  %3089 = vmatpush2.bf16.msra.mxu0 0
  %3090 = vmatprep.mubr.bf16.mxu0 0
  %3091 = vmatmul.mubr.bf16.gmra.mxu0 %v3053
  %v3092 = vpop.f32.mrf.mxu0
  %v3093 = vadd.f32 0.0, %v3092
  %v3094 = vpop.f32.mrf.mxu0
  %v3095 = vpop.f32.mrf.mxu0
  %v3096 = vadd.f32 0.0, %v3095
  %v3097 = vpop.f32.mrf.mxu0
  %3098 = vmatprep.mubr.bf16.mxu0 0
  %3099 = vmatmul.mubr.bf16.gmra.mxu0 %v3056
  %v3100 = vpop.f32.mrf.mxu0
  %v3101 = vadd.f32 0.0, %v3100
  %v3102 = vpop.f32.mrf.mxu0
  %v3103 = vpop.f32.mrf.mxu0
  %v3104 = vadd.f32 0.0, %v3103
  %v3105 = vpop.f32.mrf.mxu0
  %3106 = vdwg.mxu0
  %3107 = vxpose.xlu0.c.b16.start [1/8] %v2651, 128
  %3108 = vxpose.xlu0.c.b16.cont [2/8] %v2652, 128
  %3109 = vxpose.xlu0.c.b16.cont [3/8] %v2653, 128
  %3110 = vxpose.xlu0.c.b16.cont [4/8] %v2654, 128
  %3111 = vxpose.xlu0.c.b16.cont [5/8] 0, 128
  %3112 = vxpose.xlu0.c.b16.cont [6/8] 0, 128
  %3113 = vxpose.xlu0.c.b16.cont [7/8] 0, 128
  %3114 = vxpose.xlu0.c.b16.end [8/8] 0, 128
  %v3115 = vpop.trf.xlu0
  %v3116 = vpop.trf.xlu0
  %v3117 = vpop.trf.xlu0
  %v3118 = vpop.trf.xlu0
  %v3119 = vpop.trf.xlu0
  %v3120 = vpop.trf.xlu0
  %v3121 = vpop.trf.xlu0
  %v3122 = vpop.trf.xlu0
  %3127 = vrot.lane.b32.xlu0 %v2651, 96
  %v3128 = vpop.permute.xlu0 %3127
  %3129 = vrot.lane.b32.xlu0 %v2652, 96
  %v3130 = vpop.permute.xlu0 %3129
  %3131 = vrot.lane.b32.xlu0 %v2653, 96
  %v3132 = vpop.permute.xlu0 %3131
  %3133 = vrot.lane.b32.xlu0 %v2654, 96
  %v3134 = vpop.permute.xlu0 %3133
  %v3140 = vsel %vm2703, %v3115, 0
  %v3143 = vsel %vm2703, %v3116, 0
  %3145 = vmatprep.subr.bf16.mxu0 0
  %3146 = vmatpush1.bf16.msra.mxu0 0
  %3147 = vmatprep.subr.bf16.mxu0 0
  %3148 = vmatpush1.bf16.msra.mxu0 0
  %3149 = vmatprep.subr.bf16.mxu0 0
  %3150 = vmatpush1.bf16.msra.mxu0 0
  %3151 = vmatprep.subr.bf16.mxu0 0
  %3152 = vmatpush1.bf16.msra.mxu0 0
  %3153 = vmatprep.subr.bf16.mxu0 0
  %3154 = vmatpush1.bf16.msra.mxu0 %v3134
  %3155 = vmatprep.subr.bf16.mxu0 0
  %3156 = vmatpush1.bf16.msra.mxu0 %v3132
  %3157 = vmatprep.subr.bf16.mxu0 0
  %3158 = vmatpush1.bf16.msra.mxu0 %v3130
  %3159 = vmatprep.subr.bf16.mxu0 0
  %3160 = vmatpush1.bf16.msra.mxu0 %v3128
  %3161 = vmatprep.subr.bf16.mxu0 0
  %3162 = vmatpush2.bf16.msra.mxu0 0
  %3163 = vmatprep.subr.bf16.mxu0 0
  %3164 = vmatpush2.bf16.msra.mxu0 0
  %3165 = vmatprep.subr.bf16.mxu0 0
  %3166 = vmatpush2.bf16.msra.mxu0 0
  %3167 = vmatprep.subr.bf16.mxu0 0
  %3168 = vmatpush2.bf16.msra.mxu0 0
  %3169 = vmatprep.subr.bf16.mxu0 0
  %3170 = vmatpush2.bf16.msra.mxu0 0
  %3171 = vmatprep.subr.bf16.mxu0 0
  %3172 = vmatpush2.bf16.msra.mxu0 0
  %3173 = vmatprep.subr.bf16.mxu0 0
  %3174 = vmatpush2.bf16.msra.mxu0 0
  %3175 = vmatprep.subr.bf16.mxu0 0
  %3176 = vmatpush2.bf16.msra.mxu0 0
  %3177 = vmatprep.mubr.bf16.mxu0 0
  %3178 = vmatmul.mubr.bf16.gmra.mxu0 %v3140
  %v3179 = vpop.f32.mrf.mxu0
  %v3180 = vadd.f32 0.0, %v3179
  %v3181 = vpop.f32.mrf.mxu0
  %v3182 = vpop.f32.mrf.mxu0
  %v3183 = vadd.f32 0.0, %v3182
  %v3184 = vpop.f32.mrf.mxu0
  %3185 = vmatprep.mubr.bf16.mxu0 0
  %3186 = vmatmul.mubr.bf16.gmra.mxu0 %v3143
  %v3187 = vpop.f32.mrf.mxu0
  %v3188 = vadd.f32 0.0, %v3187
  %v3189 = vpop.f32.mrf.mxu0
  %v3190 = vpop.f32.mrf.mxu0
  %v3191 = vadd.f32 0.0, %v3190
  %v3192 = vpop.f32.mrf.mxu0
  %3193 = vdwg.mxu0
  %3194 = vxpose.xlu0.c.b16.start [1/8] %v2655, 128
  %3195 = vxpose.xlu0.c.b16.cont [2/8] %v2656, 128
  %3196 = vxpose.xlu0.c.b16.cont [3/8] %v2657, 128
  %3197 = vxpose.xlu0.c.b16.cont [4/8] %v2658, 128
  %3198 = vxpose.xlu0.c.b16.cont [5/8] 0, 128
  %3199 = vxpose.xlu0.c.b16.cont [6/8] 0, 128
  %3200 = vxpose.xlu0.c.b16.cont [7/8] 0, 128
  %3201 = vxpose.xlu0.c.b16.end [8/8] 0, 128
  %v3202 = vpop.trf.xlu0
  %v3203 = vpop.trf.xlu0
  %v3204 = vpop.trf.xlu0
  %v3205 = vpop.trf.xlu0
  %v3206 = vpop.trf.xlu0
  %v3207 = vpop.trf.xlu0
  %v3208 = vpop.trf.xlu0
  %v3209 = vpop.trf.xlu0
  %3214 = vrot.lane.b32.xlu0 %v2655, 96
  %v3215 = vpop.permute.xlu0 %3214
  %3216 = vrot.lane.b32.xlu0 %v2656, 96
  %v3217 = vpop.permute.xlu0 %3216
  %3218 = vrot.lane.b32.xlu0 %v2657, 96
  %v3219 = vpop.permute.xlu0 %3218
  %3220 = vrot.lane.b32.xlu0 %v2658, 96
  %v3221 = vpop.permute.xlu0 %3220
  %v3227 = vsel %vm2703, %v3202, 0
  %v3230 = vsel %vm2703, %v3203, 0
  %3232 = vmatprep.subr.bf16.mxu0 0
  %3233 = vmatpush1.bf16.msra.mxu0 0
  %3234 = vmatprep.subr.bf16.mxu0 0
  %3235 = vmatpush1.bf16.msra.mxu0 0
  %3236 = vmatprep.subr.bf16.mxu0 0
  %3237 = vmatpush1.bf16.msra.mxu0 0
  %3238 = vmatprep.subr.bf16.mxu0 0
  %3239 = vmatpush1.bf16.msra.mxu0 0
  %3240 = vmatprep.subr.bf16.mxu0 0
  %3241 = vmatpush1.bf16.msra.mxu0 %v3221
  %3242 = vmatprep.subr.bf16.mxu0 0
  %3243 = vmatpush1.bf16.msra.mxu0 %v3219
  %3244 = vmatprep.subr.bf16.mxu0 0
  %3245 = vmatpush1.bf16.msra.mxu0 %v3217
  %3246 = vmatprep.subr.bf16.mxu0 0
  %3247 = vmatpush1.bf16.msra.mxu0 %v3215
  %3248 = vmatprep.subr.bf16.mxu0 0
  %3249 = vmatpush2.bf16.msra.mxu0 0
  %3250 = vmatprep.subr.bf16.mxu0 0
  %3251 = vmatpush2.bf16.msra.mxu0 0
  %3252 = vmatprep.subr.bf16.mxu0 0
  %3253 = vmatpush2.bf16.msra.mxu0 0
  %3254 = vmatprep.subr.bf16.mxu0 0
  %3255 = vmatpush2.bf16.msra.mxu0 0
  %3256 = vmatprep.subr.bf16.mxu0 0
  %3257 = vmatpush2.bf16.msra.mxu0 0
  %3258 = vmatprep.subr.bf16.mxu0 0
  %3259 = vmatpush2.bf16.msra.mxu0 0
  %3260 = vmatprep.subr.bf16.mxu0 0
  %3261 = vmatpush2.bf16.msra.mxu0 0
  %3262 = vmatprep.subr.bf16.mxu0 0
  %3263 = vmatpush2.bf16.msra.mxu0 0
  %3264 = vmatprep.mubr.bf16.mxu0 0
  %3265 = vmatmul.mubr.bf16.gmra.mxu0 %v3227
  %v3266 = vpop.f32.mrf.mxu0
  %v3267 = vadd.f32 0.0, %v3266
  %v3268 = vpop.f32.mrf.mxu0
  %v3269 = vpop.f32.mrf.mxu0
  %v3270 = vadd.f32 0.0, %v3269
  %v3271 = vpop.f32.mrf.mxu0
  %3272 = vmatprep.mubr.bf16.mxu0 0
  %3273 = vmatmul.mubr.bf16.gmra.mxu0 %v3230
  %v3274 = vpop.f32.mrf.mxu0
  %v3275 = vadd.f32 0.0, %v3274
  %v3276 = vpop.f32.mrf.mxu0
  %v3277 = vpop.f32.mrf.mxu0
  %v3278 = vadd.f32 0.0, %v3277
  %v3279 = vpop.f32.mrf.mxu0
  %3280 = vdwg.mxu0
  %3281 = vxpose.xlu0.c.b16.start [1/8] %v2659, 128
  %3282 = vxpose.xlu0.c.b16.cont [2/8] %v2660, 128
  %3283 = vxpose.xlu0.c.b16.cont [3/8] %v2661, 128
  %3284 = vxpose.xlu0.c.b16.cont [4/8] %v2662, 128
  %3285 = vxpose.xlu0.c.b16.cont [5/8] 0, 128
  %3286 = vxpose.xlu0.c.b16.cont [6/8] 0, 128
  %3287 = vxpose.xlu0.c.b16.cont [7/8] 0, 128
  %3288 = vxpose.xlu0.c.b16.end [8/8] 0, 128
  %v3289 = vpop.trf.xlu0
  %v3290 = vpop.trf.xlu0
  %v3291 = vpop.trf.xlu0
  %v3292 = vpop.trf.xlu0
  %v3293 = vpop.trf.xlu0
  %v3294 = vpop.trf.xlu0
  %v3295 = vpop.trf.xlu0
  %v3296 = vpop.trf.xlu0
  %3301 = vrot.lane.b32.xlu0 %v2659, 96
  %v3302 = vpop.permute.xlu0 %3301
  %3303 = vrot.lane.b32.xlu0 %v2660, 96
  %v3304 = vpop.permute.xlu0 %3303
  %3305 = vrot.lane.b32.xlu0 %v2661, 96
  %v3306 = vpop.permute.xlu0 %3305
  %3307 = vrot.lane.b32.xlu0 %v2662, 96
  %v3308 = vpop.permute.xlu0 %3307
  %v3314 = vsel %vm2703, %v3289, 0
  %v3317 = vsel %vm2703, %v3290, 0
  %3319 = vmatprep.subr.bf16.mxu0 0
  %3320 = vmatpush1.bf16.msra.mxu0 0
  %3321 = vmatprep.subr.bf16.mxu0 0
  %3322 = vmatpush1.bf16.msra.mxu0 0
  %3323 = vmatprep.subr.bf16.mxu0 0
  %3324 = vmatpush1.bf16.msra.mxu0 0
  %3325 = vmatprep.subr.bf16.mxu0 0
  %3326 = vmatpush1.bf16.msra.mxu0 0
  %3327 = vmatprep.subr.bf16.mxu0 0
  %3328 = vmatpush1.bf16.msra.mxu0 %v3308
  %3329 = vmatprep.subr.bf16.mxu0 0
  %3330 = vmatpush1.bf16.msra.mxu0 %v3306
  %3331 = vmatprep.subr.bf16.mxu0 0
  %3332 = vmatpush1.bf16.msra.mxu0 %v3304
  %3333 = vmatprep.subr.bf16.mxu0 0
  %3334 = vmatpush1.bf16.msra.mxu0 %v3302
  %3335 = vmatprep.subr.bf16.mxu0 0
  %3336 = vmatpush2.bf16.msra.mxu0 0
  %3337 = vmatprep.subr.bf16.mxu0 0
  %3338 = vmatpush2.bf16.msra.mxu0 0
  %3339 = vmatprep.subr.bf16.mxu0 0
  %3340 = vmatpush2.bf16.msra.mxu0 0
  %3341 = vmatprep.subr.bf16.mxu0 0
  %3342 = vmatpush2.bf16.msra.mxu0 0
  %3343 = vmatprep.subr.bf16.mxu0 0
  %3344 = vmatpush2.bf16.msra.mxu0 0
  %3345 = vmatprep.subr.bf16.mxu0 0
  %3346 = vmatpush2.bf16.msra.mxu0 0
  %3347 = vmatprep.subr.bf16.mxu0 0
  %3348 = vmatpush2.bf16.msra.mxu0 0
  %3349 = vmatprep.subr.bf16.mxu0 0
  %3350 = vmatpush2.bf16.msra.mxu0 0
  %3351 = vmatprep.mubr.bf16.mxu0 0
  %3352 = vmatmul.mubr.bf16.gmra.mxu0 %v3314
  %v3353 = vpop.f32.mrf.mxu0
  %v3354 = vadd.f32 0.0, %v3353
  %v3355 = vpop.f32.mrf.mxu0
  %v3356 = vpop.f32.mrf.mxu0
  %v3357 = vadd.f32 0.0, %v3356
  %v3358 = vpop.f32.mrf.mxu0
  %3359 = vmatprep.mubr.bf16.mxu0 0
  %3360 = vmatmul.mubr.bf16.gmra.mxu0 %v3317
  %v3361 = vpop.f32.mrf.mxu0
  %v3362 = vadd.f32 0.0, %v3361
  %v3363 = vpop.f32.mrf.mxu0
  %v3364 = vpop.f32.mrf.mxu0
  %v3365 = vadd.f32 0.0, %v3364
  %v3366 = vpop.f32.mrf.mxu0
  %3367 = vdwg.mxu0
  %v3368 = vld [vmem:[%s15] sm:$0xff]
  %v3369 = vld [vmem:[%s15 + $0x8] sm:$0xff]
  %v3370 = vld [vmem:[%s15 + $0x10] sm:$0xff]
  %v3371 = vld [vmem:[%s15 + $0x18] sm:$0xff]
  %v3372 = vmul.f32 %v2745, %v3368
  %v3373 = vmul.f32 %v2748, %v3369
  %v3374 = vmul.f32 %v2753, %v3370
  %v3375 = vmul.f32 %v2756, %v3371
  %v3376 = vmul.f32 %v2832, %v3368
  %v3377 = vmul.f32 %v2835, %v3369
  %v3378 = vmul.f32 %v2840, %v3370
  %v3379 = vmul.f32 %v2843, %v3371
  %v3380 = vmul.f32 %v2919, %v3368
  %v3381 = vmul.f32 %v2922, %v3369
  %v3382 = vmul.f32 %v2927, %v3370
  %v3383 = vmul.f32 %v2930, %v3371
  %v3384 = vmul.f32 %v3006, %v3368
  %v3385 = vmul.f32 %v3009, %v3369
  %v3386 = vmul.f32 %v3014, %v3370
  %v3387 = vmul.f32 %v3017, %v3371
  %v3388 = vmul.f32 %v3093, %v3368
  %v3389 = vmul.f32 %v3096, %v3369
  %v3390 = vmul.f32 %v3101, %v3370
  %v3391 = vmul.f32 %v3104, %v3371
  %v3392 = vmul.f32 %v3180, %v3368
  %v3393 = vmul.f32 %v3183, %v3369
  %v3394 = vmul.f32 %v3188, %v3370
  %v3395 = vmul.f32 %v3191, %v3371
  %v3396 = vmul.f32 %v3267, %v3368
  %v3397 = vmul.f32 %v3270, %v3369
  %v3398 = vmul.f32 %v3275, %v3370
  %v3399 = vmul.f32 %v3278, %v3371
  %v3400 = vmul.f32 %v3354, %v3368
  %v3401 = vmul.f32 %v3357, %v3369
  %v3402 = vmul.f32 %v3362, %v3370
  %v3403 = vmul.f32 %v3365, %v3371
  %v3404 = vpack.c.bf16 %v3373, %v3372
  %v3405 = vpack.c.bf16 %v3375, %v3374
  %v3406 = vpack.c.bf16 %v3377, %v3376
  %v3407 = vpack.c.bf16 %v3379, %v3378
  %v3408 = vpack.c.bf16 %v3381, %v3380
  %v3409 = vpack.c.bf16 %v3383, %v3382
  %v3410 = vpack.c.bf16 %v3385, %v3384
  %v3411 = vpack.c.bf16 %v3387, %v3386
  %v3412 = vpack.c.bf16 %v3389, %v3388
  %v3413 = vpack.c.bf16 %v3391, %v3390
  %v3414 = vpack.c.bf16 %v3393, %v3392
  %v3415 = vpack.c.bf16 %v3395, %v3394
  %v3416 = vpack.c.bf16 %v3397, %v3396
  %v3417 = vpack.c.bf16 %v3399, %v3398
  %v3418 = vpack.c.bf16 %v3401, %v3400
  %v3419 = vpack.c.bf16 %v3403, %v3402
  %v3421 = vsel %vm623, %v2663, 0
  %3423 = vmatprep.subr.bf16.mxu0 0
  %3424 = vmatpush1.bf16.msra.mxu0 0
  %3425 = vmatprep.subr.bf16.mxu0 0
  %3426 = vmatpush1.bf16.msra.mxu0 0
  %3427 = vmatprep.subr.bf16.mxu0 0
  %3428 = vmatpush1.bf16.msra.mxu0 0
  %3429 = vmatprep.subr.bf16.mxu0 0
  %3430 = vmatpush1.bf16.msra.mxu0 0
  %3431 = vmatprep.subr.bf16.mxu0 0
  %3432 = vmatpush1.bf16.msra.mxu0 0
  %3433 = vmatprep.subr.bf16.mxu0 0
  %3434 = vmatpush1.bf16.msra.mxu0 0
  %3435 = vmatprep.subr.bf16.mxu0 0
  %3436 = vmatpush1.bf16.msra.mxu0 %v3405
  %3437 = vmatprep.subr.bf16.mxu0 0
  %3438 = vmatpush1.bf16.msra.mxu0 %v3404
  %3439 = vmatprep.subr.bf16.mxu0 0
  %3440 = vmatpush2.bf16.msra.mxu0 0
  %3441 = vmatprep.subr.bf16.mxu0 0
  %3442 = vmatpush2.bf16.msra.mxu0 0
  %3443 = vmatprep.subr.bf16.mxu0 0
  %3444 = vmatpush2.bf16.msra.mxu0 0
  %3445 = vmatprep.subr.bf16.mxu0 0
  %3446 = vmatpush2.bf16.msra.mxu0 0
  %3447 = vmatprep.subr.bf16.mxu0 0
  %3448 = vmatpush2.bf16.msra.mxu0 0
  %3449 = vmatprep.subr.bf16.mxu0 0
  %3450 = vmatpush2.bf16.msra.mxu0 0
  %3451 = vmatprep.subr.bf16.mxu0 0
  %3452 = vmatpush2.bf16.msra.mxu0 0
  %3453 = vmatprep.subr.bf16.mxu0 0
  %3454 = vmatpush2.bf16.msra.mxu0 0
  %3455 = vmatprep.mubr.bf16.mxu0 0
  %3456 = vmatmul.mubr.bf16.gmra.mxu0 %v3421
  %v3457 = vpop.f32.mrf.mxu0
  %v3458 = vadd.f32 0.0, %v3457
  %v3459 = vpop.f32.mrf.mxu0
  %v3460 = vpop.f32.mrf.mxu0
  %v3461 = vadd.f32 0.0, %v3460
  %v3462 = vpop.f32.mrf.mxu0
  %3463 = vdwg.mxu0
  %v3465 = vsel %vm623, %v2664, 0
  %3467 = vmatprep.subr.bf16.mxu0 0
  %3468 = vmatpush1.bf16.msra.mxu0 0
  %3469 = vmatprep.subr.bf16.mxu0 0
  %3470 = vmatpush1.bf16.msra.mxu0 0
  %3471 = vmatprep.subr.bf16.mxu0 0
  %3472 = vmatpush1.bf16.msra.mxu0 0
  %3473 = vmatprep.subr.bf16.mxu0 0
  %3474 = vmatpush1.bf16.msra.mxu0 0
  %3475 = vmatprep.subr.bf16.mxu0 0
  %3476 = vmatpush1.bf16.msra.mxu0 0
  %3477 = vmatprep.subr.bf16.mxu0 0
  %3478 = vmatpush1.bf16.msra.mxu0 0
  %3479 = vmatprep.subr.bf16.mxu0 0
  %3480 = vmatpush1.bf16.msra.mxu0 %v3407
  %3481 = vmatprep.subr.bf16.mxu0 0
  %3482 = vmatpush1.bf16.msra.mxu0 %v3406
  %3483 = vmatprep.subr.bf16.mxu0 0
  %3484 = vmatpush2.bf16.msra.mxu0 0
  %3485 = vmatprep.subr.bf16.mxu0 0
  %3486 = vmatpush2.bf16.msra.mxu0 0
  %3487 = vmatprep.subr.bf16.mxu0 0
  %3488 = vmatpush2.bf16.msra.mxu0 0
  %3489 = vmatprep.subr.bf16.mxu0 0
  %3490 = vmatpush2.bf16.msra.mxu0 0
  %3491 = vmatprep.subr.bf16.mxu0 0
  %3492 = vmatpush2.bf16.msra.mxu0 0
  %3493 = vmatprep.subr.bf16.mxu0 0
  %3494 = vmatpush2.bf16.msra.mxu0 0
  %3495 = vmatprep.subr.bf16.mxu0 0
  %3496 = vmatpush2.bf16.msra.mxu0 0
  %3497 = vmatprep.subr.bf16.mxu0 0
  %3498 = vmatpush2.bf16.msra.mxu0 0
  %3499 = vmatprep.mubr.bf16.mxu0 0
  %3500 = vmatmul.mubr.bf16.gmra.mxu0 %v3465
  %v3501 = vpop.f32.mrf.mxu0
  %v3502 = vadd.f32 0.0, %v3501
  %v3503 = vpop.f32.mrf.mxu0
  %v3504 = vpop.f32.mrf.mxu0
  %v3505 = vadd.f32 0.0, %v3504
  %v3506 = vpop.f32.mrf.mxu0
  %3507 = vdwg.mxu0
  %v3509 = vsel %vm623, %v2665, 0
  %3511 = vmatprep.subr.bf16.mxu0 0
  %3512 = vmatpush1.bf16.msra.mxu0 0
  %3513 = vmatprep.subr.bf16.mxu0 0
  %3514 = vmatpush1.bf16.msra.mxu0 0
  %3515 = vmatprep.subr.bf16.mxu0 0
  %3516 = vmatpush1.bf16.msra.mxu0 0
  %3517 = vmatprep.subr.bf16.mxu0 0
  %3518 = vmatpush1.bf16.msra.mxu0 0
  %3519 = vmatprep.subr.bf16.mxu0 0
  %3520 = vmatpush1.bf16.msra.mxu0 0
  %3521 = vmatprep.subr.bf16.mxu0 0
  %3522 = vmatpush1.bf16.msra.mxu0 0
  %3523 = vmatprep.subr.bf16.mxu0 0
  %3524 = vmatpush1.bf16.msra.mxu0 %v3409
  %3525 = vmatprep.subr.bf16.mxu0 0
  %3526 = vmatpush1.bf16.msra.mxu0 %v3408
  %3527 = vmatprep.subr.bf16.mxu0 0
  %3528 = vmatpush2.bf16.msra.mxu0 0
  %3529 = vmatprep.subr.bf16.mxu0 0
  %3530 = vmatpush2.bf16.msra.mxu0 0
  %3531 = vmatprep.subr.bf16.mxu0 0
  %3532 = vmatpush2.bf16.msra.mxu0 0
  %3533 = vmatprep.subr.bf16.mxu0 0
  %3534 = vmatpush2.bf16.msra.mxu0 0
  %3535 = vmatprep.subr.bf16.mxu0 0
  %3536 = vmatpush2.bf16.msra.mxu0 0
  %3537 = vmatprep.subr.bf16.mxu0 0
  %3538 = vmatpush2.bf16.msra.mxu0 0
  %3539 = vmatprep.subr.bf16.mxu0 0
  %3540 = vmatpush2.bf16.msra.mxu0 0
  %3541 = vmatprep.subr.bf16.mxu0 0
  %3542 = vmatpush2.bf16.msra.mxu0 0
  %3543 = vmatprep.mubr.bf16.mxu0 0
  %3544 = vmatmul.mubr.bf16.gmra.mxu0 %v3509
  %v3545 = vpop.f32.mrf.mxu0
  %v3546 = vadd.f32 0.0, %v3545
  %v3547 = vpop.f32.mrf.mxu0
  %v3548 = vpop.f32.mrf.mxu0
  %v3549 = vadd.f32 0.0, %v3548
  %v3550 = vpop.f32.mrf.mxu0
  %3551 = vdwg.mxu0
  %v3553 = vsel %vm623, %v2666, 0
  %3555 = vmatprep.subr.bf16.mxu0 0
  %3556 = vmatpush1.bf16.msra.mxu0 0
  %3557 = vmatprep.subr.bf16.mxu0 0
  %3558 = vmatpush1.bf16.msra.mxu0 0
  %3559 = vmatprep.subr.bf16.mxu0 0
  %3560 = vmatpush1.bf16.msra.mxu0 0
  %3561 = vmatprep.subr.bf16.mxu0 0
  %3562 = vmatpush1.bf16.msra.mxu0 0
  %3563 = vmatprep.subr.bf16.mxu0 0
  %3564 = vmatpush1.bf16.msra.mxu0 0
  %3565 = vmatprep.subr.bf16.mxu0 0
  %3566 = vmatpush1.bf16.msra.mxu0 0
  %3567 = vmatprep.subr.bf16.mxu0 0
  %3568 = vmatpush1.bf16.msra.mxu0 %v3411
  %3569 = vmatprep.subr.bf16.mxu0 0
  %3570 = vmatpush1.bf16.msra.mxu0 %v3410
  %3571 = vmatprep.subr.bf16.mxu0 0
  %3572 = vmatpush2.bf16.msra.mxu0 0
  %3573 = vmatprep.subr.bf16.mxu0 0
  %3574 = vmatpush2.bf16.msra.mxu0 0
  %3575 = vmatprep.subr.bf16.mxu0 0
  %3576 = vmatpush2.bf16.msra.mxu0 0
  %3577 = vmatprep.subr.bf16.mxu0 0
  %3578 = vmatpush2.bf16.msra.mxu0 0
  %3579 = vmatprep.subr.bf16.mxu0 0
  %3580 = vmatpush2.bf16.msra.mxu0 0
  %3581 = vmatprep.subr.bf16.mxu0 0
  %3582 = vmatpush2.bf16.msra.mxu0 0
  %3583 = vmatprep.subr.bf16.mxu0 0
  %3584 = vmatpush2.bf16.msra.mxu0 0
  %3585 = vmatprep.subr.bf16.mxu0 0
  %3586 = vmatpush2.bf16.msra.mxu0 0
  %3587 = vmatprep.mubr.bf16.mxu0 0
  %3588 = vmatmul.mubr.bf16.gmra.mxu0 %v3553
  %v3589 = vpop.f32.mrf.mxu0
  %v3590 = vadd.f32 0.0, %v3589
  %v3591 = vpop.f32.mrf.mxu0
  %v3592 = vpop.f32.mrf.mxu0
  %v3593 = vadd.f32 0.0, %v3592
  %v3594 = vpop.f32.mrf.mxu0
  %3595 = vdwg.mxu0
  %v3597 = vsel %vm623, %v2667, 0
  %3599 = vmatprep.subr.bf16.mxu0 0
  %3600 = vmatpush1.bf16.msra.mxu0 0
  %3601 = vmatprep.subr.bf16.mxu0 0
  %3602 = vmatpush1.bf16.msra.mxu0 0
  %3603 = vmatprep.subr.bf16.mxu0 0
  %3604 = vmatpush1.bf16.msra.mxu0 0
  %3605 = vmatprep.subr.bf16.mxu0 0
  %3606 = vmatpush1.bf16.msra.mxu0 0
  %3607 = vmatprep.subr.bf16.mxu0 0
  %3608 = vmatpush1.bf16.msra.mxu0 0
  %3609 = vmatprep.subr.bf16.mxu0 0
  %3610 = vmatpush1.bf16.msra.mxu0 0
  %3611 = vmatprep.subr.bf16.mxu0 0
  %3612 = vmatpush1.bf16.msra.mxu0 %v3413
  %3613 = vmatprep.subr.bf16.mxu0 0
  %3614 = vmatpush1.bf16.msra.mxu0 %v3412
  %3615 = vmatprep.subr.bf16.mxu0 0
  %3616 = vmatpush2.bf16.msra.mxu0 0
  %3617 = vmatprep.subr.bf16.mxu0 0
  %3618 = vmatpush2.bf16.msra.mxu0 0
  %3619 = vmatprep.subr.bf16.mxu0 0
  %3620 = vmatpush2.bf16.msra.mxu0 0
  %3621 = vmatprep.subr.bf16.mxu0 0
  %3622 = vmatpush2.bf16.msra.mxu0 0
  %3623 = vmatprep.subr.bf16.mxu0 0
  %3624 = vmatpush2.bf16.msra.mxu0 0
  %3625 = vmatprep.subr.bf16.mxu0 0
  %3626 = vmatpush2.bf16.msra.mxu0 0
  %3627 = vmatprep.subr.bf16.mxu0 0
  %3628 = vmatpush2.bf16.msra.mxu0 0
  %3629 = vmatprep.subr.bf16.mxu0 0
  %3630 = vmatpush2.bf16.msra.mxu0 0
  %3631 = vmatprep.mubr.bf16.mxu0 0
  %3632 = vmatmul.mubr.bf16.gmra.mxu0 %v3597
  %v3633 = vpop.f32.mrf.mxu0
  %v3634 = vadd.f32 0.0, %v3633
  %v3635 = vpop.f32.mrf.mxu0
  %v3636 = vpop.f32.mrf.mxu0
  %v3637 = vadd.f32 0.0, %v3636
  %v3638 = vpop.f32.mrf.mxu0
  %3639 = vdwg.mxu0
  %v3641 = vsel %vm623, %v2668, 0
  %3643 = vmatprep.subr.bf16.mxu0 0
  %3644 = vmatpush1.bf16.msra.mxu0 0
  %3645 = vmatprep.subr.bf16.mxu0 0
  %3646 = vmatpush1.bf16.msra.mxu0 0
  %3647 = vmatprep.subr.bf16.mxu0 0
  %3648 = vmatpush1.bf16.msra.mxu0 0
  %3649 = vmatprep.subr.bf16.mxu0 0
  %3650 = vmatpush1.bf16.msra.mxu0 0
  %3651 = vmatprep.subr.bf16.mxu0 0
  %3652 = vmatpush1.bf16.msra.mxu0 0
  %3653 = vmatprep.subr.bf16.mxu0 0
  %3654 = vmatpush1.bf16.msra.mxu0 0
  %3655 = vmatprep.subr.bf16.mxu0 0
  %3656 = vmatpush1.bf16.msra.mxu0 %v3415
  %3657 = vmatprep.subr.bf16.mxu0 0
  %3658 = vmatpush1.bf16.msra.mxu0 %v3414
  %3659 = vmatprep.subr.bf16.mxu0 0
  %3660 = vmatpush2.bf16.msra.mxu0 0
  %3661 = vmatprep.subr.bf16.mxu0 0
  %3662 = vmatpush2.bf16.msra.mxu0 0
  %3663 = vmatprep.subr.bf16.mxu0 0
  %3664 = vmatpush2.bf16.msra.mxu0 0
  %3665 = vmatprep.subr.bf16.mxu0 0
  %3666 = vmatpush2.bf16.msra.mxu0 0
  %3667 = vmatprep.subr.bf16.mxu0 0
  %3668 = vmatpush2.bf16.msra.mxu0 0
  %3669 = vmatprep.subr.bf16.mxu0 0
  %3670 = vmatpush2.bf16.msra.mxu0 0
  %3671 = vmatprep.subr.bf16.mxu0 0
  %3672 = vmatpush2.bf16.msra.mxu0 0
  %3673 = vmatprep.subr.bf16.mxu0 0
  %3674 = vmatpush2.bf16.msra.mxu0 0
  %3675 = vmatprep.mubr.bf16.mxu0 0
  %3676 = vmatmul.mubr.bf16.gmra.mxu0 %v3641
  %v3677 = vpop.f32.mrf.mxu0
  %v3678 = vadd.f32 0.0, %v3677
  %v3679 = vpop.f32.mrf.mxu0
  %v3680 = vpop.f32.mrf.mxu0
  %v3681 = vadd.f32 0.0, %v3680
  %v3682 = vpop.f32.mrf.mxu0
  %3683 = vdwg.mxu0
  %v3685 = vsel %vm623, %v2669, 0
  %3687 = vmatprep.subr.bf16.mxu0 0
  %3688 = vmatpush1.bf16.msra.mxu0 0
  %3689 = vmatprep.subr.bf16.mxu0 0
  %3690 = vmatpush1.bf16.msra.mxu0 0
  %3691 = vmatprep.subr.bf16.mxu0 0
  %3692 = vmatpush1.bf16.msra.mxu0 0
  %3693 = vmatprep.subr.bf16.mxu0 0
  %3694 = vmatpush1.bf16.msra.mxu0 0
  %3695 = vmatprep.subr.bf16.mxu0 0
  %3696 = vmatpush1.bf16.msra.mxu0 0
  %3697 = vmatprep.subr.bf16.mxu0 0
  %3698 = vmatpush1.bf16.msra.mxu0 0
  %3699 = vmatprep.subr.bf16.mxu0 0
  %3700 = vmatpush1.bf16.msra.mxu0 %v3417
  %3701 = vmatprep.subr.bf16.mxu0 0
  %3702 = vmatpush1.bf16.msra.mxu0 %v3416
  %3703 = vmatprep.subr.bf16.mxu0 0
  %3704 = vmatpush2.bf16.msra.mxu0 0
  %3705 = vmatprep.subr.bf16.mxu0 0
  %3706 = vmatpush2.bf16.msra.mxu0 0
  %3707 = vmatprep.subr.bf16.mxu0 0
  %3708 = vmatpush2.bf16.msra.mxu0 0
  %3709 = vmatprep.subr.bf16.mxu0 0
  %3710 = vmatpush2.bf16.msra.mxu0 0
  %3711 = vmatprep.subr.bf16.mxu0 0
  %3712 = vmatpush2.bf16.msra.mxu0 0
  %3713 = vmatprep.subr.bf16.mxu0 0
  %3714 = vmatpush2.bf16.msra.mxu0 0
  %3715 = vmatprep.subr.bf16.mxu0 0
  %3716 = vmatpush2.bf16.msra.mxu0 0
  %3717 = vmatprep.subr.bf16.mxu0 0
  %3718 = vmatpush2.bf16.msra.mxu0 0
  %3719 = vmatprep.mubr.bf16.mxu0 0
  %3720 = vmatmul.mubr.bf16.gmra.mxu0 %v3685
  %v3721 = vpop.f32.mrf.mxu0
  %v3722 = vadd.f32 0.0, %v3721
  %v3723 = vpop.f32.mrf.mxu0
  %v3724 = vpop.f32.mrf.mxu0
  %v3725 = vadd.f32 0.0, %v3724
  %v3726 = vpop.f32.mrf.mxu0
  %3727 = vdwg.mxu0
  %v3729 = vsel %vm623, %v2670, 0
  %3731 = vmatprep.subr.bf16.mxu0 0
  %3732 = vmatpush1.bf16.msra.mxu0 0
  %3733 = vmatprep.subr.bf16.mxu0 0
  %3734 = vmatpush1.bf16.msra.mxu0 0
  %3735 = vmatprep.subr.bf16.mxu0 0
  %3736 = vmatpush1.bf16.msra.mxu0 0
  %3737 = vmatprep.subr.bf16.mxu0 0
  %3738 = vmatpush1.bf16.msra.mxu0 0
  %3739 = vmatprep.subr.bf16.mxu0 0
  %3740 = vmatpush1.bf16.msra.mxu0 0
  %3741 = vmatprep.subr.bf16.mxu0 0
  %3742 = vmatpush1.bf16.msra.mxu0 0
  %3743 = vmatprep.subr.bf16.mxu0 0
  %3744 = vmatpush1.bf16.msra.mxu0 %v3419
  %3745 = vmatprep.subr.bf16.mxu0 0
  %3746 = vmatpush1.bf16.msra.mxu0 %v3418
  %3747 = vmatprep.subr.bf16.mxu0 0
  %3748 = vmatpush2.bf16.msra.mxu0 0
  %3749 = vmatprep.subr.bf16.mxu0 0
  %3750 = vmatpush2.bf16.msra.mxu0 0
  %3751 = vmatprep.subr.bf16.mxu0 0
  %3752 = vmatpush2.bf16.msra.mxu0 0
  %3753 = vmatprep.subr.bf16.mxu0 0
  %3754 = vmatpush2.bf16.msra.mxu0 0
  %3755 = vmatprep.subr.bf16.mxu0 0
  %3756 = vmatpush2.bf16.msra.mxu0 0
  %3757 = vmatprep.subr.bf16.mxu0 0
  %3758 = vmatpush2.bf16.msra.mxu0 0
  %3759 = vmatprep.subr.bf16.mxu0 0
  %3760 = vmatpush2.bf16.msra.mxu0 0
  %3761 = vmatprep.subr.bf16.mxu0 0
  %3762 = vmatpush2.bf16.msra.mxu0 0
  %3763 = vmatprep.mubr.bf16.mxu0 0
  %3764 = vmatmul.mubr.bf16.gmra.mxu0 %v3729
  %v3765 = vpop.f32.mrf.mxu0
  %v3766 = vadd.f32 0.0, %v3765
  %v3767 = vpop.f32.mrf.mxu0
  %v3768 = vpop.f32.mrf.mxu0
  %v3769 = vadd.f32 0.0, %v3768
  %v3770 = vpop.f32.mrf.mxu0
  %3771 = vdwg.mxu0
  %v3772 = vld [vmem:[%s7] sm:$0xff]
  %v3773 = vld [vmem:[%s37] sm:$0x3]
  %v3774 = vpack.c.bf16 %v3772, %v3772
  %v3775 = vld [vmem:[%s39] sm:$0x1]
  %v3777 = vlaneseq
  %v3778 = vshrl.u32 %v3777, 7
  %v3779 = vsub.s32 0, %v3778
  %v3780 = vrot.slane %v3775, %v3779
  %v3783 = vsel %vm2013, %v3774, 0
  %v3786 = vsel %vm2038, %v3773, 0
  %3788 = vmatprep.subr.bf16.mxu0 0
  %3789 = vmatpush1.bf16.msra.mxu0 0
  %3790 = vmatprep.subr.bf16.mxu0 0
  %3791 = vmatpush1.bf16.msra.mxu0 0
  %3792 = vmatprep.subr.bf16.mxu0 0
  %3793 = vmatpush1.bf16.msra.mxu0 0
  %3794 = vmatprep.subr.bf16.mxu0 0
  %3795 = vmatpush1.bf16.msra.mxu0 0
  %3796 = vmatprep.subr.bf16.mxu0 0
  %3797 = vmatpush1.bf16.msra.mxu0 0
  %3798 = vmatprep.subr.bf16.mxu0 0
  %3799 = vmatpush1.bf16.msra.mxu0 0
  %3800 = vmatprep.subr.bf16.mxu0 0
  %3801 = vmatpush1.bf16.msra.mxu0 0
  %3802 = vmatprep.subr.bf16.mxu0 0
  %3803 = vmatpush1.bf16.msra.mxu0 %v3786
  %3804 = vmatprep.subr.bf16.mxu0 0
  %3805 = vmatpush2.bf16.msra.mxu0 0
  %3806 = vmatprep.subr.bf16.mxu0 0
  %3807 = vmatpush2.bf16.msra.mxu0 0
  %3808 = vmatprep.subr.bf16.mxu0 0
  %3809 = vmatpush2.bf16.msra.mxu0 0
  %3810 = vmatprep.subr.bf16.mxu0 0
  %3811 = vmatpush2.bf16.msra.mxu0 0
  %3812 = vmatprep.subr.bf16.mxu0 0
  %3813 = vmatpush2.bf16.msra.mxu0 0
  %3814 = vmatprep.subr.bf16.mxu0 0
  %3815 = vmatpush2.bf16.msra.mxu0 0
  %3816 = vmatprep.subr.bf16.mxu0 0
  %3817 = vmatpush2.bf16.msra.mxu0 0
  %3818 = vmatprep.subr.bf16.mxu0 0
  %3819 = vmatpush2.bf16.msra.mxu0 0
  %3820 = vmatprep.mubr.bf16.mxu0 0
  %3821 = vmatmul.mubr.bf16.gmra.mxu0 %v3783
  %v3822 = vpop.f32.mrf.mxu0
  %v3823 = vadd.f32 %v3780, %v3822
  %v3824 = vpop.f32.mrf.mxu0
  %v3825 = vpop.f32.mrf.mxu0
  %v3826 = vpop.f32.mrf.mxu0
  %3827 = vdwg.mxu0
  %v3828 = vld [vmem:[%s9] sm:$0xff]
  %v3829 = vld [vmem:[%s41] sm:$0x7]
  %v3830 = vpack.c.bf16 %v3828, %v3828
  %v3831 = vld [vmem:[%s43] sm:$0x1]
  %v3833 = vlaneseq
  %v3834 = vshrl.u32 %v3833, 7
  %v3835 = vsub.s32 0, %v3834
  %v3836 = vrot.slane %v3831, %v3835
  %v3839 = vsel %vm231, %v3830, 0
  %v3842 = vsel %vm328, %v3829, 0
  %3844 = vmatprep.subr.bf16.mxu0 0
  %3845 = vmatpush1.bf16.msra.mxu0 0
  %3846 = vmatprep.subr.bf16.mxu0 0
  %3847 = vmatpush1.bf16.msra.mxu0 0
  %3848 = vmatprep.subr.bf16.mxu0 0
  %3849 = vmatpush1.bf16.msra.mxu0 0
  %3850 = vmatprep.subr.bf16.mxu0 0
  %3851 = vmatpush1.bf16.msra.mxu0 0
  %3852 = vmatprep.subr.bf16.mxu0 0
  %3853 = vmatpush1.bf16.msra.mxu0 0
  %3854 = vmatprep.subr.bf16.mxu0 0
  %3855 = vmatpush1.bf16.msra.mxu0 0
  %3856 = vmatprep.subr.bf16.mxu0 0
  %3857 = vmatpush1.bf16.msra.mxu0 0
  %3858 = vmatprep.subr.bf16.mxu0 0
  %3859 = vmatpush1.bf16.msra.mxu0 %v3842
  %3860 = vmatprep.subr.bf16.mxu0 0
  %3861 = vmatpush2.bf16.msra.mxu0 0
  %3862 = vmatprep.subr.bf16.mxu0 0
  %3863 = vmatpush2.bf16.msra.mxu0 0
  %3864 = vmatprep.subr.bf16.mxu0 0
  %3865 = vmatpush2.bf16.msra.mxu0 0
  %3866 = vmatprep.subr.bf16.mxu0 0
  %3867 = vmatpush2.bf16.msra.mxu0 0
  %3868 = vmatprep.subr.bf16.mxu0 0
  %3869 = vmatpush2.bf16.msra.mxu0 0
  %3870 = vmatprep.subr.bf16.mxu0 0
  %3871 = vmatpush2.bf16.msra.mxu0 0
  %3872 = vmatprep.subr.bf16.mxu0 0
  %3873 = vmatpush2.bf16.msra.mxu0 0
  %3874 = vmatprep.subr.bf16.mxu0 0
  %3875 = vmatpush2.bf16.msra.mxu0 0
  %3876 = vmatprep.mubr.bf16.mxu0 0
  %3877 = vmatmul.mubr.bf16.gmra.mxu0 %v3839
  %v3878 = vpop.f32.mrf.mxu0
  %v3879 = vadd.f32 %v3836, %v3878
  %v3880 = vpop.f32.mrf.mxu0
  %v3881 = vpop.f32.mrf.mxu0
  %v3882 = vpop.f32.mrf.mxu0
  %3883 = vdwg.mxu0
  %v3884 = vld [vmem:[%s19] sm:$0x1]
  %v3885 = vld [vmem:[%s19 + $0x1] sm:$0x1]
  %v3886 = vld [vmem:[%s19 + $0x2] sm:$0x1]
  %v3887 = vld [vmem:[%s19 + $0x3] sm:$0x1]
  %v3892 = vlaneseq
  %v3893 = vshrl.u32 %v3892, 7
  %v3894 = vsub.s32 0, %v3893
  %v3895 = vrot.slane %v3884, %v3894
  %v3896 = vlaneseq
  %v3897 = vshrl.u32 %v3896, 7
  %v3898 = vsub.s32 0, %v3897
  %v3899 = vrot.slane %v3885, %v3898
  %v3900 = vlaneseq
  %v3901 = vshrl.u32 %v3900, 7
  %v3902 = vsub.s32 0, %v3901
  %v3903 = vrot.slane %v3886, %v3902
  %v3904 = vlaneseq
  %v3905 = vshrl.u32 %v3904, 7
  %v3906 = vsub.s32 0, %v3905
  %v3907 = vrot.slane %v3887, %v3906
  %v3912 = vmul.f32 %v3823, %v3895
  %v3913 = vmul.f32 %v3823, %v3899
  %v3914 = vmul.f32 %v3823, %v3903
  %v3915 = vmul.f32 %v3823, %v3907
  %v3916 = vpack.c.bf16 %v3912, %v3912
  %v3917 = vpack.c.bf16 %v3913, %v3913
  %v3918 = vpack.c.bf16 %v3914, %v3914
  %v3919 = vpack.c.bf16 %v3915, %v3915
  %v3920 = vpack.c.bf16 %v3879, %v3879
  %v3921 = vld [vmem:[%s17] sm:$0xff]
  %v3923 = vsel %vm623, %v3916, 0
  %v3926 = vsel %vm623, %v3920, 0
  %3928 = vmatprep.subr.bf16.mxu0 0
  %3929 = vmatpush1.bf16.xpose.msra.mxu0 0
  %3930 = vmatprep.subr.bf16.mxu0 0
  %3931 = vmatpush1.bf16.xpose.msra.mxu0 0
  %3932 = vmatprep.subr.bf16.mxu0 0
  %3933 = vmatpush1.bf16.xpose.msra.mxu0 0
  %3934 = vmatprep.subr.bf16.mxu0 0
  %3935 = vmatpush1.bf16.xpose.msra.mxu0 0
  %3936 = vmatprep.subr.bf16.mxu0 0
  %3937 = vmatpush1.bf16.xpose.msra.mxu0 0
  %3938 = vmatprep.subr.bf16.mxu0 0
  %3939 = vmatpush1.bf16.xpose.msra.mxu0 0
  %3940 = vmatprep.subr.bf16.mxu0 0
  %3941 = vmatpush1.bf16.xpose.msra.mxu0 0
  %3942 = vmatprep.subr.bf16.mxu0 0
  %3943 = vmatpush1.bf16.xpose.msra.mxu0 %v3926
  %3944 = vmatprep.subr.bf16.mxu0 0
  %3945 = vmatpush2.bf16.xpose.msra.mxu0 0
  %3946 = vmatprep.subr.bf16.mxu0 0
  %3947 = vmatpush2.bf16.xpose.msra.mxu0 0
  %3948 = vmatprep.subr.bf16.mxu0 0
  %3949 = vmatpush2.bf16.xpose.msra.mxu0 0
  %3950 = vmatprep.subr.bf16.mxu0 0
  %3951 = vmatpush2.bf16.xpose.msra.mxu0 0
  %3952 = vmatprep.subr.bf16.mxu0 0
  %3953 = vmatpush2.bf16.xpose.msra.mxu0 0
  %3954 = vmatprep.subr.bf16.mxu0 0
  %3955 = vmatpush2.bf16.xpose.msra.mxu0 0
  %3956 = vmatprep.subr.bf16.mxu0 0
  %3957 = vmatpush2.bf16.xpose.msra.mxu0 0
  %3958 = vmatprep.subr.bf16.mxu0 0
  %3959 = vmatpush2.bf16.xpose.msra.mxu0 0
  %3960 = vmatprep.mubr.bf16.mxu0 0
  %3961 = vmatmul.mubr.bf16.gmra.mxu0 %v3923
  %v3962 = vpop.f32.mrf.mxu0
  %v3963 = vadd.f32 %v3921, %v3962
  %v3964 = vpop.f32.mrf.mxu0
  %v3965 = vpop.f32.mrf.mxu0
  %v3966 = vpop.f32.mrf.mxu0
  %3967 = vdwg.mxu0
  %v3969 = vsel %vm623, %v3917, 0
  %3971 = vmatprep.subr.bf16.mxu0 0
  %3972 = vmatpush1.bf16.xpose.msra.mxu0 0
  %3973 = vmatprep.subr.bf16.mxu0 0
  %3974 = vmatpush1.bf16.xpose.msra.mxu0 0
  %3975 = vmatprep.subr.bf16.mxu0 0
  %3976 = vmatpush1.bf16.xpose.msra.mxu0 0
  %3977 = vmatprep.subr.bf16.mxu0 0
  %3978 = vmatpush1.bf16.xpose.msra.mxu0 0
  %3979 = vmatprep.subr.bf16.mxu0 0
  %3980 = vmatpush1.bf16.xpose.msra.mxu0 0
  %3981 = vmatprep.subr.bf16.mxu0 0
  %3982 = vmatpush1.bf16.xpose.msra.mxu0 0
  %3983 = vmatprep.subr.bf16.mxu0 0
  %3984 = vmatpush1.bf16.xpose.msra.mxu0 0
  %3985 = vmatprep.subr.bf16.mxu0 0
  %3986 = vmatpush1.bf16.xpose.msra.mxu0 %v3926
  %3987 = vmatprep.subr.bf16.mxu0 0
  %3988 = vmatpush2.bf16.xpose.msra.mxu0 0
  %3989 = vmatprep.subr.bf16.mxu0 0
  %3990 = vmatpush2.bf16.xpose.msra.mxu0 0
  %3991 = vmatprep.subr.bf16.mxu0 0
  %3992 = vmatpush2.bf16.xpose.msra.mxu0 0
  %3993 = vmatprep.subr.bf16.mxu0 0
  %3994 = vmatpush2.bf16.xpose.msra.mxu0 0
  %3995 = vmatprep.subr.bf16.mxu0 0
  %3996 = vmatpush2.bf16.xpose.msra.mxu0 0
  %3997 = vmatprep.subr.bf16.mxu0 0
  %3998 = vmatpush2.bf16.xpose.msra.mxu0 0
  %3999 = vmatprep.subr.bf16.mxu0 0
  %4000 = vmatpush2.bf16.xpose.msra.mxu0 0
  %4001 = vmatprep.subr.bf16.mxu0 0
  %4002 = vmatpush2.bf16.xpose.msra.mxu0 0
  %4003 = vmatprep.mubr.bf16.mxu0 0
  %4004 = vmatmul.mubr.bf16.gmra.mxu0 %v3969
  %v4005 = vpop.f32.mrf.mxu0
  %v4006 = vadd.f32 %v3921, %v4005
  %v4007 = vpop.f32.mrf.mxu0
  %v4008 = vpop.f32.mrf.mxu0
  %v4009 = vpop.f32.mrf.mxu0
  %4010 = vdwg.mxu0
  %v4012 = vsel %vm623, %v3918, 0
  %4014 = vmatprep.subr.bf16.mxu0 0
  %4015 = vmatpush1.bf16.xpose.msra.mxu0 0
  %4016 = vmatprep.subr.bf16.mxu0 0
  %4017 = vmatpush1.bf16.xpose.msra.mxu0 0
  %4018 = vmatprep.subr.bf16.mxu0 0
  %4019 = vmatpush1.bf16.xpose.msra.mxu0 0
  %4020 = vmatprep.subr.bf16.mxu0 0
  %4021 = vmatpush1.bf16.xpose.msra.mxu0 0
  %4022 = vmatprep.subr.bf16.mxu0 0
  %4023 = vmatpush1.bf16.xpose.msra.mxu0 0
  %4024 = vmatprep.subr.bf16.mxu0 0
  %4025 = vmatpush1.bf16.xpose.msra.mxu0 0
  %4026 = vmatprep.subr.bf16.mxu0 0
  %4027 = vmatpush1.bf16.xpose.msra.mxu0 0
  %4028 = vmatprep.subr.bf16.mxu0 0
  %4029 = vmatpush1.bf16.xpose.msra.mxu0 %v3926
  %4030 = vmatprep.subr.bf16.mxu0 0
  %4031 = vmatpush2.bf16.xpose.msra.mxu0 0
  %4032 = vmatprep.subr.bf16.mxu0 0
  %4033 = vmatpush2.bf16.xpose.msra.mxu0 0
  %4034 = vmatprep.subr.bf16.mxu0 0
  %4035 = vmatpush2.bf16.xpose.msra.mxu0 0
  %4036 = vmatprep.subr.bf16.mxu0 0
  %4037 = vmatpush2.bf16.xpose.msra.mxu0 0
  %4038 = vmatprep.subr.bf16.mxu0 0
  %4039 = vmatpush2.bf16.xpose.msra.mxu0 0
  %4040 = vmatprep.subr.bf16.mxu0 0
  %4041 = vmatpush2.bf16.xpose.msra.mxu0 0
  %4042 = vmatprep.subr.bf16.mxu0 0
  %4043 = vmatpush2.bf16.xpose.msra.mxu0 0
  %4044 = vmatprep.subr.bf16.mxu0 0
  %4045 = vmatpush2.bf16.xpose.msra.mxu0 0
  %4046 = vmatprep.mubr.bf16.mxu0 0
  %4047 = vmatmul.mubr.bf16.gmra.mxu0 %v4012
  %v4048 = vpop.f32.mrf.mxu0
  %v4049 = vadd.f32 %v3921, %v4048
  %v4050 = vpop.f32.mrf.mxu0
  %v4051 = vpop.f32.mrf.mxu0
  %v4052 = vpop.f32.mrf.mxu0
  %4053 = vdwg.mxu0
  %v4055 = vsel %vm623, %v3919, 0
  %4057 = vmatprep.subr.bf16.mxu0 0
  %4058 = vmatpush1.bf16.xpose.msra.mxu0 0
  %4059 = vmatprep.subr.bf16.mxu0 0
  %4060 = vmatpush1.bf16.xpose.msra.mxu0 0
  %4061 = vmatprep.subr.bf16.mxu0 0
  %4062 = vmatpush1.bf16.xpose.msra.mxu0 0
  %4063 = vmatprep.subr.bf16.mxu0 0
  %4064 = vmatpush1.bf16.xpose.msra.mxu0 0
  %4065 = vmatprep.subr.bf16.mxu0 0
  %4066 = vmatpush1.bf16.xpose.msra.mxu0 0
  %4067 = vmatprep.subr.bf16.mxu0 0
  %4068 = vmatpush1.bf16.xpose.msra.mxu0 0
  %4069 = vmatprep.subr.bf16.mxu0 0
  %4070 = vmatpush1.bf16.xpose.msra.mxu0 0
  %4071 = vmatprep.subr.bf16.mxu0 0
  %4072 = vmatpush1.bf16.xpose.msra.mxu0 %v3926
  %4073 = vmatprep.subr.bf16.mxu0 0
  %4074 = vmatpush2.bf16.xpose.msra.mxu0 0
  %4075 = vmatprep.subr.bf16.mxu0 0
  %4076 = vmatpush2.bf16.xpose.msra.mxu0 0
  %4077 = vmatprep.subr.bf16.mxu0 0
  %4078 = vmatpush2.bf16.xpose.msra.mxu0 0
  %4079 = vmatprep.subr.bf16.mxu0 0
  %4080 = vmatpush2.bf16.xpose.msra.mxu0 0
  %4081 = vmatprep.subr.bf16.mxu0 0
  %4082 = vmatpush2.bf16.xpose.msra.mxu0 0
  %4083 = vmatprep.subr.bf16.mxu0 0
  %4084 = vmatpush2.bf16.xpose.msra.mxu0 0
  %4085 = vmatprep.subr.bf16.mxu0 0
  %4086 = vmatpush2.bf16.xpose.msra.mxu0 0
  %4087 = vmatprep.subr.bf16.mxu0 0
  %4088 = vmatpush2.bf16.xpose.msra.mxu0 0
  %4089 = vmatprep.mubr.bf16.mxu0 0
  %4090 = vmatmul.mubr.bf16.gmra.mxu0 %v4055
  %v4091 = vpop.f32.mrf.mxu0
  %v4092 = vadd.f32 %v3921, %v4091
  %v4093 = vpop.f32.mrf.mxu0
  %v4094 = vpop.f32.mrf.mxu0
  %v4095 = vpop.f32.mrf.mxu0
  %4096 = vdwg.mxu0
  %vm4097 = vcmask 64512
  %v4098 = vsel %vm4097, %v3963, -inf
  %4099 = vmax.xlane.f32.xlu0 %v4098
  %v4100 = vpop.xlane.xlu0 %4099
  %v4101 = vsel %vm4097, %v4006, -inf
  %4102 = vmax.xlane.f32.xlu0 %v4101
  %v4103 = vpop.xlane.xlu0 %4102
  %v4104 = vsel %vm4097, %v4049, -inf
  %4105 = vmax.xlane.f32.xlu0 %v4104
  %v4106 = vpop.xlane.xlu0 %4105
  %v4107 = vsel %vm4097, %v4092, -inf
  %4108 = vmax.xlane.f32.xlu0 %v4107
  %v4109 = vpop.xlane.xlu0 %4108
  %v4110 = vsub.f32 %v3963, %v4100
  %v4111 = vsub.f32 %v4006, %v4103
  %v4112 = vsub.f32 %v4049, %v4106
  %v4113 = vsub.f32 %v4092, %v4109
  %v4114 = vmul.f32 %v4110, 1.442695
  %v4115 = vpow.pop %v4114
  %v4116 = vmul.f32 %v4111, 1.442695
  %v4117 = vpow.pop %v4116
  %v4118 = vmul.f32 %v4112, 1.442695
  %v4119 = vpow.pop %v4118
  %v4120 = vmul.f32 %v4113, 1.442695
  %v4121 = vpow.pop %v4120
  %v4122 = vsel %vm4097, %v4115, 0.0
  %4123 = vadd.xlane.f32.xlu0 %v4122
  %v4124 = vpop.xlane.xlu0 %4123
  %v4125 = vsel %vm4097, %v4117, 0.0
  %4126 = vadd.xlane.f32.xlu0 %v4125
  %v4127 = vpop.xlane.xlu0 %4126
  %v4128 = vsel %vm4097, %v4119, 0.0
  %4129 = vadd.xlane.f32.xlu0 %v4128
  %v4130 = vpop.xlane.xlu0 %4129
  %v4131 = vsel %vm4097, %v4121, 0.0
  %4132 = vadd.xlane.f32.xlu0 %v4131
  %v4133 = vpop.xlane.xlu0 %4132
  %v4134 = vrcp.pop %v4124
  %v4135 = vrcp.pop %v4127
  %v4136 = vrcp.pop %v4130
  %v4137 = vrcp.pop %v4133
  %v4138 = vmul.f32 %v4115, %v4134
  %v4139 = vmul.f32 %v4117, %v4135
  %v4140 = vmul.f32 %v4119, %v4136
  %v4141 = vmul.f32 %v4121, %v4137
  %v4142 = vpack.c.bf16 %v4138, %v4138
  %v4143 = vpack.c.bf16 %v4139, %v4139
  %v4144 = vpack.c.bf16 %v4140, %v4140
  %v4145 = vpack.c.bf16 %v4141, %v4141
  %4147 = vrot.lane.b32.xlu0 %v3920, 96
  %v4148 = vpop.permute.xlu0 %4147
  %v4150 = vsel %vm4097, %v4142, 0
  %vm4152 = vcmask 1043456
  %v4154 = vsel %vm4152, %v4148, 0
  %4156 = vmatprep.subr.bf16.mxu0 0
  %4157 = vmatpush1.bf16.msra.mxu0 0
  %4158 = vmatprep.subr.bf16.mxu0 0
  %4159 = vmatpush1.bf16.msra.mxu0 0
  %4160 = vmatprep.subr.bf16.mxu0 0
  %4161 = vmatpush1.bf16.msra.mxu0 0
  %4162 = vmatprep.subr.bf16.mxu0 0
  %4163 = vmatpush1.bf16.msra.mxu0 0
  %4164 = vmatprep.subr.bf16.mxu0 0
  %4165 = vmatpush1.bf16.msra.mxu0 0
  %4166 = vmatprep.subr.bf16.mxu0 0
  %4167 = vmatpush1.bf16.msra.mxu0 0
  %4168 = vmatprep.subr.bf16.mxu0 0
  %4169 = vmatpush1.bf16.msra.mxu0 0
  %4170 = vmatprep.subr.bf16.mxu0 0
  %4171 = vmatpush1.bf16.msra.mxu0 %v4154
  %4172 = vmatprep.subr.bf16.mxu0 0
  %4173 = vmatpush2.bf16.msra.mxu0 0
  %4174 = vmatprep.subr.bf16.mxu0 0
  %4175 = vmatpush2.bf16.msra.mxu0 0
  %4176 = vmatprep.subr.bf16.mxu0 0
  %4177 = vmatpush2.bf16.msra.mxu0 0
  %4178 = vmatprep.subr.bf16.mxu0 0
  %4179 = vmatpush2.bf16.msra.mxu0 0
  %4180 = vmatprep.subr.bf16.mxu0 0
  %4181 = vmatpush2.bf16.msra.mxu0 0
  %4182 = vmatprep.subr.bf16.mxu0 0
  %4183 = vmatpush2.bf16.msra.mxu0 0
  %4184 = vmatprep.subr.bf16.mxu0 0
  %4185 = vmatpush2.bf16.msra.mxu0 0
  %4186 = vmatprep.subr.bf16.mxu0 0
  %4187 = vmatpush2.bf16.msra.mxu0 0
  %4188 = vmatprep.mubr.bf16.mxu0 0
  %4189 = vmatmul.mubr.bf16.gmra.mxu0 %v4150
  %v4190 = vpop.f32.mrf.mxu0
  %v4191 = vadd.f32 0.0, %v4190
  %v4192 = vpop.f32.mrf.mxu0
  %v4193 = vpop.f32.mrf.mxu0
  %v4194 = vpop.f32.mrf.mxu0
  %4195 = vdwg.mxu0
  %v4197 = vsel %vm4097, %v4143, 0
  %4199 = vmatprep.subr.bf16.mxu0 0
  %4200 = vmatpush1.bf16.msra.mxu0 0
  %4201 = vmatprep.subr.bf16.mxu0 0
  %4202 = vmatpush1.bf16.msra.mxu0 0
  %4203 = vmatprep.subr.bf16.mxu0 0
  %4204 = vmatpush1.bf16.msra.mxu0 0
  %4205 = vmatprep.subr.bf16.mxu0 0
  %4206 = vmatpush1.bf16.msra.mxu0 0
  %4207 = vmatprep.subr.bf16.mxu0 0
  %4208 = vmatpush1.bf16.msra.mxu0 0
  %4209 = vmatprep.subr.bf16.mxu0 0
  %4210 = vmatpush1.bf16.msra.mxu0 0
  %4211 = vmatprep.subr.bf16.mxu0 0
  %4212 = vmatpush1.bf16.msra.mxu0 0
  %4213 = vmatprep.subr.bf16.mxu0 0
  %4214 = vmatpush1.bf16.msra.mxu0 %v4154
  %4215 = vmatprep.subr.bf16.mxu0 0
  %4216 = vmatpush2.bf16.msra.mxu0 0
  %4217 = vmatprep.subr.bf16.mxu0 0
  %4218 = vmatpush2.bf16.msra.mxu0 0
  %4219 = vmatprep.subr.bf16.mxu0 0
  %4220 = vmatpush2.bf16.msra.mxu0 0
  %4221 = vmatprep.subr.bf16.mxu0 0
  %4222 = vmatpush2.bf16.msra.mxu0 0
  %4223 = vmatprep.subr.bf16.mxu0 0
  %4224 = vmatpush2.bf16.msra.mxu0 0
  %4225 = vmatprep.subr.bf16.mxu0 0
  %4226 = vmatpush2.bf16.msra.mxu0 0
  %4227 = vmatprep.subr.bf16.mxu0 0
  %4228 = vmatpush2.bf16.msra.mxu0 0
  %4229 = vmatprep.subr.bf16.mxu0 0
  %4230 = vmatpush2.bf16.msra.mxu0 0
  %4231 = vmatprep.mubr.bf16.mxu0 0
  %4232 = vmatmul.mubr.bf16.gmra.mxu0 %v4197
  %v4233 = vpop.f32.mrf.mxu0
  %v4234 = vadd.f32 0.0, %v4233
  %v4235 = vpop.f32.mrf.mxu0
  %v4236 = vpop.f32.mrf.mxu0
  %v4237 = vpop.f32.mrf.mxu0
  %4238 = vdwg.mxu0
  %v4240 = vsel %vm4097, %v4144, 0
  %4242 = vmatprep.subr.bf16.mxu0 0
  %4243 = vmatpush1.bf16.msra.mxu0 0
  %4244 = vmatprep.subr.bf16.mxu0 0
  %4245 = vmatpush1.bf16.msra.mxu0 0
  %4246 = vmatprep.subr.bf16.mxu0 0
  %4247 = vmatpush1.bf16.msra.mxu0 0
  %4248 = vmatprep.subr.bf16.mxu0 0
  %4249 = vmatpush1.bf16.msra.mxu0 0
  %4250 = vmatprep.subr.bf16.mxu0 0
  %4251 = vmatpush1.bf16.msra.mxu0 0
  %4252 = vmatprep.subr.bf16.mxu0 0
  %4253 = vmatpush1.bf16.msra.mxu0 0
  %4254 = vmatprep.subr.bf16.mxu0 0
  %4255 = vmatpush1.bf16.msra.mxu0 0
  %4256 = vmatprep.subr.bf16.mxu0 0
  %4257 = vmatpush1.bf16.msra.mxu0 %v4154
  %4258 = vmatprep.subr.bf16.mxu0 0
  %4259 = vmatpush2.bf16.msra.mxu0 0
  %4260 = vmatprep.subr.bf16.mxu0 0
  %4261 = vmatpush2.bf16.msra.mxu0 0
  %4262 = vmatprep.subr.bf16.mxu0 0
  %4263 = vmatpush2.bf16.msra.mxu0 0
  %4264 = vmatprep.subr.bf16.mxu0 0
  %4265 = vmatpush2.bf16.msra.mxu0 0
  %4266 = vmatprep.subr.bf16.mxu0 0
  %4267 = vmatpush2.bf16.msra.mxu0 0
  %4268 = vmatprep.subr.bf16.mxu0 0
  %4269 = vmatpush2.bf16.msra.mxu0 0
  %4270 = vmatprep.subr.bf16.mxu0 0
  %4271 = vmatpush2.bf16.msra.mxu0 0
  %4272 = vmatprep.subr.bf16.mxu0 0
  %4273 = vmatpush2.bf16.msra.mxu0 0
  %4274 = vmatprep.mubr.bf16.mxu0 0
  %4275 = vmatmul.mubr.bf16.gmra.mxu0 %v4240
  %v4276 = vpop.f32.mrf.mxu0
  %v4277 = vadd.f32 0.0, %v4276
  %v4278 = vpop.f32.mrf.mxu0
  %v4279 = vpop.f32.mrf.mxu0
  %v4280 = vpop.f32.mrf.mxu0
  %4281 = vdwg.mxu0
  %v4283 = vsel %vm4097, %v4145, 0
  %4285 = vmatprep.subr.bf16.mxu0 0
  %4286 = vmatpush1.bf16.msra.mxu0 0
  %4287 = vmatprep.subr.bf16.mxu0 0
  %4288 = vmatpush1.bf16.msra.mxu0 0
  %4289 = vmatprep.subr.bf16.mxu0 0
  %4290 = vmatpush1.bf16.msra.mxu0 0
  %4291 = vmatprep.subr.bf16.mxu0 0
  %4292 = vmatpush1.bf16.msra.mxu0 0
  %4293 = vmatprep.subr.bf16.mxu0 0
  %4294 = vmatpush1.bf16.msra.mxu0 0
  %4295 = vmatprep.subr.bf16.mxu0 0
  %4296 = vmatpush1.bf16.msra.mxu0 0
  %4297 = vmatprep.subr.bf16.mxu0 0
  %4298 = vmatpush1.bf16.msra.mxu0 0
  %4299 = vmatprep.subr.bf16.mxu0 0
  %4300 = vmatpush1.bf16.msra.mxu0 %v4154
  %4301 = vmatprep.subr.bf16.mxu0 0
  %4302 = vmatpush2.bf16.msra.mxu0 0
  %4303 = vmatprep.subr.bf16.mxu0 0
  %4304 = vmatpush2.bf16.msra.mxu0 0
  %4305 = vmatprep.subr.bf16.mxu0 0
  %4306 = vmatpush2.bf16.msra.mxu0 0
  %4307 = vmatprep.subr.bf16.mxu0 0
  %4308 = vmatpush2.bf16.msra.mxu0 0
  %4309 = vmatprep.subr.bf16.mxu0 0
  %4310 = vmatpush2.bf16.msra.mxu0 0
  %4311 = vmatprep.subr.bf16.mxu0 0
  %4312 = vmatpush2.bf16.msra.mxu0 0
  %4313 = vmatprep.subr.bf16.mxu0 0
  %4314 = vmatpush2.bf16.msra.mxu0 0
  %4315 = vmatprep.subr.bf16.mxu0 0
  %4316 = vmatpush2.bf16.msra.mxu0 0
  %4317 = vmatprep.mubr.bf16.mxu0 0
  %4318 = vmatmul.mubr.bf16.gmra.mxu0 %v4283
  %v4319 = vpop.f32.mrf.mxu0
  %v4320 = vadd.f32 0.0, %v4319
  %v4321 = vpop.f32.mrf.mxu0
  %v4322 = vpop.f32.mrf.mxu0
  %v4323 = vpop.f32.mrf.mxu0
  %4324 = vdwg.mxu0
  %v4325 = vmul.f32 %v4191, %v3895
  %v4326 = vmul.f32 %v4234, %v3899
  %v4327 = vmul.f32 %v4277, %v3903
  %v4328 = vmul.f32 %v4320, %v3907
  %v4329 = vsel %vm623, %v4325, 0.0
  %v4330 = vsel %vm623, %v4326, 0.0
  %v4331 = vadd.f32 %v4329, %v4330
  %v4332 = vsel %vm623, %v4327, 0.0
  %v4333 = vadd.f32 %v4331, %v4332
  %v4334 = vsel %vm623, %v4328, 0.0
  %v4335 = vadd.f32 %v4333, %v4334
  %v4336 = vld [vmem:[%s13] sm:$0xf]
  %v4337 = vld [vmem:[%s13 + $0x4] sm:$0xf]
  %v4338 = vld [vmem:[%s13 + $0x8] sm:$0xf]
  %v4339 = vld [vmem:[%s13 + $0xc] sm:$0xf]
  %v4340 = vld [vmem:[%s13 + $0x10] sm:$0xf]
  %v4341 = vld [vmem:[%s13 + $0x14] sm:$0xf]
  %v4342 = vld [vmem:[%s13 + $0x18] sm:$0xf]
  %v4343 = vld [vmem:[%s13 + $0x1c] sm:$0xf]
  %v4344 = vld [vmem:[%s13 + $0x20] sm:$0xf]
  %v4345 = vld [vmem:[%s13 + $0x24] sm:$0xf]
  %v4346 = vld [vmem:[%s13 + $0x28] sm:$0xf]
  %v4347 = vld [vmem:[%s13 + $0x2c] sm:$0xf]
  %v4348 = vld [vmem:[%s13 + $0x30] sm:$0xf]
  %v4349 = vld [vmem:[%s13 + $0x34] sm:$0xf]
  %v4350 = vld [vmem:[%s13 + $0x38] sm:$0xf]
  %v4351 = vld [vmem:[%s13 + $0x3c] sm:$0xf]
  %v4352 = vpack.c.bf16 %v4335, %v4335
  %v4369 = vunpack.c.l.b16 %v4336
  %v4370 = vunpack.c.l.b16 %v4337
  %v4371 = vunpack.c.l.b16 %v4338
  %v4372 = vunpack.c.l.b16 %v4339
  %v4373 = vunpack.c.l.b16 %v4340
  %v4374 = vunpack.c.l.b16 %v4341
  %v4375 = vunpack.c.l.b16 %v4342
  %v4376 = vunpack.c.l.b16 %v4343
  %v4377 = vunpack.c.l.b16 %v4344
  %v4378 = vunpack.c.l.b16 %v4345
  %v4379 = vunpack.c.l.b16 %v4346
  %v4380 = vunpack.c.l.b16 %v4347
  %v4381 = vunpack.c.l.b16 %v4348
  %v4382 = vunpack.c.l.b16 %v4349
  %v4383 = vunpack.c.l.b16 %v4350
  %v4384 = vunpack.c.l.b16 %v4351
  %v4385 = vpack.c.b16 %v4370, %v4369
  %v4386 = vpack.c.b16 %v4372, %v4371
  %v4387 = vpack.c.b16 %v4374, %v4373
  %v4388 = vpack.c.b16 %v4376, %v4375
  %v4389 = vpack.c.b16 %v4378, %v4377
  %v4390 = vpack.c.b16 %v4380, %v4379
  %v4391 = vpack.c.b16 %v4382, %v4381
  %v4392 = vpack.c.b16 %v4384, %v4383
  %v4394 = vsel %vm4097, %v4385, 0
  %v4397 = vsel %vm4097, %v4386, 0
  %v4400 = vsel %vm4097, %v4387, 0
  %v4403 = vsel %vm4097, %v4388, 0
  %v4406 = vsel %vm4097, %v4389, 0
  %v4409 = vsel %vm4097, %v4390, 0
  %v4412 = vsel %vm4097, %v4391, 0
  %v4415 = vsel %vm4097, %v4392, 0
  %v4418 = vsel %vm4152, %v4352, 0
  %4420 = vmatprep.subr.bf16.mxu0 0
  %4421 = vmatpush1.bf16.msra.mxu0 0
  %4422 = vmatprep.subr.bf16.mxu0 0
  %4423 = vmatpush1.bf16.msra.mxu0 0
  %4424 = vmatprep.subr.bf16.mxu0 0
  %4425 = vmatpush1.bf16.msra.mxu0 0
  %4426 = vmatprep.subr.bf16.mxu0 0
  %4427 = vmatpush1.bf16.msra.mxu0 0
  %4428 = vmatprep.subr.bf16.mxu0 0
  %4429 = vmatpush1.bf16.msra.mxu0 0
  %4430 = vmatprep.subr.bf16.mxu0 0
  %4431 = vmatpush1.bf16.msra.mxu0 0
  %4432 = vmatprep.subr.bf16.mxu0 0
  %4433 = vmatpush1.bf16.msra.mxu0 0
  %4434 = vmatprep.subr.bf16.mxu0 0
  %4435 = vmatpush1.bf16.msra.mxu0 %v4418
  %4436 = vmatprep.subr.bf16.mxu0 0
  %4437 = vmatpush2.bf16.msra.mxu0 0
  %4438 = vmatprep.subr.bf16.mxu0 0
  %4439 = vmatpush2.bf16.msra.mxu0 0
  %4440 = vmatprep.subr.bf16.mxu0 0
  %4441 = vmatpush2.bf16.msra.mxu0 0
  %4442 = vmatprep.subr.bf16.mxu0 0
  %4443 = vmatpush2.bf16.msra.mxu0 0
  %4444 = vmatprep.subr.bf16.mxu0 0
  %4445 = vmatpush2.bf16.msra.mxu0 0
  %4446 = vmatprep.subr.bf16.mxu0 0
  %4447 = vmatpush2.bf16.msra.mxu0 0
  %4448 = vmatprep.subr.bf16.mxu0 0
  %4449 = vmatpush2.bf16.msra.mxu0 0
  %4450 = vmatprep.subr.bf16.mxu0 0
  %4451 = vmatpush2.bf16.msra.mxu0 0
  %4452 = vmatprep.mubr.bf16.mxu0 0
  %4453 = vmatmul.mubr.bf16.gmra.mxu0 %v4394
  %v4454 = vpop.f32.mrf.mxu0
  %v4455 = vadd.f32 0.0, %v4454
  %v4456 = vpop.f32.mrf.mxu0
  %v4457 = vpop.f32.mrf.mxu0
  %v4458 = vadd.f32 0.0, %v4457
  %v4459 = vpop.f32.mrf.mxu0
  %4460 = vmatprep.mubr.bf16.mxu0 0
  %4461 = vmatmul.mubr.bf16.gmra.mxu0 %v4397
  %v4462 = vpop.f32.mrf.mxu0
  %v4463 = vadd.f32 0.0, %v4462
  %v4464 = vpop.f32.mrf.mxu0
  %v4465 = vpop.f32.mrf.mxu0
  %v4466 = vadd.f32 0.0, %v4465
  %v4467 = vpop.f32.mrf.mxu0
  %4468 = vmatprep.mubr.bf16.mxu0 0
  %4469 = vmatmul.mubr.bf16.gmra.mxu0 %v4400
  %v4470 = vpop.f32.mrf.mxu0
  %v4471 = vadd.f32 0.0, %v4470
  %v4472 = vpop.f32.mrf.mxu0
  %v4473 = vpop.f32.mrf.mxu0
  %v4474 = vadd.f32 0.0, %v4473
  %v4475 = vpop.f32.mrf.mxu0
  %4476 = vmatprep.mubr.bf16.mxu0 0
  %4477 = vmatmul.mubr.bf16.gmra.mxu0 %v4403
  %v4478 = vpop.f32.mrf.mxu0
  %v4479 = vadd.f32 0.0, %v4478
  %v4480 = vpop.f32.mrf.mxu0
  %v4481 = vpop.f32.mrf.mxu0
  %v4482 = vadd.f32 0.0, %v4481
  %v4483 = vpop.f32.mrf.mxu0
  %4484 = vmatprep.mubr.bf16.mxu0 0
  %4485 = vmatmul.mubr.bf16.gmra.mxu0 %v4406
  %v4486 = vpop.f32.mrf.mxu0
  %v4487 = vadd.f32 0.0, %v4486
  %v4488 = vpop.f32.mrf.mxu0
  %v4489 = vpop.f32.mrf.mxu0
  %v4490 = vadd.f32 0.0, %v4489
  %v4491 = vpop.f32.mrf.mxu0
  %4492 = vmatprep.mubr.bf16.mxu0 0
  %4493 = vmatmul.mubr.bf16.gmra.mxu0 %v4409
  %v4494 = vpop.f32.mrf.mxu0
  %v4495 = vadd.f32 0.0, %v4494
  %v4496 = vpop.f32.mrf.mxu0
  %v4497 = vpop.f32.mrf.mxu0
  %v4498 = vadd.f32 0.0, %v4497
  %v4499 = vpop.f32.mrf.mxu0
  %4500 = vmatprep.mubr.bf16.mxu0 0
  %4501 = vmatmul.mubr.bf16.gmra.mxu0 %v4412
  %v4502 = vpop.f32.mrf.mxu0
  %v4503 = vadd.f32 0.0, %v4502
  %v4504 = vpop.f32.mrf.mxu0
  %v4505 = vpop.f32.mrf.mxu0
  %v4506 = vadd.f32 0.0, %v4505
  %v4507 = vpop.f32.mrf.mxu0
  %4508 = vmatprep.mubr.bf16.mxu0 0
  %4509 = vmatmul.mubr.bf16.gmra.mxu0 %v4415
  %v4510 = vpop.f32.mrf.mxu0
  %v4511 = vadd.f32 0.0, %v4510
  %v4512 = vpop.f32.mrf.mxu0
  %v4513 = vpop.f32.mrf.mxu0
  %v4514 = vadd.f32 0.0, %v4513
  %v4515 = vpop.f32.mrf.mxu0
  %4516 = vdwg.mxu0
  %v4517 = vadd.f32 %v3458, %v4455
  %v4518 = vadd.f32 %v3461, %v4458
  %v4519 = vadd.f32 %v3502, %v4463
  %v4520 = vadd.f32 %v3505, %v4466
  %v4521 = vadd.f32 %v3546, %v4471
  %v4522 = vadd.f32 %v3549, %v4474
  %v4523 = vadd.f32 %v3590, %v4479
  %v4524 = vadd.f32 %v3593, %v4482
  %v4525 = vadd.f32 %v3634, %v4487
  %v4526 = vadd.f32 %v3637, %v4490
  %v4527 = vadd.f32 %v3678, %v4495
  %v4528 = vadd.f32 %v3681, %v4498
  %v4529 = vadd.f32 %v3722, %v4503
  %v4530 = vadd.f32 %v3725, %v4506
  %v4531 = vadd.f32 %v3766, %v4511
  %v4532 = vadd.f32 %v3769, %v4514
  %v4533 = vld [vmem:[%s45] sm:$0x1]
  %v4534 = vld [vmem:[%s47] sm:$0x1]
  %v4535 = vsel %vm623, %v4517, 0.0
  %4536 = vadd.xlane.f32.xlu0 %v4535
  %v4537 = vpop.xlane.xlu0 %4536
  %v4538 = vsel %vm623, %v4518, 0.0
  %4539 = vadd.xlane.f32.xlu0 %v4538
  %v4540 = vpop.xlane.xlu0 %4539
  %v4541 = vsel %vm623, %v4519, 0.0
  %4542 = vadd.xlane.f32.xlu0 %v4541
  %v4543 = vpop.xlane.xlu0 %4542
  %v4544 = vsel %vm623, %v4520, 0.0
  %4545 = vadd.xlane.f32.xlu0 %v4544
  %v4546 = vpop.xlane.xlu0 %4545
  %v4547 = vsel %vm623, %v4521, 0.0
  %4548 = vadd.xlane.f32.xlu0 %v4547
  %v4549 = vpop.xlane.xlu0 %4548
  %v4550 = vsel %vm623, %v4522, 0.0
  %4551 = vadd.xlane.f32.xlu0 %v4550
  %v4552 = vpop.xlane.xlu0 %4551
  %v4553 = vsel %vm623, %v4523, 0.0
  %4554 = vadd.xlane.f32.xlu0 %v4553
  %v4555 = vpop.xlane.xlu0 %4554
  %v4556 = vsel %vm623, %v4524, 0.0
  %4557 = vadd.xlane.f32.xlu0 %v4556
  %v4558 = vpop.xlane.xlu0 %4557
  %v4559 = vsel %vm623, %v4525, 0.0
  %4560 = vadd.xlane.f32.xlu0 %v4559
  %v4561 = vpop.xlane.xlu0 %4560
  %v4562 = vsel %vm623, %v4526, 0.0
  %4563 = vadd.xlane.f32.xlu0 %v4562
  %v4564 = vpop.xlane.xlu0 %4563
  %v4565 = vsel %vm623, %v4527, 0.0
  %4566 = vadd.xlane.f32.xlu0 %v4565
  %v4567 = vpop.xlane.xlu0 %4566
  %v4568 = vsel %vm623, %v4528, 0.0
  %4569 = vadd.xlane.f32.xlu0 %v4568
  %v4570 = vpop.xlane.xlu0 %4569
  %v4571 = vsel %vm623, %v4529, 0.0
  %4572 = vadd.xlane.f32.xlu0 %v4571
  %v4573 = vpop.xlane.xlu0 %4572
  %v4574 = vsel %vm623, %v4530, 0.0
  %4575 = vadd.xlane.f32.xlu0 %v4574
  %v4576 = vpop.xlane.xlu0 %4575
  %v4577 = vsel %vm623, %v4531, 0.0
  %4578 = vadd.xlane.f32.xlu0 %v4577
  %v4579 = vpop.xlane.xlu0 %4578
  %v4580 = vsel %vm623, %v4532, 0.0
  %4581 = vadd.xlane.f32.xlu0 %v4580
  %v4582 = vpop.xlane.xlu0 %4581
  %v4583 = vmul.f32 %v4537, %v816
  %v4584 = vmul.f32 %v4540, %v816
  %v4585 = vmul.f32 %v4543, %v816
  %v4586 = vmul.f32 %v4546, %v816
  %v4587 = vmul.f32 %v4549, %v816
  %v4588 = vmul.f32 %v4552, %v816
  %v4589 = vmul.f32 %v4555, %v816
  %v4590 = vmul.f32 %v4558, %v816
  %v4591 = vmul.f32 %v4561, %v816
  %v4592 = vmul.f32 %v4564, %v816
  %v4593 = vmul.f32 %v4567, %v816
  %v4594 = vmul.f32 %v4570, %v816
  %v4595 = vmul.f32 %v4573, %v816
  %v4596 = vmul.f32 %v4576, %v816
  %v4597 = vmul.f32 %v4579, %v816
  %v4598 = vmul.f32 %v4582, %v816
  %v4599 = vsub.f32 %v4517, %v4583
  %v4600 = vsub.f32 %v4518, %v4584
  %v4601 = vsub.f32 %v4519, %v4585
  %v4602 = vsub.f32 %v4520, %v4586
  %v4603 = vsub.f32 %v4521, %v4587
  %v4604 = vsub.f32 %v4522, %v4588
  %v4605 = vsub.f32 %v4523, %v4589
  %v4606 = vsub.f32 %v4524, %v4590
  %v4607 = vsub.f32 %v4525, %v4591
  %v4608 = vsub.f32 %v4526, %v4592
  %v4609 = vsub.f32 %v4527, %v4593
  %v4610 = vsub.f32 %v4528, %v4594
  %v4611 = vsub.f32 %v4529, %v4595
  %v4612 = vsub.f32 %v4530, %v4596
  %v4613 = vsub.f32 %v4531, %v4597
  %v4614 = vsub.f32 %v4532, %v4598
  %v4615 = vmul.f32 %v4599, %v4599
  %v4616 = vmul.f32 %v4600, %v4600
  %v4617 = vmul.f32 %v4601, %v4601
  %v4618 = vmul.f32 %v4602, %v4602
  %v4619 = vmul.f32 %v4603, %v4603
  %v4620 = vmul.f32 %v4604, %v4604
  %v4621 = vmul.f32 %v4605, %v4605
  %v4622 = vmul.f32 %v4606, %v4606
  %v4623 = vmul.f32 %v4607, %v4607
  %v4624 = vmul.f32 %v4608, %v4608
  %v4625 = vmul.f32 %v4609, %v4609
  %v4626 = vmul.f32 %v4610, %v4610
  %v4627 = vmul.f32 %v4611, %v4611
  %v4628 = vmul.f32 %v4612, %v4612
  %v4629 = vmul.f32 %v4613, %v4613
  %v4630 = vmul.f32 %v4614, %v4614
  %v4631 = vsel %vm623, %v4615, 0.0
  %4632 = vadd.xlane.f32.xlu0 %v4631
  %v4633 = vpop.xlane.xlu0 %4632
  %v4634 = vsel %vm623, %v4616, 0.0
  %4635 = vadd.xlane.f32.xlu0 %v4634
  %v4636 = vpop.xlane.xlu0 %4635
  %v4637 = vsel %vm623, %v4617, 0.0
  %4638 = vadd.xlane.f32.xlu0 %v4637
  %v4639 = vpop.xlane.xlu0 %4638
  %v4640 = vsel %vm623, %v4618, 0.0
  %4641 = vadd.xlane.f32.xlu0 %v4640
  %v4642 = vpop.xlane.xlu0 %4641
  %v4643 = vsel %vm623, %v4619, 0.0
  %4644 = vadd.xlane.f32.xlu0 %v4643
  %v4645 = vpop.xlane.xlu0 %4644
  %v4646 = vsel %vm623, %v4620, 0.0
  %4647 = vadd.xlane.f32.xlu0 %v4646
  %v4648 = vpop.xlane.xlu0 %4647
  %v4649 = vsel %vm623, %v4621, 0.0
  %4650 = vadd.xlane.f32.xlu0 %v4649
  %v4651 = vpop.xlane.xlu0 %4650
  %v4652 = vsel %vm623, %v4622, 0.0
  %4653 = vadd.xlane.f32.xlu0 %v4652
  %v4654 = vpop.xlane.xlu0 %4653
  %v4655 = vsel %vm623, %v4623, 0.0
  %4656 = vadd.xlane.f32.xlu0 %v4655
  %v4657 = vpop.xlane.xlu0 %4656
  %v4658 = vsel %vm623, %v4624, 0.0
  %4659 = vadd.xlane.f32.xlu0 %v4658
  %v4660 = vpop.xlane.xlu0 %4659
  %v4661 = vsel %vm623, %v4625, 0.0
  %4662 = vadd.xlane.f32.xlu0 %v4661
  %v4663 = vpop.xlane.xlu0 %4662
  %v4664 = vsel %vm623, %v4626, 0.0
  %4665 = vadd.xlane.f32.xlu0 %v4664
  %v4666 = vpop.xlane.xlu0 %4665
  %v4667 = vsel %vm623, %v4627, 0.0
  %4668 = vadd.xlane.f32.xlu0 %v4667
  %v4669 = vpop.xlane.xlu0 %4668
  %v4670 = vsel %vm623, %v4628, 0.0
  %4671 = vadd.xlane.f32.xlu0 %v4670
  %v4672 = vpop.xlane.xlu0 %4671
  %v4673 = vsel %vm623, %v4629, 0.0
  %4674 = vadd.xlane.f32.xlu0 %v4673
  %v4675 = vpop.xlane.xlu0 %4674
  %v4676 = vsel %vm623, %v4630, 0.0
  %4677 = vadd.xlane.f32.xlu0 %v4676
  %v4678 = vpop.xlane.xlu0 %4677
  %v4679 = vmul.f32 %v4633, %v816
  %v4680 = vmul.f32 %v4636, %v816
  %v4681 = vmul.f32 %v4639, %v816
  %v4682 = vmul.f32 %v4642, %v816
  %v4683 = vmul.f32 %v4645, %v816
  %v4684 = vmul.f32 %v4648, %v816
  %v4685 = vmul.f32 %v4651, %v816
  %v4686 = vmul.f32 %v4654, %v816
  %v4687 = vmul.f32 %v4657, %v816
  %v4688 = vmul.f32 %v4660, %v816
  %v4689 = vmul.f32 %v4663, %v816
  %v4690 = vmul.f32 %v4666, %v816
  %v4691 = vmul.f32 %v4669, %v816
  %v4692 = vmul.f32 %v4672, %v816
  %v4693 = vmul.f32 %v4675, %v816
  %v4694 = vmul.f32 %v4678, %v816
  %v4695 = vadd.f32 %v4679, 1e-05
  %v4696 = vadd.f32 %v4680, 1e-05
  %v4697 = vadd.f32 %v4681, 1e-05
  %v4698 = vadd.f32 %v4682, 1e-05
  %v4699 = vadd.f32 %v4683, 1e-05
  %v4700 = vadd.f32 %v4684, 1e-05
  %v4701 = vadd.f32 %v4685, 1e-05
  %v4702 = vadd.f32 %v4686, 1e-05
  %v4703 = vadd.f32 %v4687, 1e-05
  %v4704 = vadd.f32 %v4688, 1e-05
  %v4705 = vadd.f32 %v4689, 1e-05
  %v4706 = vadd.f32 %v4690, 1e-05
  %v4707 = vadd.f32 %v4691, 1e-05
  %v4708 = vadd.f32 %v4692, 1e-05
  %v4709 = vadd.f32 %v4693, 1e-05
  %v4710 = vadd.f32 %v4694, 1e-05
  %v4711 = vrsqrt.pop %v4695
  %v4712 = vrsqrt.pop %v4696
  %v4713 = vrsqrt.pop %v4697
  %v4714 = vrsqrt.pop %v4698
  %v4715 = vrsqrt.pop %v4699
  %v4716 = vrsqrt.pop %v4700
  %v4717 = vrsqrt.pop %v4701
  %v4718 = vrsqrt.pop %v4702
  %v4719 = vrsqrt.pop %v4703
  %v4720 = vrsqrt.pop %v4704
  %v4721 = vrsqrt.pop %v4705
  %v4722 = vrsqrt.pop %v4706
  %v4723 = vrsqrt.pop %v4707
  %v4724 = vrsqrt.pop %v4708
  %v4725 = vrsqrt.pop %v4709
  %v4726 = vrsqrt.pop %v4710
  %v4727 = vmul.f32 %v4599, %v4711
  %v4728 = vmul.f32 %v4600, %v4712
  %v4729 = vmul.f32 %v4601, %v4713
  %v4730 = vmul.f32 %v4602, %v4714
  %v4731 = vmul.f32 %v4603, %v4715
  %v4732 = vmul.f32 %v4604, %v4716
  %v4733 = vmul.f32 %v4605, %v4717
  %v4734 = vmul.f32 %v4606, %v4718
  %v4735 = vmul.f32 %v4607, %v4719
  %v4736 = vmul.f32 %v4608, %v4720
  %v4737 = vmul.f32 %v4609, %v4721
  %v4738 = vmul.f32 %v4610, %v4722
  %v4739 = vmul.f32 %v4611, %v4723
  %v4740 = vmul.f32 %v4612, %v4724
  %v4741 = vmul.f32 %v4613, %v4725
  %v4742 = vmul.f32 %v4614, %v4726
  %v4744 = vlaneseq
  %v4745 = vshrl.u32 %v4744, 7
  %v4746 = vsub.s32 0, %v4745
  %v4747 = vrot.slane %v4533, %v4746
  %v4749 = vmul.f32 %v4727, %v4747
  %v4750 = vmul.f32 %v4728, %v4747
  %v4751 = vmul.f32 %v4729, %v4747
  %v4752 = vmul.f32 %v4730, %v4747
  %v4753 = vmul.f32 %v4731, %v4747
  %v4754 = vmul.f32 %v4732, %v4747
  %v4755 = vmul.f32 %v4733, %v4747
  %v4756 = vmul.f32 %v4734, %v4747
  %v4757 = vmul.f32 %v4735, %v4747
  %v4758 = vmul.f32 %v4736, %v4747
  %v4759 = vmul.f32 %v4737, %v4747
  %v4760 = vmul.f32 %v4738, %v4747
  %v4761 = vmul.f32 %v4739, %v4747
  %v4762 = vmul.f32 %v4740, %v4747
  %v4763 = vmul.f32 %v4741, %v4747
  %v4764 = vmul.f32 %v4742, %v4747
  %v4766 = vlaneseq
  %v4767 = vshrl.u32 %v4766, 7
  %v4768 = vsub.s32 0, %v4767
  %v4769 = vrot.slane %v4534, %v4768
  %v4771 = vadd.f32 %v4749, %v4769
  %v4772 = vadd.f32 %v4750, %v4769
  %v4773 = vadd.f32 %v4751, %v4769
  %v4774 = vadd.f32 %v4752, %v4769
  %v4775 = vadd.f32 %v4753, %v4769
  %v4776 = vadd.f32 %v4754, %v4769
  %v4777 = vadd.f32 %v4755, %v4769
  %v4778 = vadd.f32 %v4756, %v4769
  %v4779 = vadd.f32 %v4757, %v4769
  %v4780 = vadd.f32 %v4758, %v4769
  %v4781 = vadd.f32 %v4759, %v4769
  %v4782 = vadd.f32 %v4760, %v4769
  %v4783 = vadd.f32 %v4761, %v4769
  %v4784 = vadd.f32 %v4762, %v4769
  %v4785 = vadd.f32 %v4763, %v4769
  %v4786 = vadd.f32 %v4764, %v4769
  %v4787 = vld [vmem:[%s49] sm:$0xf]
  %v4788 = vld [vmem:[%s49 + $0x4] sm:$0xf]
  %v4789 = vld [vmem:[%s49 + $0x8] sm:$0xf]
  %v4790 = vld [vmem:[%s49 + $0xc] sm:$0xf]
  %v4791 = vpack.c.bf16 %v4772, %v4771
  %v4792 = vpack.c.bf16 %v4774, %v4773
  %v4793 = vpack.c.bf16 %v4776, %v4775
  %v4794 = vpack.c.bf16 %v4778, %v4777
  %v4795 = vpack.c.bf16 %v4780, %v4779
  %v4796 = vpack.c.bf16 %v4782, %v4781
  %v4797 = vpack.c.bf16 %v4784, %v4783
  %v4798 = vpack.c.bf16 %v4786, %v4785
  %v4799 = vld [vmem:[%s51] sm:$0x1]
  %v4801 = vlaneseq
  %v4802 = vshrl.u32 %v4801, 7
  %v4803 = vsub.s32 0, %v4802
  %v4804 = vrot.slane %v4799, %v4803
  %v4810 = vunpack.c.l.b16 %v4787
  %v4811 = vunpack.c.l.b16 %v4788
  %v4812 = vunpack.c.l.b16 %v4789
  %v4813 = vunpack.c.l.b16 %v4790
  %v4814 = vpack.c.b16 %v4811, %v4810
  %v4815 = vpack.c.b16 %v4813, %v4812
  %v4819 = vsel %vm623, %v4791, 0
  %v4822 = vsel %vm623, %v4792, 0
  %v4825 = vsel %vm623, %v4793, 0
  %v4828 = vsel %vm623, %v4794, 0
  %v4831 = vsel %vm623, %v4795, 0
  %v4834 = vsel %vm623, %v4796, 0
  %v4837 = vsel %vm623, %v4797, 0
  %v4840 = vsel %vm623, %v4798, 0
  %4842 = vmatprep.subr.bf16.mxu0 0
  %4843 = vmatpush1.bf16.msra.mxu0 0
  %4844 = vmatprep.subr.bf16.mxu0 0
  %4845 = vmatpush1.bf16.msra.mxu0 0
  %4846 = vmatprep.subr.bf16.mxu0 0
  %4847 = vmatpush1.bf16.msra.mxu0 0
  %4848 = vmatprep.subr.bf16.mxu0 0
  %4849 = vmatpush1.bf16.msra.mxu0 0
  %4850 = vmatprep.subr.bf16.mxu0 0
  %4851 = vmatpush1.bf16.msra.mxu0 0
  %4852 = vmatprep.subr.bf16.mxu0 0
  %4853 = vmatpush1.bf16.msra.mxu0 0
  %4854 = vmatprep.subr.bf16.mxu0 0
  %4855 = vmatpush1.bf16.msra.mxu0 %v4815
  %4856 = vmatprep.subr.bf16.mxu0 0
  %4857 = vmatpush1.bf16.msra.mxu0 %v4814
  %4858 = vmatprep.subr.bf16.mxu0 0
  %4859 = vmatpush2.bf16.msra.mxu0 0
  %4860 = vmatprep.subr.bf16.mxu0 0
  %4861 = vmatpush2.bf16.msra.mxu0 0
  %4862 = vmatprep.subr.bf16.mxu0 0
  %4863 = vmatpush2.bf16.msra.mxu0 0
  %4864 = vmatprep.subr.bf16.mxu0 0
  %4865 = vmatpush2.bf16.msra.mxu0 0
  %4866 = vmatprep.subr.bf16.mxu0 0
  %4867 = vmatpush2.bf16.msra.mxu0 0
  %4868 = vmatprep.subr.bf16.mxu0 0
  %4869 = vmatpush2.bf16.msra.mxu0 0
  %4870 = vmatprep.subr.bf16.mxu0 0
  %4871 = vmatpush2.bf16.msra.mxu0 0
  %4872 = vmatprep.subr.bf16.mxu0 0
  %4873 = vmatpush2.bf16.msra.mxu0 0
  %4874 = vmatprep.mubr.bf16.mxu0 0
  %4875 = vmatmul.mubr.bf16.gmra.mxu0 %v4819
  %v4876 = vpop.f32.mrf.mxu0
  %v4877 = vadd.f32 %v4804, %v4876
  %v4878 = vpop.f32.mrf.mxu0
  %v4879 = vpop.f32.mrf.mxu0
  %v4880 = vadd.f32 %v4804, %v4879
  %v4881 = vpop.f32.mrf.mxu0
  %4882 = vmatprep.mubr.bf16.mxu0 0
  %4883 = vmatmul.mubr.bf16.gmra.mxu0 %v4822
  %v4884 = vpop.f32.mrf.mxu0
  %v4885 = vadd.f32 %v4804, %v4884
  %v4886 = vpop.f32.mrf.mxu0
  %v4887 = vpop.f32.mrf.mxu0
  %v4888 = vadd.f32 %v4804, %v4887
  %v4889 = vpop.f32.mrf.mxu0
  %4890 = vmatprep.mubr.bf16.mxu0 0
  %4891 = vmatmul.mubr.bf16.gmra.mxu0 %v4825
  %v4892 = vpop.f32.mrf.mxu0
  %v4893 = vadd.f32 %v4804, %v4892
  %v4894 = vpop.f32.mrf.mxu0
  %v4895 = vpop.f32.mrf.mxu0
  %v4896 = vadd.f32 %v4804, %v4895
  %v4897 = vpop.f32.mrf.mxu0
  %4898 = vmatprep.mubr.bf16.mxu0 0
  %4899 = vmatmul.mubr.bf16.gmra.mxu0 %v4828
  %v4900 = vpop.f32.mrf.mxu0
  %v4901 = vadd.f32 %v4804, %v4900
  %v4902 = vpop.f32.mrf.mxu0
  %v4903 = vpop.f32.mrf.mxu0
  %v4904 = vadd.f32 %v4804, %v4903
  %v4905 = vpop.f32.mrf.mxu0
  %4906 = vmatprep.mubr.bf16.mxu0 0
  %4907 = vmatmul.mubr.bf16.gmra.mxu0 %v4831
  %v4908 = vpop.f32.mrf.mxu0
  %v4909 = vadd.f32 %v4804, %v4908
  %v4910 = vpop.f32.mrf.mxu0
  %v4911 = vpop.f32.mrf.mxu0
  %v4912 = vadd.f32 %v4804, %v4911
  %v4913 = vpop.f32.mrf.mxu0
  %4914 = vmatprep.mubr.bf16.mxu0 0
  %4915 = vmatmul.mubr.bf16.gmra.mxu0 %v4834
  %v4916 = vpop.f32.mrf.mxu0
  %v4917 = vadd.f32 %v4804, %v4916
  %v4918 = vpop.f32.mrf.mxu0
  %v4919 = vpop.f32.mrf.mxu0
  %v4920 = vadd.f32 %v4804, %v4919
  %v4921 = vpop.f32.mrf.mxu0
  %4922 = vmatprep.mubr.bf16.mxu0 0
  %4923 = vmatmul.mubr.bf16.gmra.mxu0 %v4837
  %v4924 = vpop.f32.mrf.mxu0
  %v4925 = vadd.f32 %v4804, %v4924
  %v4926 = vpop.f32.mrf.mxu0
  %v4927 = vpop.f32.mrf.mxu0
  %v4928 = vadd.f32 %v4804, %v4927
  %v4929 = vpop.f32.mrf.mxu0
  %4930 = vmatprep.mubr.bf16.mxu0 0
  %4931 = vmatmul.mubr.bf16.gmra.mxu0 %v4840
  %v4932 = vpop.f32.mrf.mxu0
  %v4933 = vadd.f32 %v4804, %v4932
  %v4934 = vpop.f32.mrf.mxu0
  %v4935 = vpop.f32.mrf.mxu0
  %v4936 = vadd.f32 %v4804, %v4935
  %v4937 = vpop.f32.mrf.mxu0
  %4938 = vdwg.mxu0
  %v4939 = vmul.f32 %v4877, 0.5
  %v4940 = vmul.f32 %v4880, 0.5
  %v4941 = vmul.f32 %v4885, 0.5
  %v4942 = vmul.f32 %v4888, 0.5
  %v4943 = vmul.f32 %v4893, 0.5
  %v4944 = vmul.f32 %v4896, 0.5
  %v4945 = vmul.f32 %v4901, 0.5
  %v4946 = vmul.f32 %v4904, 0.5
  %v4947 = vmul.f32 %v4909, 0.5
  %v4948 = vmul.f32 %v4912, 0.5
  %v4949 = vmul.f32 %v4917, 0.5
  %v4950 = vmul.f32 %v4920, 0.5
  %v4951 = vmul.f32 %v4925, 0.5
  %v4952 = vmul.f32 %v4928, 0.5
  %v4953 = vmul.f32 %v4933, 0.5
  %v4954 = vmul.f32 %v4936, 0.5
  %v4955 = vmul.f32 %v4877, 0.70710677
  %v4956 = vmul.f32 %v4880, 0.70710677
  %v4957 = vmul.f32 %v4885, 0.70710677
  %v4958 = vmul.f32 %v4888, 0.70710677
  %v4959 = vmul.f32 %v4893, 0.70710677
  %v4960 = vmul.f32 %v4896, 0.70710677
  %v4961 = vmul.f32 %v4901, 0.70710677
  %v4962 = vmul.f32 %v4904, 0.70710677
  %v4963 = vmul.f32 %v4909, 0.70710677
  %v4964 = vmul.f32 %v4912, 0.70710677
  %v4965 = vmul.f32 %v4917, 0.70710677
  %v4966 = vmul.f32 %v4920, 0.70710677
  %v4967 = vmul.f32 %v4925, 0.70710677
  %v4968 = vmul.f32 %v4928, 0.70710677
  %v4969 = vmul.f32 %v4933, 0.70710677
  %v4970 = vmul.f32 %v4936, 0.70710677
  %v4971 = verf.f32.pop %v4955
  %v4972 = verf.f32.pop %v4956
  %v4973 = verf.f32.pop %v4957
  %v4974 = verf.f32.pop %v4958
  %v4975 = verf.f32.pop %v4959
  %v4976 = verf.f32.pop %v4960
  %v4977 = verf.f32.pop %v4961
  %v4978 = verf.f32.pop %v4962
  %v4979 = verf.f32.pop %v4963
  %v4980 = verf.f32.pop %v4964
  %v4981 = verf.f32.pop %v4965
  %v4982 = verf.f32.pop %v4966
  %v4983 = verf.f32.pop %v4967
  %v4984 = verf.f32.pop %v4968
  %v4985 = verf.f32.pop %v4969
  %v4986 = verf.f32.pop %v4970
  %v4987 = vadd.f32 %v4971, 1.0
  %v4988 = vadd.f32 %v4972, 1.0
  %v4989 = vadd.f32 %v4973, 1.0
  %v4990 = vadd.f32 %v4974, 1.0
  %v4991 = vadd.f32 %v4975, 1.0
  %v4992 = vadd.f32 %v4976, 1.0
  %v4993 = vadd.f32 %v4977, 1.0
  %v4994 = vadd.f32 %v4978, 1.0
  %v4995 = vadd.f32 %v4979, 1.0
  %v4996 = vadd.f32 %v4980, 1.0
  %v4997 = vadd.f32 %v4981, 1.0
  %v4998 = vadd.f32 %v4982, 1.0
  %v4999 = vadd.f32 %v4983, 1.0
  %v5000 = vadd.f32 %v4984, 1.0
  %v5001 = vadd.f32 %v4985, 1.0
  %v5002 = vadd.f32 %v4986, 1.0
  %v5003 = vmul.f32 %v4939, %v4987
  %v5004 = vmul.f32 %v4940, %v4988
  %v5005 = vmul.f32 %v4941, %v4989
  %v5006 = vmul.f32 %v4942, %v4990
  %v5007 = vmul.f32 %v4943, %v4991
  %v5008 = vmul.f32 %v4944, %v4992
  %v5009 = vmul.f32 %v4945, %v4993
  %v5010 = vmul.f32 %v4946, %v4994
  %v5011 = vmul.f32 %v4947, %v4995
  %v5012 = vmul.f32 %v4948, %v4996
  %v5013 = vmul.f32 %v4949, %v4997
  %v5014 = vmul.f32 %v4950, %v4998
  %v5015 = vmul.f32 %v4951, %v4999
  %v5016 = vmul.f32 %v4952, %v5000
  %v5017 = vmul.f32 %v4953, %v5001
  %v5018 = vmul.f32 %v4954, %v5002
  %v5019 = vld [vmem:[%s53] sm:$0xf]
  %v5020 = vld [vmem:[%s53 + $0x4] sm:$0xf]
  %v5021 = vld [vmem:[%s53 + $0x8] sm:$0xf]
  %v5022 = vld [vmem:[%s53 + $0xc] sm:$0xf]
  %v5023 = vld [vmem:[%s53 + $0x10] sm:$0xf]
  %v5024 = vld [vmem:[%s53 + $0x14] sm:$0xf]
  %v5025 = vld [vmem:[%s53 + $0x18] sm:$0xf]
  %v5026 = vld [vmem:[%s53 + $0x1c] sm:$0xf]
  %v5027 = vpack.c.bf16 %v5004, %v5003
  %v5028 = vpack.c.bf16 %v5006, %v5005
  %v5029 = vpack.c.bf16 %v5008, %v5007
  %v5030 = vpack.c.bf16 %v5010, %v5009
  %v5031 = vpack.c.bf16 %v5012, %v5011
  %v5032 = vpack.c.bf16 %v5014, %v5013
  %v5033 = vpack.c.bf16 %v5016, %v5015
  %v5034 = vpack.c.bf16 %v5018, %v5017
  %v5035 = vld [vmem:[%s55] sm:$0x1]
  %v5037 = vlaneseq
  %v5038 = vshrl.u32 %v5037, 7
  %v5039 = vsub.s32 0, %v5038
  %v5040 = vrot.slane %v5035, %v5039
  %v5050 = vunpack.c.l.b16 %v5019
  %v5051 = vunpack.c.l.b16 %v5020
  %v5052 = vunpack.c.l.b16 %v5021
  %v5053 = vunpack.c.l.b16 %v5022
  %v5054 = vunpack.c.l.b16 %v5023
  %v5055 = vunpack.c.l.b16 %v5024
  %v5056 = vunpack.c.l.b16 %v5025
  %v5057 = vunpack.c.l.b16 %v5026
  %v5058 = vpack.c.b16 %v5051, %v5050
  %v5059 = vpack.c.b16 %v5053, %v5052
  %v5060 = vpack.c.b16 %v5055, %v5054
  %v5061 = vpack.c.b16 %v5057, %v5056
  %v5067 = vsel %vm2703, %v5027, 0
  %v5070 = vsel %vm2703, %v5028, 0
  %v5073 = vsel %vm2703, %v5029, 0
  %v5076 = vsel %vm2703, %v5030, 0
  %v5079 = vsel %vm2703, %v5031, 0
  %v5082 = vsel %vm2703, %v5032, 0
  %v5085 = vsel %vm2703, %v5033, 0
  %v5088 = vsel %vm2703, %v5034, 0
  %5090 = vmatprep.subr.bf16.mxu0 0
  %5091 = vmatpush1.bf16.msra.mxu0 0
  %5092 = vmatprep.subr.bf16.mxu0 0
  %5093 = vmatpush1.bf16.msra.mxu0 0
  %5094 = vmatprep.subr.bf16.mxu0 0
  %5095 = vmatpush1.bf16.msra.mxu0 0
  %5096 = vmatprep.subr.bf16.mxu0 0
  %5097 = vmatpush1.bf16.msra.mxu0 0
  %5098 = vmatprep.subr.bf16.mxu0 0
  %5099 = vmatpush1.bf16.msra.mxu0 %v5061
  %5100 = vmatprep.subr.bf16.mxu0 0
  %5101 = vmatpush1.bf16.msra.mxu0 %v5060
  %5102 = vmatprep.subr.bf16.mxu0 0
  %5103 = vmatpush1.bf16.msra.mxu0 %v5059
  %5104 = vmatprep.subr.bf16.mxu0 0
  %5105 = vmatpush1.bf16.msra.mxu0 %v5058
  %5106 = vmatprep.subr.bf16.mxu0 0
  %5107 = vmatpush2.bf16.msra.mxu0 0
  %5108 = vmatprep.subr.bf16.mxu0 0
  %5109 = vmatpush2.bf16.msra.mxu0 0
  %5110 = vmatprep.subr.bf16.mxu0 0
  %5111 = vmatpush2.bf16.msra.mxu0 0
  %5112 = vmatprep.subr.bf16.mxu0 0
  %5113 = vmatpush2.bf16.msra.mxu0 0
  %5114 = vmatprep.subr.bf16.mxu0 0
  %5115 = vmatpush2.bf16.msra.mxu0 0
  %5116 = vmatprep.subr.bf16.mxu0 0
  %5117 = vmatpush2.bf16.msra.mxu0 0
  %5118 = vmatprep.subr.bf16.mxu0 0
  %5119 = vmatpush2.bf16.msra.mxu0 0
  %5120 = vmatprep.subr.bf16.mxu0 0
  %5121 = vmatpush2.bf16.msra.mxu0 0
  %5122 = vmatprep.mubr.bf16.mxu0 0
  %5123 = vmatmul.mubr.bf16.gmra.mxu0 %v5067
  %v5124 = vpop.f32.mrf.mxu0
  %v5125 = vadd.f32 %v5040, %v5124
  %v5126 = vpop.f32.mrf.mxu0
  %v5127 = vpop.f32.mrf.mxu0
  %v5128 = vadd.f32 %v5040, %v5127
  %v5129 = vpop.f32.mrf.mxu0
  %5130 = vmatprep.mubr.bf16.mxu0 0
  %5131 = vmatmul.mubr.bf16.gmra.mxu0 %v5070
  %v5132 = vpop.f32.mrf.mxu0
  %v5133 = vadd.f32 %v5040, %v5132
  %v5134 = vpop.f32.mrf.mxu0
  %v5135 = vpop.f32.mrf.mxu0
  %v5136 = vadd.f32 %v5040, %v5135
  %v5137 = vpop.f32.mrf.mxu0
  %5138 = vmatprep.mubr.bf16.mxu0 0
  %5139 = vmatmul.mubr.bf16.gmra.mxu0 %v5073
  %v5140 = vpop.f32.mrf.mxu0
  %v5141 = vadd.f32 %v5040, %v5140
  %v5142 = vpop.f32.mrf.mxu0
  %v5143 = vpop.f32.mrf.mxu0
  %v5144 = vadd.f32 %v5040, %v5143
  %v5145 = vpop.f32.mrf.mxu0
  %5146 = vmatprep.mubr.bf16.mxu0 0
  %5147 = vmatmul.mubr.bf16.gmra.mxu0 %v5076
  %v5148 = vpop.f32.mrf.mxu0
  %v5149 = vadd.f32 %v5040, %v5148
  %v5150 = vpop.f32.mrf.mxu0
  %v5151 = vpop.f32.mrf.mxu0
  %v5152 = vadd.f32 %v5040, %v5151
  %v5153 = vpop.f32.mrf.mxu0
  %5154 = vmatprep.mubr.bf16.mxu0 0
  %5155 = vmatmul.mubr.bf16.gmra.mxu0 %v5079
  %v5156 = vpop.f32.mrf.mxu0
  %v5157 = vadd.f32 %v5040, %v5156
  %v5158 = vpop.f32.mrf.mxu0
  %v5159 = vpop.f32.mrf.mxu0
  %v5160 = vadd.f32 %v5040, %v5159
  %v5161 = vpop.f32.mrf.mxu0
  %5162 = vmatprep.mubr.bf16.mxu0 0
  %5163 = vmatmul.mubr.bf16.gmra.mxu0 %v5082
  %v5164 = vpop.f32.mrf.mxu0
  %v5165 = vadd.f32 %v5040, %v5164
  %v5166 = vpop.f32.mrf.mxu0
  %v5167 = vpop.f32.mrf.mxu0
  %v5168 = vadd.f32 %v5040, %v5167
  %v5169 = vpop.f32.mrf.mxu0
  %5170 = vmatprep.mubr.bf16.mxu0 0
  %5171 = vmatmul.mubr.bf16.gmra.mxu0 %v5085
  %v5172 = vpop.f32.mrf.mxu0
  %v5173 = vadd.f32 %v5040, %v5172
  %v5174 = vpop.f32.mrf.mxu0
  %v5175 = vpop.f32.mrf.mxu0
  %v5176 = vadd.f32 %v5040, %v5175
  %v5177 = vpop.f32.mrf.mxu0
  %5178 = vmatprep.mubr.bf16.mxu0 0
  %5179 = vmatmul.mubr.bf16.gmra.mxu0 %v5088
  %v5180 = vpop.f32.mrf.mxu0
  %v5181 = vadd.f32 %v5040, %v5180
  %v5182 = vpop.f32.mrf.mxu0
  %v5183 = vpop.f32.mrf.mxu0
  %v5184 = vadd.f32 %v5040, %v5183
  %v5185 = vpop.f32.mrf.mxu0
  %5186 = vdwg.mxu0
  %v5219 = vunpack.c.l.b16 %v1917
  %v5220 = vunpack.c.h.b16 %v1917
  %v5221 = vunpack.c.l.b16 %v1918
  %v5222 = vunpack.c.h.b16 %v1918
  %v5223 = vunpack.c.l.b16 %v1919
  %v5224 = vunpack.c.h.b16 %v1919
  %v5225 = vunpack.c.l.b16 %v1920
  %v5226 = vunpack.c.h.b16 %v1920
  %v5227 = vunpack.c.l.b16 %v1921
  %v5228 = vunpack.c.h.b16 %v1921
  %v5229 = vunpack.c.l.b16 %v1922
  %v5230 = vunpack.c.h.b16 %v1922
  %v5231 = vunpack.c.l.b16 %v1923
  %v5232 = vunpack.c.h.b16 %v1923
  %v5233 = vunpack.c.l.b16 %v1924
  %v5234 = vunpack.c.h.b16 %v1924
  %v5235 = vunpack.c.l.b16 %v1925
  %v5236 = vunpack.c.h.b16 %v1925
  %v5237 = vunpack.c.l.b16 %v1926
  %v5238 = vunpack.c.h.b16 %v1926
  %v5239 = vunpack.c.l.b16 %v1927
  %v5240 = vunpack.c.h.b16 %v1927
  %v5241 = vunpack.c.l.b16 %v1928
  %v5242 = vunpack.c.h.b16 %v1928
  %v5243 = vunpack.c.l.b16 %v1929
  %v5244 = vunpack.c.h.b16 %v1929
  %v5245 = vunpack.c.l.b16 %v1930
  %v5246 = vunpack.c.h.b16 %v1930
  %v5247 = vunpack.c.l.b16 %v1931
  %v5248 = vunpack.c.h.b16 %v1931
  %v5249 = vunpack.c.l.b16 %v1932
  %v5250 = vunpack.c.h.b16 %v1932
  %v5251 = vunpack.c.l.b16 %v1933
  %v5252 = vunpack.c.h.b16 %v1933
  %v5253 = vunpack.c.l.b16 %v1934
  %v5254 = vunpack.c.h.b16 %v1934
  %v5255 = vunpack.c.l.b16 %v1935
  %v5256 = vunpack.c.h.b16 %v1935
  %v5257 = vunpack.c.l.b16 %v1936
  %v5258 = vunpack.c.h.b16 %v1936
  %v5259 = vunpack.c.l.b16 %v1937
  %v5260 = vunpack.c.h.b16 %v1937
  %v5261 = vunpack.c.l.b16 %v1938
  %v5262 = vunpack.c.h.b16 %v1938
  %v5263 = vunpack.c.l.b16 %v1939
  %v5264 = vunpack.c.h.b16 %v1939
  %v5265 = vunpack.c.l.b16 %v1940
  %v5266 = vunpack.c.h.b16 %v1940
  %v5267 = vunpack.c.l.b16 %v1941
  %v5268 = vunpack.c.h.b16 %v1941
  %v5269 = vunpack.c.l.b16 %v1942
  %v5270 = vunpack.c.h.b16 %v1942
  %v5271 = vunpack.c.l.b16 %v1943
  %v5272 = vunpack.c.h.b16 %v1943
  %v5273 = vunpack.c.l.b16 %v1944
  %v5274 = vunpack.c.h.b16 %v1944
  %v5275 = vunpack.c.l.b16 %v1945
  %v5276 = vunpack.c.h.b16 %v1945
  %v5277 = vunpack.c.l.b16 %v1946
  %v5278 = vunpack.c.h.b16 %v1946
  %v5279 = vunpack.c.l.b16 %v1947
  %v5280 = vunpack.c.h.b16 %v1947
  %v5281 = vunpack.c.l.b16 %v1948
  %v5282 = vunpack.c.h.b16 %v1948
  %v5283 = vpack.c.b16 %v5223, %v5219
  %v5284 = vpack.c.b16 %v5224, %v5220
  %v5285 = vpack.c.b16 %v5225, %v5221
  %v5286 = vpack.c.b16 %v5226, %v5222
  %v5287 = vpack.c.b16 %v5231, %v5227
  %v5288 = vpack.c.b16 %v5232, %v5228
  %v5289 = vpack.c.b16 %v5233, %v5229
  %v5290 = vpack.c.b16 %v5234, %v5230
  %v5291 = vpack.c.b16 %v5239, %v5235
  %v5292 = vpack.c.b16 %v5240, %v5236
  %v5293 = vpack.c.b16 %v5241, %v5237
  %v5294 = vpack.c.b16 %v5242, %v5238
  %v5295 = vpack.c.b16 %v5247, %v5243
  %v5296 = vpack.c.b16 %v5248, %v5244
  %v5297 = vpack.c.b16 %v5249, %v5245
  %v5298 = vpack.c.b16 %v5250, %v5246
  %v5299 = vpack.c.b16 %v5255, %v5251
  %v5300 = vpack.c.b16 %v5256, %v5252
  %v5301 = vpack.c.b16 %v5257, %v5253
  %v5302 = vpack.c.b16 %v5258, %v5254
  %v5303 = vpack.c.b16 %v5263, %v5259
  %v5304 = vpack.c.b16 %v5264, %v5260
  %v5305 = vpack.c.b16 %v5265, %v5261
  %v5306 = vpack.c.b16 %v5266, %v5262
  %v5307 = vpack.c.b16 %v5271, %v5267
  %v5308 = vpack.c.b16 %v5272, %v5268
  %v5309 = vpack.c.b16 %v5273, %v5269
  %v5310 = vpack.c.b16 %v5274, %v5270
  %v5311 = vpack.c.b16 %v5279, %v5275
  %v5312 = vpack.c.b16 %v5280, %v5276
  %v5313 = vpack.c.b16 %v5281, %v5277
  %v5314 = vpack.c.b16 %v5282, %v5278
  %5347 = vmatprep.subr.bf16.mxu0 0
  %5348 = vmatpush1.bf16.msra.mxu0 %v1956
  %5349 = vmatprep.subr.bf16.mxu0 0
  %5350 = vmatpush1.bf16.msra.mxu0 %v1955
  %5351 = vmatprep.subr.bf16.mxu0 0
  %5352 = vmatpush1.bf16.msra.mxu0 %v1954
  %5353 = vmatprep.subr.bf16.mxu0 0
  %5354 = vmatpush1.bf16.msra.mxu0 %v1953
  %5355 = vmatprep.subr.bf16.mxu0 0
  %5356 = vmatpush1.bf16.msra.mxu0 %v1952
  %5357 = vmatprep.subr.bf16.mxu0 0
  %5358 = vmatpush1.bf16.msra.mxu0 %v1951
  %5359 = vmatprep.subr.bf16.mxu0 0
  %5360 = vmatpush1.bf16.msra.mxu0 %v1950
  %5361 = vmatprep.subr.bf16.mxu0 0
  %5362 = vmatpush1.bf16.msra.mxu0 %v1949
  %5363 = vmatprep.subr.bf16.mxu0 0
  %5364 = vmatpush2.bf16.msra.mxu0 %v1964
  %5365 = vmatprep.subr.bf16.mxu0 0
  %5366 = vmatpush2.bf16.msra.mxu0 %v1963
  %5367 = vmatprep.subr.bf16.mxu0 0
  %5368 = vmatpush2.bf16.msra.mxu0 %v1962
  %5369 = vmatprep.subr.bf16.mxu0 0
  %5370 = vmatpush2.bf16.msra.mxu0 %v1961
  %5371 = vmatprep.subr.bf16.mxu0 0
  %5372 = vmatpush2.bf16.msra.mxu0 %v1960
  %5373 = vmatprep.subr.bf16.mxu0 0
  %5374 = vmatpush2.bf16.msra.mxu0 %v1959
  %5375 = vmatprep.subr.bf16.mxu0 0
  %5376 = vmatpush2.bf16.msra.mxu0 %v1958
  %5377 = vmatprep.subr.bf16.mxu0 0
  %5378 = vmatpush2.bf16.msra.mxu0 %v1957
  %5379 = vmatprep.mubr.bf16.mxu0 %v5284
  %5380 = vmatmul.mubr.bf16.gmra.mxu0 %v5283
  %v5381 = vpop.f32.mrf.mxu0
  %v5382 = vadd.f32 %v5125, %v5381
  %v5383 = vpop.f32.mrf.mxu0
  %v5384 = vpop.f32.mrf.mxu0
  %v5385 = vadd.f32 %v5128, %v5384
  %v5386 = vpop.f32.mrf.mxu0
  %5387 = vmatprep.mubr.bf16.mxu0 %v5288
  %5388 = vmatmul.mubr.bf16.gmra.mxu0 %v5287
  %v5389 = vpop.f32.mrf.mxu0
  %v5390 = vadd.f32 %v5133, %v5389
  %v5391 = vpop.f32.mrf.mxu0
  %v5392 = vpop.f32.mrf.mxu0
  %v5393 = vadd.f32 %v5136, %v5392
  %v5394 = vpop.f32.mrf.mxu0
  %5395 = vmatprep.mubr.bf16.mxu0 %v5292
  %5396 = vmatmul.mubr.bf16.gmra.mxu0 %v5291
  %v5397 = vpop.f32.mrf.mxu0
  %v5398 = vadd.f32 %v5141, %v5397
  %v5399 = vpop.f32.mrf.mxu0
  %v5400 = vpop.f32.mrf.mxu0
  %v5401 = vadd.f32 %v5144, %v5400
  %v5402 = vpop.f32.mrf.mxu0
  %5403 = vmatprep.mubr.bf16.mxu0 %v5296
  %5404 = vmatmul.mubr.bf16.gmra.mxu0 %v5295
  %v5405 = vpop.f32.mrf.mxu0
  %v5406 = vadd.f32 %v5149, %v5405
  %v5407 = vpop.f32.mrf.mxu0
  %v5408 = vpop.f32.mrf.mxu0
  %v5409 = vadd.f32 %v5152, %v5408
  %v5410 = vpop.f32.mrf.mxu0
  %5411 = vmatprep.mubr.bf16.mxu0 %v5300
  %5412 = vmatmul.mubr.bf16.gmra.mxu0 %v5299
  %v5413 = vpop.f32.mrf.mxu0
  %v5414 = vadd.f32 %v5157, %v5413
  %v5415 = vpop.f32.mrf.mxu0
  %v5416 = vpop.f32.mrf.mxu0
  %v5417 = vadd.f32 %v5160, %v5416
  %v5418 = vpop.f32.mrf.mxu0
  %5419 = vmatprep.mubr.bf16.mxu0 %v5304
  %5420 = vmatmul.mubr.bf16.gmra.mxu0 %v5303
  %v5421 = vpop.f32.mrf.mxu0
  %v5422 = vadd.f32 %v5165, %v5421
  %v5423 = vpop.f32.mrf.mxu0
  %v5424 = vpop.f32.mrf.mxu0
  %v5425 = vadd.f32 %v5168, %v5424
  %v5426 = vpop.f32.mrf.mxu0
  %5427 = vmatprep.mubr.bf16.mxu0 %v5308
  %5428 = vmatmul.mubr.bf16.gmra.mxu0 %v5307
  %v5429 = vpop.f32.mrf.mxu0
  %v5430 = vadd.f32 %v5173, %v5429
  %v5431 = vpop.f32.mrf.mxu0
  %v5432 = vpop.f32.mrf.mxu0
  %v5433 = vadd.f32 %v5176, %v5432
  %v5434 = vpop.f32.mrf.mxu0
  %5435 = vmatprep.mubr.bf16.mxu0 %v5312
  %5436 = vmatmul.mubr.bf16.gmra.mxu0 %v5311
  %v5437 = vpop.f32.mrf.mxu0
  %v5438 = vadd.f32 %v5181, %v5437
  %v5439 = vpop.f32.mrf.mxu0
  %v5440 = vpop.f32.mrf.mxu0
  %v5441 = vadd.f32 %v5184, %v5440
  %v5442 = vpop.f32.mrf.mxu0
  %5443 = vdwg.mxu0
  %5444 = vmatprep.subr.bf16.mxu0 0
  %5445 = vmatpush1.bf16.msra.mxu0 %v1972
  %5446 = vmatprep.subr.bf16.mxu0 0
  %5447 = vmatpush1.bf16.msra.mxu0 %v1971
  %5448 = vmatprep.subr.bf16.mxu0 0
  %5449 = vmatpush1.bf16.msra.mxu0 %v1970
  %5450 = vmatprep.subr.bf16.mxu0 0
  %5451 = vmatpush1.bf16.msra.mxu0 %v1969
  %5452 = vmatprep.subr.bf16.mxu0 0
  %5453 = vmatpush1.bf16.msra.mxu0 %v1968
  %5454 = vmatprep.subr.bf16.mxu0 0
  %5455 = vmatpush1.bf16.msra.mxu0 %v1967
  %5456 = vmatprep.subr.bf16.mxu0 0
  %5457 = vmatpush1.bf16.msra.mxu0 %v1966
  %5458 = vmatprep.subr.bf16.mxu0 0
  %5459 = vmatpush1.bf16.msra.mxu0 %v1965
  %5460 = vmatprep.subr.bf16.mxu0 0
  %5461 = vmatpush2.bf16.msra.mxu0 %v1980
  %5462 = vmatprep.subr.bf16.mxu0 0
  %5463 = vmatpush2.bf16.msra.mxu0 %v1979
  %5464 = vmatprep.subr.bf16.mxu0 0
  %5465 = vmatpush2.bf16.msra.mxu0 %v1978
  %5466 = vmatprep.subr.bf16.mxu0 0
  %5467 = vmatpush2.bf16.msra.mxu0 %v1977
  %5468 = vmatprep.subr.bf16.mxu0 0
  %5469 = vmatpush2.bf16.msra.mxu0 %v1976
  %5470 = vmatprep.subr.bf16.mxu0 0
  %5471 = vmatpush2.bf16.msra.mxu0 %v1975
  %5472 = vmatprep.subr.bf16.mxu0 0
  %5473 = vmatpush2.bf16.msra.mxu0 %v1974
  %5474 = vmatprep.subr.bf16.mxu0 0
  %5475 = vmatpush2.bf16.msra.mxu0 %v1973
  %5476 = vmatprep.mubr.bf16.mxu0 %v5286
  %5477 = vmatmul.mubr.bf16.gmra.mxu0 %v5285
  %v5478 = vpop.f32.mrf.mxu0
  %v5479 = vadd.f32 %v5382, %v5478
  %v5480 = vpop.f32.mrf.mxu0
  %v5481 = vpop.f32.mrf.mxu0
  %v5482 = vadd.f32 %v5385, %v5481
  %v5483 = vpop.f32.mrf.mxu0
  %5484 = vmatprep.mubr.bf16.mxu0 %v5290
  %5485 = vmatmul.mubr.bf16.gmra.mxu0 %v5289
  %v5486 = vpop.f32.mrf.mxu0
  %v5487 = vadd.f32 %v5390, %v5486
  %v5488 = vpop.f32.mrf.mxu0
  %v5489 = vpop.f32.mrf.mxu0
  %v5490 = vadd.f32 %v5393, %v5489
  %v5491 = vpop.f32.mrf.mxu0
  %5492 = vmatprep.mubr.bf16.mxu0 %v5294
  %5493 = vmatmul.mubr.bf16.gmra.mxu0 %v5293
  %v5494 = vpop.f32.mrf.mxu0
  %v5495 = vadd.f32 %v5398, %v5494
  %v5496 = vpop.f32.mrf.mxu0
  %v5497 = vpop.f32.mrf.mxu0
  %v5498 = vadd.f32 %v5401, %v5497
  %v5499 = vpop.f32.mrf.mxu0
  %5500 = vmatprep.mubr.bf16.mxu0 %v5298
  %5501 = vmatmul.mubr.bf16.gmra.mxu0 %v5297
  %v5502 = vpop.f32.mrf.mxu0
  %v5503 = vadd.f32 %v5406, %v5502
  %v5504 = vpop.f32.mrf.mxu0
  %v5505 = vpop.f32.mrf.mxu0
  %v5506 = vadd.f32 %v5409, %v5505
  %v5507 = vpop.f32.mrf.mxu0
  %5508 = vmatprep.mubr.bf16.mxu0 %v5302
  %5509 = vmatmul.mubr.bf16.gmra.mxu0 %v5301
  %v5510 = vpop.f32.mrf.mxu0
  %v5511 = vadd.f32 %v5414, %v5510
  %v5512 = vpop.f32.mrf.mxu0
  %v5513 = vpop.f32.mrf.mxu0
  %v5514 = vadd.f32 %v5417, %v5513
  %v5515 = vpop.f32.mrf.mxu0
  %5516 = vmatprep.mubr.bf16.mxu0 %v5306
  %5517 = vmatmul.mubr.bf16.gmra.mxu0 %v5305
  %v5518 = vpop.f32.mrf.mxu0
  %v5519 = vadd.f32 %v5422, %v5518
  %v5520 = vpop.f32.mrf.mxu0
  %v5521 = vpop.f32.mrf.mxu0
  %v5522 = vadd.f32 %v5425, %v5521
  %v5523 = vpop.f32.mrf.mxu0
  %5524 = vmatprep.mubr.bf16.mxu0 %v5310
  %5525 = vmatmul.mubr.bf16.gmra.mxu0 %v5309
  %v5526 = vpop.f32.mrf.mxu0
  %v5527 = vadd.f32 %v5430, %v5526
  %v5528 = vpop.f32.mrf.mxu0
  %v5529 = vpop.f32.mrf.mxu0
  %v5530 = vadd.f32 %v5433, %v5529
  %v5531 = vpop.f32.mrf.mxu0
  %5532 = vmatprep.mubr.bf16.mxu0 %v5314
  %5533 = vmatmul.mubr.bf16.gmra.mxu0 %v5313
  %v5534 = vpop.f32.mrf.mxu0
  %v5535 = vadd.f32 %v5438, %v5534
  %v5536 = vpop.f32.mrf.mxu0
  %v5537 = vpop.f32.mrf.mxu0
  %v5538 = vadd.f32 %v5441, %v5537
  %v5539 = vpop.f32.mrf.mxu0
  %5540 = vdwg.mxu0
  %v5541 = vld [vmem:[%s57] sm:$0x1]
  %v5542 = vld [vmem:[%s59] sm:$0x1]
  %v5543 = vsel %vm623, %v5479, 0.0
  %5544 = vadd.xlane.f32.xlu0 %v5543
  %v5545 = vpop.xlane.xlu0 %5544
  %v5546 = vsel %vm623, %v5482, 0.0
  %5547 = vadd.xlane.f32.xlu0 %v5546
  %v5548 = vpop.xlane.xlu0 %5547
  %v5549 = vsel %vm623, %v5487, 0.0
  %5550 = vadd.xlane.f32.xlu0 %v5549
  %v5551 = vpop.xlane.xlu0 %5550
  %v5552 = vsel %vm623, %v5490, 0.0
  %5553 = vadd.xlane.f32.xlu0 %v5552
  %v5554 = vpop.xlane.xlu0 %5553
  %v5555 = vsel %vm623, %v5495, 0.0
  %5556 = vadd.xlane.f32.xlu0 %v5555
  %v5557 = vpop.xlane.xlu0 %5556
  %v5558 = vsel %vm623, %v5498, 0.0
  %5559 = vadd.xlane.f32.xlu0 %v5558
  %v5560 = vpop.xlane.xlu0 %5559
  %v5561 = vsel %vm623, %v5503, 0.0
  %5562 = vadd.xlane.f32.xlu0 %v5561
  %v5563 = vpop.xlane.xlu0 %5562
  %v5564 = vsel %vm623, %v5506, 0.0
  %5565 = vadd.xlane.f32.xlu0 %v5564
  %v5566 = vpop.xlane.xlu0 %5565
  %v5567 = vsel %vm623, %v5511, 0.0
  %5568 = vadd.xlane.f32.xlu0 %v5567
  %v5569 = vpop.xlane.xlu0 %5568
  %v5570 = vsel %vm623, %v5514, 0.0
  %5571 = vadd.xlane.f32.xlu0 %v5570
  %v5572 = vpop.xlane.xlu0 %5571
  %v5573 = vsel %vm623, %v5519, 0.0
  %5574 = vadd.xlane.f32.xlu0 %v5573
  %v5575 = vpop.xlane.xlu0 %5574
  %v5576 = vsel %vm623, %v5522, 0.0
  %5577 = vadd.xlane.f32.xlu0 %v5576
  %v5578 = vpop.xlane.xlu0 %5577
  %v5579 = vsel %vm623, %v5527, 0.0
  %5580 = vadd.xlane.f32.xlu0 %v5579
  %v5581 = vpop.xlane.xlu0 %5580
  %v5582 = vsel %vm623, %v5530, 0.0
  %5583 = vadd.xlane.f32.xlu0 %v5582
  %v5584 = vpop.xlane.xlu0 %5583
  %v5585 = vsel %vm623, %v5535, 0.0
  %5586 = vadd.xlane.f32.xlu0 %v5585
  %v5587 = vpop.xlane.xlu0 %5586
  %v5588 = vsel %vm623, %v5538, 0.0
  %5589 = vadd.xlane.f32.xlu0 %v5588
  %v5590 = vpop.xlane.xlu0 %5589
  %v5591 = vmul.f32 %v5545, %v816
  %v5592 = vmul.f32 %v5548, %v816
  %v5593 = vmul.f32 %v5551, %v816
  %v5594 = vmul.f32 %v5554, %v816
  %v5595 = vmul.f32 %v5557, %v816
  %v5596 = vmul.f32 %v5560, %v816
  %v5597 = vmul.f32 %v5563, %v816
  %v5598 = vmul.f32 %v5566, %v816
  %v5599 = vmul.f32 %v5569, %v816
  %v5600 = vmul.f32 %v5572, %v816
  %v5601 = vmul.f32 %v5575, %v816
  %v5602 = vmul.f32 %v5578, %v816
  %v5603 = vmul.f32 %v5581, %v816
  %v5604 = vmul.f32 %v5584, %v816
  %v5605 = vmul.f32 %v5587, %v816
  %v5606 = vmul.f32 %v5590, %v816
  %v5607 = vsub.f32 %v5479, %v5591
  %v5608 = vsub.f32 %v5482, %v5592
  %v5609 = vsub.f32 %v5487, %v5593
  %v5610 = vsub.f32 %v5490, %v5594
  %v5611 = vsub.f32 %v5495, %v5595
  %v5612 = vsub.f32 %v5498, %v5596
  %v5613 = vsub.f32 %v5503, %v5597
  %v5614 = vsub.f32 %v5506, %v5598
  %v5615 = vsub.f32 %v5511, %v5599
  %v5616 = vsub.f32 %v5514, %v5600
  %v5617 = vsub.f32 %v5519, %v5601
  %v5618 = vsub.f32 %v5522, %v5602
  %v5619 = vsub.f32 %v5527, %v5603
  %v5620 = vsub.f32 %v5530, %v5604
  %v5621 = vsub.f32 %v5535, %v5605
  %v5622 = vsub.f32 %v5538, %v5606
  %v5623 = vmul.f32 %v5607, %v5607
  %v5624 = vmul.f32 %v5608, %v5608
  %v5625 = vmul.f32 %v5609, %v5609
  %v5626 = vmul.f32 %v5610, %v5610
  %v5627 = vmul.f32 %v5611, %v5611
  %v5628 = vmul.f32 %v5612, %v5612
  %v5629 = vmul.f32 %v5613, %v5613
  %v5630 = vmul.f32 %v5614, %v5614
  %v5631 = vmul.f32 %v5615, %v5615
  %v5632 = vmul.f32 %v5616, %v5616
  %v5633 = vmul.f32 %v5617, %v5617
  %v5634 = vmul.f32 %v5618, %v5618
  %v5635 = vmul.f32 %v5619, %v5619
  %v5636 = vmul.f32 %v5620, %v5620
  %v5637 = vmul.f32 %v5621, %v5621
  %v5638 = vmul.f32 %v5622, %v5622
  %v5639 = vsel %vm623, %v5623, 0.0
  %5640 = vadd.xlane.f32.xlu0 %v5639
  %v5641 = vpop.xlane.xlu0 %5640
  %v5642 = vsel %vm623, %v5624, 0.0
  %5643 = vadd.xlane.f32.xlu0 %v5642
  %v5644 = vpop.xlane.xlu0 %5643
  %v5645 = vsel %vm623, %v5625, 0.0
  %5646 = vadd.xlane.f32.xlu0 %v5645
  %v5647 = vpop.xlane.xlu0 %5646
  %v5648 = vsel %vm623, %v5626, 0.0
  %5649 = vadd.xlane.f32.xlu0 %v5648
  %v5650 = vpop.xlane.xlu0 %5649
  %v5651 = vsel %vm623, %v5627, 0.0
  %5652 = vadd.xlane.f32.xlu0 %v5651
  %v5653 = vpop.xlane.xlu0 %5652
  %v5654 = vsel %vm623, %v5628, 0.0
  %5655 = vadd.xlane.f32.xlu0 %v5654
  %v5656 = vpop.xlane.xlu0 %5655
  %v5657 = vsel %vm623, %v5629, 0.0
  %5658 = vadd.xlane.f32.xlu0 %v5657
  %v5659 = vpop.xlane.xlu0 %5658
  %v5660 = vsel %vm623, %v5630, 0.0
  %5661 = vadd.xlane.f32.xlu0 %v5660
  %v5662 = vpop.xlane.xlu0 %5661
  %v5663 = vsel %vm623, %v5631, 0.0
  %5664 = vadd.xlane.f32.xlu0 %v5663
  %v5665 = vpop.xlane.xlu0 %5664
  %v5666 = vsel %vm623, %v5632, 0.0
  %5667 = vadd.xlane.f32.xlu0 %v5666
  %v5668 = vpop.xlane.xlu0 %5667
  %v5669 = vsel %vm623, %v5633, 0.0
  %5670 = vadd.xlane.f32.xlu0 %v5669
  %v5671 = vpop.xlane.xlu0 %5670
  %v5672 = vsel %vm623, %v5634, 0.0
  %5673 = vadd.xlane.f32.xlu0 %v5672
  %v5674 = vpop.xlane.xlu0 %5673
  %v5675 = vsel %vm623, %v5635, 0.0
  %5676 = vadd.xlane.f32.xlu0 %v5675
  %v5677 = vpop.xlane.xlu0 %5676
  %v5678 = vsel %vm623, %v5636, 0.0
  %5679 = vadd.xlane.f32.xlu0 %v5678
  %v5680 = vpop.xlane.xlu0 %5679
  %v5681 = vsel %vm623, %v5637, 0.0
  %5682 = vadd.xlane.f32.xlu0 %v5681
  %v5683 = vpop.xlane.xlu0 %5682
  %v5684 = vsel %vm623, %v5638, 0.0
  %5685 = vadd.xlane.f32.xlu0 %v5684
  %v5686 = vpop.xlane.xlu0 %5685
  %v5687 = vmul.f32 %v5641, %v816
  %v5688 = vmul.f32 %v5644, %v816
  %v5689 = vmul.f32 %v5647, %v816
  %v5690 = vmul.f32 %v5650, %v816
  %v5691 = vmul.f32 %v5653, %v816
  %v5692 = vmul.f32 %v5656, %v816
  %v5693 = vmul.f32 %v5659, %v816
  %v5694 = vmul.f32 %v5662, %v816
  %v5695 = vmul.f32 %v5665, %v816
  %v5696 = vmul.f32 %v5668, %v816
  %v5697 = vmul.f32 %v5671, %v816
  %v5698 = vmul.f32 %v5674, %v816
  %v5699 = vmul.f32 %v5677, %v816
  %v5700 = vmul.f32 %v5680, %v816
  %v5701 = vmul.f32 %v5683, %v816
  %v5702 = vmul.f32 %v5686, %v816
  %v5703 = vadd.f32 %v5687, 1e-05
  %v5704 = vadd.f32 %v5688, 1e-05
  %v5705 = vadd.f32 %v5689, 1e-05
  %v5706 = vadd.f32 %v5690, 1e-05
  %v5707 = vadd.f32 %v5691, 1e-05
  %v5708 = vadd.f32 %v5692, 1e-05
  %v5709 = vadd.f32 %v5693, 1e-05
  %v5710 = vadd.f32 %v5694, 1e-05
  %v5711 = vadd.f32 %v5695, 1e-05
  %v5712 = vadd.f32 %v5696, 1e-05
  %v5713 = vadd.f32 %v5697, 1e-05
  %v5714 = vadd.f32 %v5698, 1e-05
  %v5715 = vadd.f32 %v5699, 1e-05
  %v5716 = vadd.f32 %v5700, 1e-05
  %v5717 = vadd.f32 %v5701, 1e-05
  %v5718 = vadd.f32 %v5702, 1e-05
  %v5719 = vrsqrt.pop %v5703
  %v5720 = vrsqrt.pop %v5704
  %v5721 = vrsqrt.pop %v5705
  %v5722 = vrsqrt.pop %v5706
  %v5723 = vrsqrt.pop %v5707
  %v5724 = vrsqrt.pop %v5708
  %v5725 = vrsqrt.pop %v5709
  %v5726 = vrsqrt.pop %v5710
  %v5727 = vrsqrt.pop %v5711
  %v5728 = vrsqrt.pop %v5712
  %v5729 = vrsqrt.pop %v5713
  %v5730 = vrsqrt.pop %v5714
  %v5731 = vrsqrt.pop %v5715
  %v5732 = vrsqrt.pop %v5716
  %v5733 = vrsqrt.pop %v5717
  %v5734 = vrsqrt.pop %v5718
  %v5735 = vmul.f32 %v5607, %v5719
  %v5736 = vmul.f32 %v5608, %v5720
  %v5737 = vmul.f32 %v5609, %v5721
  %v5738 = vmul.f32 %v5610, %v5722
  %v5739 = vmul.f32 %v5611, %v5723
  %v5740 = vmul.f32 %v5612, %v5724
  %v5741 = vmul.f32 %v5613, %v5725
  %v5742 = vmul.f32 %v5614, %v5726
  %v5743 = vmul.f32 %v5615, %v5727
  %v5744 = vmul.f32 %v5616, %v5728
  %v5745 = vmul.f32 %v5617, %v5729
  %v5746 = vmul.f32 %v5618, %v5730
  %v5747 = vmul.f32 %v5619, %v5731
  %v5748 = vmul.f32 %v5620, %v5732
  %v5749 = vmul.f32 %v5621, %v5733
  %v5750 = vmul.f32 %v5622, %v5734
  %v5752 = vlaneseq
  %v5753 = vshrl.u32 %v5752, 7
  %v5754 = vsub.s32 0, %v5753
  %v5755 = vrot.slane %v5541, %v5754
  %v5757 = vmul.f32 %v5735, %v5755
  %v5758 = vmul.f32 %v5736, %v5755
  %v5759 = vmul.f32 %v5737, %v5755
  %v5760 = vmul.f32 %v5738, %v5755
  %v5761 = vmul.f32 %v5739, %v5755
  %v5762 = vmul.f32 %v5740, %v5755
  %v5763 = vmul.f32 %v5741, %v5755
  %v5764 = vmul.f32 %v5742, %v5755
  %v5765 = vmul.f32 %v5743, %v5755
  %v5766 = vmul.f32 %v5744, %v5755
  %v5767 = vmul.f32 %v5745, %v5755
  %v5768 = vmul.f32 %v5746, %v5755
  %v5769 = vmul.f32 %v5747, %v5755
  %v5770 = vmul.f32 %v5748, %v5755
  %v5771 = vmul.f32 %v5749, %v5755
  %v5772 = vmul.f32 %v5750, %v5755
  %v5774 = vlaneseq
  %v5775 = vshrl.u32 %v5774, 7
  %v5776 = vsub.s32 0, %v5775
  %v5777 = vrot.slane %v5542, %v5776
  %v5779 = vadd.f32 %v5757, %v5777
  %v5780 = vadd.f32 %v5758, %v5777
  %v5781 = vadd.f32 %v5759, %v5777
  %v5782 = vadd.f32 %v5760, %v5777
  %v5783 = vadd.f32 %v5761, %v5777
  %v5784 = vadd.f32 %v5762, %v5777
  %v5785 = vadd.f32 %v5763, %v5777
  %v5786 = vadd.f32 %v5764, %v5777
  %v5787 = vadd.f32 %v5765, %v5777
  %v5788 = vadd.f32 %v5766, %v5777
  %v5789 = vadd.f32 %v5767, %v5777
  %v5790 = vadd.f32 %v5768, %v5777
  %v5791 = vadd.f32 %v5769, %v5777
  %v5792 = vadd.f32 %v5770, %v5777
  %v5793 = vadd.f32 %v5771, %v5777
  %v5794 = vadd.f32 %v5772, %v5777
  %5795 = vst.msk [vmem:[%s61] sm:$0xff] %vm623, %v5779
  %5796 = vst.msk [vmem:[%s61 + $0x8] sm:$0xff] %vm623, %v5780
  %5797 = vst.msk [vmem:[%s61 + $0x10] sm:$0xff] %vm623, %v5781
  %5798 = vst.msk [vmem:[%s61 + $0x18] sm:$0xff] %vm623, %v5782
  %5799 = vst.msk [vmem:[%s61 + $0x20] sm:$0xff] %vm623, %v5783
  %5800 = vst.msk [vmem:[%s61 + $0x28] sm:$0xff] %vm623, %v5784
  %5801 = vst.msk [vmem:[%s61 + $0x30] sm:$0xff] %vm623, %v5785
  %5802 = vst.msk [vmem:[%s61 + $0x38] sm:$0xff] %vm623, %v5786
  %5803 = vst.msk [vmem:[%s61 + $0x40] sm:$0xff] %vm623, %v5787
  %5804 = vst.msk [vmem:[%s61 + $0x48] sm:$0xff] %vm623, %v5788
  %5805 = vst.msk [vmem:[%s61 + $0x50] sm:$0xff] %vm623, %v5789
  %5806 = vst.msk [vmem:[%s61 + $0x58] sm:$0xff] %vm623, %v5790
  %5807 = vst.msk [vmem:[%s61 + $0x60] sm:$0xff] %vm623, %v5791
  %5808 = vst.msk [vmem:[%s61 + $0x68] sm:$0xff] %vm623, %v5792
  %5809 = vst.msk [vmem:[%s61 + $0x70] sm:$0xff] %vm623, %v5793
  %5810 = vst.msk [vmem:[%s61 + $0x78] sm:$0xff] %vm623, %v5794
  // Predicated region
  $region122: #{transfusion_forward.1} parent=0 // pred_check
    _
  $region123: #{transfusion_forward.1} parent=0 // pred_check_branch
    %5812 = sbr.rel (0) target = $region125
  $region124: #{transfusion_forward.1} parent=0 // pred_region
    _
  $region125: #{transfusion_forward.1} parent=0 // pred_fallthru
    _
  // Predicated region
  $region126: #{transfusion_forward.1} parent=0 // pred_check
    _
  $region127: #{transfusion_forward.1} parent=0 // pred_check_branch
    %5814 = sbr.rel (0) target = $region129
  $region128: #{transfusion_forward.1} parent=0 // pred_region
    _
  $region129: #{transfusion_forward.1} parent=0 // pred_fallthru
    _

</llo_original>
